<compile_context>
chip_gen: v7x
topology: tpu7x:2x2x1
jax: 0.10.0
libtpu: 0.0.40
codegen_flags: <defaults>
</compile_context>

<pallas_src>
import functools

import numpy as np
import jax
import jax.numpy as jnp
from jax.experimental import pallas as pl
from jax.experimental.pallas import tpu as pltpu

_INV_SQRT2 = 0.7071067811865476  # 1/sqrt(2)
# Abramowitz-Stegun 7.1.26 erf coefficients (|err| <= 1.5e-7 for x >= 0).
_ERF_P = 0.3275911
_ERF_A1 = 0.254829592
_ERF_A2 = -0.284496736
_ERF_A3 = 1.421413741
_ERF_A4 = -1.453152027
_ERF_A5 = 1.061405429


def _gelu_exact_ref(x):
    # nn.GELU() default: 0.5 * x * (1 + erf(x / sqrt(2)))
    return 0.5 * x * (1.0 + jax.lax.erf(x * _INV_SQRT2))


def _gelu_eup(x):
    """GELU with erf via A&S 7.1.26: exp goes to the EUP slot, short Horner on VALU."""
    z = x * _INV_SQRT2
    a = jnp.abs(z)
    t = 1.0 / (1.0 + _ERF_P * a)                 # rcp (EUP) + Newton refinement
    poly = ((((_ERF_A5 * t + _ERF_A4) * t + _ERF_A3) * t + _ERF_A2) * t + _ERF_A1) * t
    erf_a = 1.0 - poly * jnp.exp(-(a * a))       # exp -> EUP (own VLIW slot)
    erf = jnp.where(z < 0.0, -erf_a, erf_a)
    return 0.5 * x * (1.0 + erf)


def _fused_dilated_block_kernel(x_ref, w_ref, b_ref, m_ref, o_ref, *,
                                rates, H, W, K, C, NB, mask_row):
    """One grid step = NB batch elements; the whole dilated stack runs in-kernel.

    x_ref: (1, C*NB, H*W)   rows ordered (channel-major, batch-in-block minor)
    w_ref: (C*NB, L*K*K*C)  column (l*K*K+ky*K+kx)*C + d holds, for row co*NB+j,
                            the weight W_l[co, (co+d) % C, ky, kx]
    b_ref: (C*NB, L)        column l holds bias_l[co] for row co*NB+j
    m_ref: (n_masks, H*W)   precomputed zero-padding border masks per tap offset
    o_ref: (1, C*NB, H*W)
    """
    HW = H * W
    NC = C * NB
    KK = K * K
    cur = x_ref[0]                               # (NC, HW) f32, vreg/VMEM resident

    for l, r in enumerate(rates):
        acc = jnp.zeros((NC, HW), dtype=jnp.float32)
        for ky in range(K):
            for kx in range(K):
                dy = (ky - 1) * r                # K == 3, padding == rate
                dx = (kx - 1) * r
                off = dy * W + dx
                if off == 0:
                    shifted = cur
                else:
                    # shifted[row, p] = cur[row, p + off] via a lane rotate (XLU);
                    # border-wraparound lanes are zeroed by the host-built mask,
                    # reproducing zero padding (and keeping batches independent).
                    rolled = pltpu.roll(cur, shift=(-off) % HW, axis=1)
                    mrow = mask_row[(dy, dx)]
                    shifted = rolled * m_ref[mrow:mrow + 1, :]
                # Channel mix on the batch-packed tile: for shift d, output row
                # co*NB+j needs input row ((co+d) % C)*NB + j, i.e. a sublane
                # rotate by d*NB (XLU), scaled by a precomputed per-row column.
                base = (l * KK + ky * K + kx) * C
                for d in range(C):
                    if d == 0:
                        src = shifted
                    else:
                        src = pltpu.roll(shifted, shift=(-d * NB) % NC, axis=0)
                    acc = acc + w_ref[:, base + d:base + d + 1] * src
        cur = _gelu_eup(acc + b_ref[:, l:l + 1])
    o_ref[0] = cur.astype(o_ref.dtype)


def dilated_block_forward(x_nchw, rates, weights, biases):
    """Forward pass of DilatedBlock. Input/output are NCHW (PyTorch convention)."""
    N, C, H, W = x_nchw.shape
    L = len(rates)
    K = weights[0].shape[-1]
    # padding == dilation is size-preserving only for 3x3 kernels (the config
    # used by the dilated_resnet benchmark).
    # TODO(synk): general odd kernel_size would need per-layer output resizing.
    assert K == 3, "fused kernel supports kernel_size=3 (size-preserving padding)"
    assert all(w.shape == (C, C, K, K) for w in weights)
    HW = H * W
    KK = K * K

    # Pack NB batch elements per grid step so the 8 f32 sublanes are full.
    NB = max(1, 8 // C)
    G = (N + NB - 1) // NB
    NC = C * NB

    x = x_nchw.astype(jnp.float32)
    if G * NB != N:
        x = jnp.pad(x, ((0, G * NB - N), (0, 0), (0, 0), (0, 0)))
    # (G*NB, C, H, W) -> (G, C*NB, HW), rows ordered channel-major / batch-minor.
    x_packed = x.reshape(G, NB, C, HW).transpose(0, 2, 1, 3).reshape(G, NC, HW)

    # Weight columns for the sublane-roll channel mix, packed lane-dense:
    # w_cols[co*NB+j, (l*KK + ky*K + kx)*C + d] = W_l[co, (co+d) % C, ky, kx].
    w_taps = jnp.stack([jnp.transpose(w.astype(jnp.float32), (2, 3, 0, 1))
                        for w in weights])                       # (L, K, K, O, I)
    w_taps = w_taps.reshape(L * KK, C, C)                        # [tap, co, ci]
    ci_of = (jnp.arange(C)[:, None] + jnp.arange(C)[None, :]) % C  # [co, d] -> ci
    w_cols = jnp.take_along_axis(
        w_taps, jnp.broadcast_to(ci_of[None], (L * KK, C, C)), axis=2)  # [t, co, d]
    w_cols = jnp.repeat(w_cols, NB, axis=1)                      # (L*KK, NC, C)
    w_cols = jnp.transpose(w_cols, (1, 0, 2)).reshape(NC, L * KK * C)

    # Biases as per-row columns: b_cols[co*NB+j, l] = bias_l[co].
    b_cols = jnp.repeat(jnp.stack(biases).astype(jnp.float32).T, NB, axis=0)  # (NC, L)

    # Precomputed zero-padding border masks for every unique (dy, dx) tap offset.
    offsets = []
    for r in rates:
        for ky in range(K):
            for kx in range(K):
                o = ((ky - 1) * r, (kx - 1) * r)
                if o != (0, 0) and o not in offsets:
                    offsets.append(o)
    mask_row = {o: i for i, o in enumerate(offsets)}
    ys, xs = np.divmod(np.arange(HW), W)
    masks = np.stack([((xs + dx >= 0) & (xs + dx < W) &
                       (ys + dy >= 0) & (ys + dy < H)).astype(np.float32)
                      for dy, dx in offsets])                    # (n_masks, HW)
    masks = jnp.asarray(masks)
    n_masks = int(masks.shape[0])

    kernel = functools.partial(
        _fused_dilated_block_kernel, rates=tuple(rates), H=H, W=W, K=K, C=C,
        NB=NB, mask_row=mask_row)

    out = pl.pallas_call(
        kernel,
        out_shape=jax.ShapeDtypeStruct((G, NC, HW), jnp.float32),
        grid_spec=pltpu.PrefetchScalarGridSpec(
            num_scalar_prefetch=0,
            grid=(G,),
            in_specs=[
                pl.BlockSpec((1, NC, HW), lambda g: (g, 0, 0)),
                pl.BlockSpec((NC, L * KK * C), lambda g: (0, 0)),
                pl.BlockSpec((NC, L), lambda g: (0, 0)),
                pl.BlockSpec((n_masks, HW), lambda g: (0, 0)),
            ],
            out_specs=pl.BlockSpec((1, NC, HW), lambda g: (g, 0, 0)),
        ),
        compiler_params=pltpu.CompilerParams(
            # Tiny grid (G=1 for N=2): keep codegen simple; cross-core sharding
            # only pays off at much larger N / H*W.  Footprint << VMEM on all gens.
            dimension_semantics=("arbitrary",),
        ),
    )(x_packed, w_cols, b_cols, masks)

    out = out.reshape(G, C, NB, HW).transpose(0, 2, 1, 3).reshape(G * NB, C, H, W)
    return out[:N]


def make_dilated_block_params(key, in_channels, out_channels, kernel_size,
                              num_levels):
    """Deterministic synthetic params; PyTorch conv weight layout (O, I, K, K)."""
    rates = [2 ** i for i in range(num_levels)]
    rates = rates + rates[:-1][::-1]
    weights, biases = [], []
    for i, _ in enumerate(rates):
        kw, kb = jax.random.split(jax.random.fold_in(key, i))
        fan_in = in_channels * kernel_size * kernel_size
        bound = 1.0 / float(np.sqrt(fan_in))
        w = jax.random.uniform(kw,
                               (out_channels, in_channels, kernel_size,
                                kernel_size),
                               minval=-bound, maxval=bound, dtype=jnp.float32)
        b = jax.random.uniform(kb, (out_channels,), minval=-bound,
                               maxval=bound, dtype=jnp.float32)
        weights.append(w)
        biases.append(b)
    return rates, weights, biases


def _reference_forward(x_nchw, rates, weights, biases):
    """Pure-JAX reference using lax.conv_general_dilated (matches PyTorch)."""
    x = x_nchw
    for rate, w, b in zip(rates, weights, biases):
        y = jax.lax.conv_general_dilated(
            x, w, window_strides=(1, 1),
            padding=[(rate, rate), (rate, rate)],
            rhs_dilation=(rate, rate),
            dimension_numbers=("NCHW", "OIHW", "NCHW"),
            precision=jax.lax.Precision.HIGHEST)
        y = y + b[None, :, None, None]
        x = _gelu_exact_ref(y)
    return x


if __name__ == "__main__":
    # DilatedBlock(in_channels=4, out_channels=4, n_spatial_dims=2,
    #              kernel_size=3, num_levels=3, padding_type='zero')
    N, C, H, W = 2, 4, 16, 16
    kernel_size, num_levels = 3, 3

    key = jax.random.PRNGKey(0)
    kx_key, kp_key = jax.random.split(key)
    x = jax.random.normal(kx_key, (N, C, H, W), dtype=jnp.float32)

    rates, weights, biases = make_dilated_block_params(
        kp_key, in_channels=C, out_channels=C, kernel_size=kernel_size,
        num_levels=num_levels)

    # Repacking + pallas_call share one jit so the static-weight repack is
    # hoisted / constant-folded off the launch path.
    fwd = jax.jit(lambda xx, ws, bs: dilated_block_forward(xx, rates, ws, bs))
    out = jax.block_until_ready(fwd(x, weights, biases))

    ref = _reference_forward(x, rates, weights, biases)
    assert out.shape == (N, C, H, W)
    max_err = float(jnp.max(jnp.abs(out - ref)))
    assert jnp.allclose(out, ref, atol=2e-4, rtol=2e-4), max_err

    print("KERNEL_OK")
</pallas_src>

<mosaic_0001>
module attributes {stable_mosaic.version = 11 : i64} {
  func.func @_fused_dilated_block_kernel(%arg0: i32, %arg1: memref<1x8x256xf32, #tpu.memory_space<vmem>>, %arg2: memref<8x180xf32, #tpu.memory_space<vmem>>, %arg3: memref<8x5xf32, #tpu.memory_space<vmem>>, %arg4: memref<24x256xf32, #tpu.memory_space<vmem>>, %arg5: memref<1x8x256xf32, #tpu.memory_space<vmem>>) attributes {dimension_semantics = [#tpu.dimension_semantics<arbitrary>], iteration_bounds = array<i64: 1>, scalar_prefetch = 0 : i64, scratch_operands = 0 : i64, tpu.core_type = #tpu.core_type<tc>, window_params = [{transform_indices = @transform_0, window_bounds = array<i64: 1, 8, 256>}, {pipeline_mode = #tpu.pipeline_mode<synchronous>, transform_indices = @transform_1, window_bounds = array<i64: 8, 180>}, {pipeline_mode = #tpu.pipeline_mode<synchronous>, transform_indices = @transform_2, window_bounds = array<i64: 8, 5>}, {pipeline_mode = #tpu.pipeline_mode<synchronous>, transform_indices = @transform_3, window_bounds = array<i64: 24, 256>}, {transform_indices = @transform_4, window_bounds = array<i64: 1, 8, 256>}]} {
    %c0 = arith.constant 0 : index
    %c0_0 = arith.constant 0 : index
    %c0_1 = arith.constant 0 : index
    %0 = vector.load %arg1[%c0, %c0_0, %c0_1] : memref<1x8x256xf32, #tpu.memory_space<vmem>>, vector<1x8x256xf32>
    %1 = vector.shape_cast %0 : vector<1x8x256xf32> to vector<8x256xf32>
    %cst = arith.constant 0.000000e+00 : f32
    %2 = vector.broadcast %cst : f32 to vector<8x256xf32>
    %c17_i32 = arith.constant 17 : i32
    %3 = tpu.dynamic_rotate %1 by %c17_i32 dim 1 : vector<8x256xf32>, i32 -> vector<8x256xf32>
    %c0_2 = arith.constant 0 : index
    %c0_3 = arith.constant 0 : index
    %4 = vector.load %arg4[%c0_2, %c0_3] : memref<24x256xf32, #tpu.memory_space<vmem>>, vector<1x256xf32>
    %5 = vector.broadcast %4 : vector<1x256xf32> to vector<8x256xf32>
    %6 = arith.mulf %3, %5 : vector<8x256xf32>
    %c0_4 = arith.constant 0 : index
    %c0_5 = arith.constant 0 : index
    %7 = vector.load %arg2[%c0_4, %c0_5] : memref<8x180xf32, #tpu.memory_space<vmem>>, vector<8x1xf32>
    %8 = vector.broadcast %7 : vector<8x1xf32> to vector<8x256xf32>
    %9 = arith.mulf %8, %6 : vector<8x256xf32>
    %10 = arith.addf %2, %9 : vector<8x256xf32>
    %c6_i32 = arith.constant 6 : i32
    %11 = tpu.dynamic_rotate %6 by %c6_i32 dim 0 : vector<8x256xf32>, i32 -> vector<8x256xf32>
    %c0_6 = arith.constant 0 : index
    %c1 = arith.constant 1 : index
    %12 = vector.load %arg2[%c0_6, %c1] : memref<8x180xf32, #tpu.memory_space<vmem>>, vector<8x1xf32>
    %13 = vector.broadcast %12 : vector<8x1xf32> to vector<8x256xf32>
    %14 = arith.mulf %13, %11 : vector<8x256xf32>
    %15 = arith.addf %10, %14 : vector<8x256xf32>
    %c4_i32 = arith.constant 4 : i32
    %16 = tpu.dynamic_rotate %6 by %c4_i32 dim 0 : vector<8x256xf32>, i32 -> vector<8x256xf32>
    %c0_7 = arith.constant 0 : index
    %c2 = arith.constant 2 : index
    %17 = vector.load %arg2[%c0_7, %c2] : memref<8x180xf32, #tpu.memory_space<vmem>>, vector<8x1xf32>
    %18 = vector.broadcast %17 : vector<8x1xf32> to vector<8x256xf32>
    %19 = arith.mulf %18, %16 : vector<8x256xf32>
    %20 = arith.addf %15, %19 : vector<8x256xf32>
    %c2_i32 = arith.constant 2 : i32
    %21 = tpu.dynamic_rotate %6 by %c2_i32 dim 0 : vector<8x256xf32>, i32 -> vector<8x256xf32>
    %c0_8 = arith.constant 0 : index
    %c3 = arith.constant 3 : index
    %22 = vector.load %arg2[%c0_8, %c3] : memref<8x180xf32, #tpu.memory_space<vmem>>, vector<8x1xf32>
    %23 = vector.broadcast %22 : vector<8x1xf32> to vector<8x256xf32>
    %24 = arith.mulf %23, %21 : vector<8x256xf32>
    %25 = arith.addf %20, %24 : vector<8x256xf32>
    %c16_i32 = arith.constant 16 : i32
    %26 = tpu.dynamic_rotate %1 by %c16_i32 dim 1 : vector<8x256xf32>, i32 -> vector<8x256xf32>
    %c1_9 = arith.constant 1 : index
    %c0_10 = arith.constant 0 : index
    %27 = vector.load %arg4[%c1_9, %c0_10] : memref<24x256xf32, #tpu.memory_space<vmem>>, vector<1x256xf32>
    %28 = vector.broadcast %27 : vector<1x256xf32> to vector<8x256xf32>
    %29 = arith.mulf %26, %28 : vector<8x256xf32>
    %c0_11 = arith.constant 0 : index
    %c4 = arith.constant 4 : index
    %30 = vector.load %arg2[%c0_11, %c4] : memref<8x180xf32, #tpu.memory_space<vmem>>, vector<8x1xf32>
    %31 = vector.broadcast %30 : vector<8x1xf32> to vector<8x256xf32>
    %32 = arith.mulf %31, %29 : vector<8x256xf32>
    %33 = arith.addf %25, %32 : vector<8x256xf32>
    %c6_i32_12 = arith.constant 6 : i32
    %34 = tpu.dynamic_rotate %29 by %c6_i32_12 dim 0 : vector<8x256xf32>, i32 -> vector<8x256xf32>
    %c0_13 = arith.constant 0 : index
    %c5 = arith.constant 5 : index
    %35 = vector.load %arg2[%c0_13, %c5] : memref<8x180xf32, #tpu.memory_space<vmem>>, vector<8x1xf32>
    %36 = vector.broadcast %35 : vector<8x1xf32> to vector<8x256xf32>
    %37 = arith.mulf %36, %34 : vector<8x256xf32>
    %38 = arith.addf %33, %37 : vector<8x256xf32>
    %c4_i32_14 = arith.constant 4 : i32
    %39 = tpu.dynamic_rotate %29 by %c4_i32_14 dim 0 : vector<8x256xf32>, i32 -> vector<8x256xf32>
    %c0_15 = arith.constant 0 : index
    %c6 = arith.constant 6 : index
    %40 = vector.load %arg2[%c0_15, %c6] : memref<8x180xf32, #tpu.memory_space<vmem>>, vector<8x1xf32>
    %41 = vector.broadcast %40 : vector<8x1xf32> to vector<8x256xf32>
    %42 = arith.mulf %41, %39 : vector<8x256xf32>
    %43 = arith.addf %38, %42 : vector<8x256xf32>
    %c2_i32_16 = arith.constant 2 : i32
    %44 = tpu.dynamic_rotate %29 by %c2_i32_16 dim 0 : vector<8x256xf32>, i32 -> vector<8x256xf32>
    %c0_17 = arith.constant 0 : index
    %c7 = arith.constant 7 : index
    %45 = vector.load %arg2[%c0_17, %c7] : memref<8x180xf32, #tpu.memory_space<vmem>>, vector<8x1xf32>
    %46 = vector.broadcast %45 : vector<8x1xf32> to vector<8x256xf32>
    %47 = arith.mulf %46, %44 : vector<8x256xf32>
    %48 = arith.addf %43, %47 : vector<8x256xf32>
    %c15_i32 = arith.constant 15 : i32
    %49 = tpu.dynamic_rotate %1 by %c15_i32 dim 1 : vector<8x256xf32>, i32 -> vector<8x256xf32>
    %c2_18 = arith.constant 2 : index
    %c0_19 = arith.constant 0 : index
    %50 = vector.load %arg4[%c2_18, %c0_19] : memref<24x256xf32, #tpu.memory_space<vmem>>, vector<1x256xf32>
    %51 = vector.broadcast %50 : vector<1x256xf32> to vector<8x256xf32>
    %52 = arith.mulf %49, %51 : vector<8x256xf32>
    %c0_20 = arith.constant 0 : index
    %c8 = arith.constant 8 : index
    %53 = vector.load %arg2[%c0_20, %c8] : memref<8x180xf32, #tpu.memory_space<vmem>>, vector<8x1xf32>
    %54 = vector.broadcast %53 : vector<8x1xf32> to vector<8x256xf32>
    %55 = arith.mulf %54, %52 : vector<8x256xf32>
    %56 = arith.addf %48, %55 : vector<8x256xf32>
    %c6_i32_21 = arith.constant 6 : i32
    %57 = tpu.dynamic_rotate %52 by %c6_i32_21 dim 0 : vector<8x256xf32>, i32 -> vector<8x256xf32>
    %c0_22 = arith.constant 0 : index
    %c9 = arith.constant 9 : index
    %58 = vector.load %arg2[%c0_22, %c9] : memref<8x180xf32, #tpu.memory_space<vmem>>, vector<8x1xf32>
    %59 = vector.broadcast %58 : vector<8x1xf32> to vector<8x256xf32>
    %60 = arith.mulf %59, %57 : vector<8x256xf32>
    %61 = arith.addf %56, %60 : vector<8x256xf32>
    %c4_i32_23 = arith.constant 4 : i32
    %62 = tpu.dynamic_rotate %52 by %c4_i32_23 dim 0 : vector<8x256xf32>, i32 -> vector<8x256xf32>
    %c0_24 = arith.constant 0 : index
    %c10 = arith.constant 10 : index
    %63 = vector.load %arg2[%c0_24, %c10] : memref<8x180xf32, #tpu.memory_space<vmem>>, vector<8x1xf32>
    %64 = vector.broadcast %63 : vector<8x1xf32> to vector<8x256xf32>
    %65 = arith.mulf %64, %62 : vector<8x256xf32>
    %66 = arith.addf %61, %65 : vector<8x256xf32>
    %c2_i32_25 = arith.constant 2 : i32
    %67 = tpu.dynamic_rotate %52 by %c2_i32_25 dim 0 : vector<8x256xf32>, i32 -> vector<8x256xf32>
    %c0_26 = arith.constant 0 : index
    %c11 = arith.constant 11 : index
    %68 = vector.load %arg2[%c0_26, %c11] : memref<8x180xf32, #tpu.memory_space<vmem>>, vector<8x1xf32>
    %69 = vector.broadcast %68 : vector<8x1xf32> to vector<8x256xf32>
    %70 = arith.mulf %69, %67 : vector<8x256xf32>
    %71 = arith.addf %66, %70 : vector<8x256xf32>
    %c1_i32 = arith.constant 1 : i32
    %72 = tpu.dynamic_rotate %1 by %c1_i32 dim 1 : vector<8x256xf32>, i32 -> vector<8x256xf32>
    %c3_27 = arith.constant 3 : index
    %c0_28 = arith.constant 0 : index
    %73 = vector.load %arg4[%c3_27, %c0_28] : memref<24x256xf32, #tpu.memory_space<vmem>>, vector<1x256xf32>
    %74 = vector.broadcast %73 : vector<1x256xf32> to vector<8x256xf32>
    %75 = arith.mulf %72, %74 : vector<8x256xf32>
    %c0_29 = arith.constant 0 : index
    %c12 = arith.constant 12 : index
    %76 = vector.load %arg2[%c0_29, %c12] : memref<8x180xf32, #tpu.memory_space<vmem>>, vector<8x1xf32>
    %77 = vector.broadcast %76 : vector<8x1xf32> to vector<8x256xf32>
    %78 = arith.mulf %77, %75 : vector<8x256xf32>
    %79 = arith.addf %71, %78 : vector<8x256xf32>
    %c6_i32_30 = arith.constant 6 : i32
    %80 = tpu.dynamic_rotate %75 by %c6_i32_30 dim 0 : vector<8x256xf32>, i32 -> vector<8x256xf32>
    %c0_31 = arith.constant 0 : index
    %c13 = arith.constant 13 : index
    %81 = vector.load %arg2[%c0_31, %c13] : memref<8x180xf32, #tpu.memory_space<vmem>>, vector<8x1xf32>
    %82 = vector.broadcast %81 : vector<8x1xf32> to vector<8x256xf32>
    %83 = arith.mulf %82, %80 : vector<8x256xf32>
    %84 = arith.addf %79, %83 : vector<8x256xf32>
    %c4_i32_32 = arith.constant 4 : i32
    %85 = tpu.dynamic_rotate %75 by %c4_i32_32 dim 0 : vector<8x256xf32>, i32 -> vector<8x256xf32>
    %c0_33 = arith.constant 0 : index
    %c14 = arith.constant 14 : index
    %86 = vector.load %arg2[%c0_33, %c14] : memref<8x180xf32, #tpu.memory_space<vmem>>, vector<8x1xf32>
    %87 = vector.broadcast %86 : vector<8x1xf32> to vector<8x256xf32>
    %88 = arith.mulf %87, %85 : vector<8x256xf32>
    %89 = arith.addf %84, %88 : vector<8x256xf32>
    %c2_i32_34 = arith.constant 2 : i32
    %90 = tpu.dynamic_rotate %75 by %c2_i32_34 dim 0 : vector<8x256xf32>, i32 -> vector<8x256xf32>
    %c0_35 = arith.constant 0 : index
    %c15 = arith.constant 15 : index
    %91 = vector.load %arg2[%c0_35, %c15] : memref<8x180xf32, #tpu.memory_space<vmem>>, vector<8x1xf32>
    %92 = vector.broadcast %91 : vector<8x1xf32> to vector<8x256xf32>
    %93 = arith.mulf %92, %90 : vector<8x256xf32>
    %94 = arith.addf %89, %93 : vector<8x256xf32>
    %c0_36 = arith.constant 0 : index
    %c16 = arith.constant 16 : index
    %95 = vector.load %arg2[%c0_36, %c16] : memref<8x180xf32, #tpu.memory_space<vmem>>, vector<8x1xf32>
    %96 = vector.broadcast %95 : vector<8x1xf32> to vector<8x256xf32>
    %97 = arith.mulf %96, %1 : vector<8x256xf32>
    %98 = arith.addf %94, %97 : vector<8x256xf32>
    %c6_i32_37 = arith.constant 6 : i32
    %99 = tpu.dynamic_rotate %1 by %c6_i32_37 dim 0 : vector<8x256xf32>, i32 -> vector<8x256xf32>
    %c0_38 = arith.constant 0 : index
    %c17 = arith.constant 17 : index
    %100 = vector.load %arg2[%c0_38, %c17] : memref<8x180xf32, #tpu.memory_space<vmem>>, vector<8x1xf32>
    %101 = vector.broadcast %100 : vector<8x1xf32> to vector<8x256xf32>
    %102 = arith.mulf %101, %99 : vector<8x256xf32>
    %103 = arith.addf %98, %102 : vector<8x256xf32>
    %c4_i32_39 = arith.constant 4 : i32
    %104 = tpu.dynamic_rotate %1 by %c4_i32_39 dim 0 : vector<8x256xf32>, i32 -> vector<8x256xf32>
    %c0_40 = arith.constant 0 : index
    %c18 = arith.constant 18 : index
    %105 = vector.load %arg2[%c0_40, %c18] : memref<8x180xf32, #tpu.memory_space<vmem>>, vector<8x1xf32>
    %106 = vector.broadcast %105 : vector<8x1xf32> to vector<8x256xf32>
    %107 = arith.mulf %106, %104 : vector<8x256xf32>
    %108 = arith.addf %103, %107 : vector<8x256xf32>
    %c2_i32_41 = arith.constant 2 : i32
    %109 = tpu.dynamic_rotate %1 by %c2_i32_41 dim 0 : vector<8x256xf32>, i32 -> vector<8x256xf32>
    %c0_42 = arith.constant 0 : index
    %c19 = arith.constant 19 : index
    %110 = vector.load %arg2[%c0_42, %c19] : memref<8x180xf32, #tpu.memory_space<vmem>>, vector<8x1xf32>
    %111 = vector.broadcast %110 : vector<8x1xf32> to vector<8x256xf32>
    %112 = arith.mulf %111, %109 : vector<8x256xf32>
    %113 = arith.addf %108, %112 : vector<8x256xf32>
    %c255_i32 = arith.constant 255 : i32
    %114 = tpu.dynamic_rotate %1 by %c255_i32 dim 1 : vector<8x256xf32>, i32 -> vector<8x256xf32>
    %c4_43 = arith.constant 4 : index
    %c0_44 = arith.constant 0 : index
    %115 = vector.load %arg4[%c4_43, %c0_44] : memref<24x256xf32, #tpu.memory_space<vmem>>, vector<1x256xf32>
    %116 = vector.broadcast %115 : vector<1x256xf32> to vector<8x256xf32>
    %117 = arith.mulf %114, %116 : vector<8x256xf32>
    %c0_45 = arith.constant 0 : index
    %c20 = arith.constant 20 : index
    %118 = vector.load %arg2[%c0_45, %c20] : memref<8x180xf32, #tpu.memory_space<vmem>>, vector<8x1xf32>
    %119 = vector.broadcast %118 : vector<8x1xf32> to vector<8x256xf32>
    %120 = arith.mulf %119, %117 : vector<8x256xf32>
    %121 = arith.addf %113, %120 : vector<8x256xf32>
    %c6_i32_46 = arith.constant 6 : i32
    %122 = tpu.dynamic_rotate %117 by %c6_i32_46 dim 0 : vector<8x256xf32>, i32 -> vector<8x256xf32>
    %c0_47 = arith.constant 0 : index
    %c21 = arith.constant 21 : index
    %123 = vector.load %arg2[%c0_47, %c21] : memref<8x180xf32, #tpu.memory_space<vmem>>, vector<8x1xf32>
    %124 = vector.broadcast %123 : vector<8x1xf32> to vector<8x256xf32>
    %125 = arith.mulf %124, %122 : vector<8x256xf32>
    %126 = arith.addf %121, %125 : vector<8x256xf32>
    %c4_i32_48 = arith.constant 4 : i32
    %127 = tpu.dynamic_rotate %117 by %c4_i32_48 dim 0 : vector<8x256xf32>, i32 -> vector<8x256xf32>
    %c0_49 = arith.constant 0 : index
    %c22 = arith.constant 22 : index
    %128 = vector.load %arg2[%c0_49, %c22] : memref<8x180xf32, #tpu.memory_space<vmem>>, vector<8x1xf32>
    %129 = vector.broadcast %128 : vector<8x1xf32> to vector<8x256xf32>
    %130 = arith.mulf %129, %127 : vector<8x256xf32>
    %131 = arith.addf %126, %130 : vector<8x256xf32>
    %c2_i32_50 = arith.constant 2 : i32
    %132 = tpu.dynamic_rotate %117 by %c2_i32_50 dim 0 : vector<8x256xf32>, i32 -> vector<8x256xf32>
    %c0_51 = arith.constant 0 : index
    %c23 = arith.constant 23 : index
    %133 = vector.load %arg2[%c0_51, %c23] : memref<8x180xf32, #tpu.memory_space<vmem>>, vector<8x1xf32>
    %134 = vector.broadcast %133 : vector<8x1xf32> to vector<8x256xf32>
    %135 = arith.mulf %134, %132 : vector<8x256xf32>
    %136 = arith.addf %131, %135 : vector<8x256xf32>
    %c241_i32 = arith.constant 241 : i32
    %137 = tpu.dynamic_rotate %1 by %c241_i32 dim 1 : vector<8x256xf32>, i32 -> vector<8x256xf32>
    %c5_52 = arith.constant 5 : index
    %c0_53 = arith.constant 0 : index
    %138 = vector.load %arg4[%c5_52, %c0_53] : memref<24x256xf32, #tpu.memory_space<vmem>>, vector<1x256xf32>
    %139 = vector.broadcast %138 : vector<1x256xf32> to vector<8x256xf32>
    %140 = arith.mulf %137, %139 : vector<8x256xf32>
    %c0_54 = arith.constant 0 : index
    %c24 = arith.constant 24 : index
    %141 = vector.load %arg2[%c0_54, %c24] : memref<8x180xf32, #tpu.memory_space<vmem>>, vector<8x1xf32>
    %142 = vector.broadcast %141 : vector<8x1xf32> to vector<8x256xf32>
    %143 = arith.mulf %142, %140 : vector<8x256xf32>
    %144 = arith.addf %136, %143 : vector<8x256xf32>
    %c6_i32_55 = arith.constant 6 : i32
    %145 = tpu.dynamic_rotate %140 by %c6_i32_55 dim 0 : vector<8x256xf32>, i32 -> vector<8x256xf32>
    %c0_56 = arith.constant 0 : index
    %c25 = arith.constant 25 : index
    %146 = vector.load %arg2[%c0_56, %c25] : memref<8x180xf32, #tpu.memory_space<vmem>>, vector<8x1xf32>
    %147 = vector.broadcast %146 : vector<8x1xf32> to vector<8x256xf32>
    %148 = arith.mulf %147, %145 : vector<8x256xf32>
    %149 = arith.addf %144, %148 : vector<8x256xf32>
    %c4_i32_57 = arith.constant 4 : i32
    %150 = tpu.dynamic_rotate %140 by %c4_i32_57 dim 0 : vector<8x256xf32>, i32 -> vector<8x256xf32>
    %c0_58 = arith.constant 0 : index
    %c26 = arith.constant 26 : index
    %151 = vector.load %arg2[%c0_58, %c26] : memref<8x180xf32, #tpu.memory_space<vmem>>, vector<8x1xf32>
    %152 = vector.broadcast %151 : vector<8x1xf32> to vector<8x256xf32>
    %153 = arith.mulf %152, %150 : vector<8x256xf32>
    %154 = arith.addf %149, %153 : vector<8x256xf32>
    %c2_i32_59 = arith.constant 2 : i32
    %155 = tpu.dynamic_rotate %140 by %c2_i32_59 dim 0 : vector<8x256xf32>, i32 -> vector<8x256xf32>
    %c0_60 = arith.constant 0 : index
    %c27 = arith.constant 27 : index
    %156 = vector.load %arg2[%c0_60, %c27] : memref<8x180xf32, #tpu.memory_space<vmem>>, vector<8x1xf32>
    %157 = vector.broadcast %156 : vector<8x1xf32> to vector<8x256xf32>
    %158 = arith.mulf %157, %155 : vector<8x256xf32>
    %159 = arith.addf %154, %158 : vector<8x256xf32>
    %c240_i32 = arith.constant 240 : i32
    %160 = tpu.dynamic_rotate %1 by %c240_i32 dim 1 : vector<8x256xf32>, i32 -> vector<8x256xf32>
    %c6_61 = arith.constant 6 : index
    %c0_62 = arith.constant 0 : index
    %161 = vector.load %arg4[%c6_61, %c0_62] : memref<24x256xf32, #tpu.memory_space<vmem>>, vector<1x256xf32>
    %162 = vector.broadcast %161 : vector<1x256xf32> to vector<8x256xf32>
    %163 = arith.mulf %160, %162 : vector<8x256xf32>
    %c0_63 = arith.constant 0 : index
    %c28 = arith.constant 28 : index
    %164 = vector.load %arg2[%c0_63, %c28] : memref<8x180xf32, #tpu.memory_space<vmem>>, vector<8x1xf32>
    %165 = vector.broadcast %164 : vector<8x1xf32> to vector<8x256xf32>
    %166 = arith.mulf %165, %163 : vector<8x256xf32>
    %167 = arith.addf %159, %166 : vector<8x256xf32>
    %c6_i32_64 = arith.constant 6 : i32
    %168 = tpu.dynamic_rotate %163 by %c6_i32_64 dim 0 : vector<8x256xf32>, i32 -> vector<8x256xf32>
    %c0_65 = arith.constant 0 : index
    %c29 = arith.constant 29 : index
    %169 = vector.load %arg2[%c0_65, %c29] : memref<8x180xf32, #tpu.memory_space<vmem>>, vector<8x1xf32>
    %170 = vector.broadcast %169 : vector<8x1xf32> to vector<8x256xf32>
    %171 = arith.mulf %170, %168 : vector<8x256xf32>
    %172 = arith.addf %167, %171 : vector<8x256xf32>
    %c4_i32_66 = arith.constant 4 : i32
    %173 = tpu.dynamic_rotate %163 by %c4_i32_66 dim 0 : vector<8x256xf32>, i32 -> vector<8x256xf32>
    %c0_67 = arith.constant 0 : index
    %c30 = arith.constant 30 : index
    %174 = vector.load %arg2[%c0_67, %c30] : memref<8x180xf32, #tpu.memory_space<vmem>>, vector<8x1xf32>
    %175 = vector.broadcast %174 : vector<8x1xf32> to vector<8x256xf32>
    %176 = arith.mulf %175, %173 : vector<8x256xf32>
    %177 = arith.addf %172, %176 : vector<8x256xf32>
    %c2_i32_68 = arith.constant 2 : i32
    %178 = tpu.dynamic_rotate %163 by %c2_i32_68 dim 0 : vector<8x256xf32>, i32 -> vector<8x256xf32>
    %c0_69 = arith.constant 0 : index
    %c31 = arith.constant 31 : index
    %179 = vector.load %arg2[%c0_69, %c31] : memref<8x180xf32, #tpu.memory_space<vmem>>, vector<8x1xf32>
    %180 = vector.broadcast %179 : vector<8x1xf32> to vector<8x256xf32>
    %181 = arith.mulf %180, %178 : vector<8x256xf32>
    %182 = arith.addf %177, %181 : vector<8x256xf32>
    %c239_i32 = arith.constant 239 : i32
    %183 = tpu.dynamic_rotate %1 by %c239_i32 dim 1 : vector<8x256xf32>, i32 -> vector<8x256xf32>
    %c7_70 = arith.constant 7 : index
    %c0_71 = arith.constant 0 : index
    %184 = vector.load %arg4[%c7_70, %c0_71] : memref<24x256xf32, #tpu.memory_space<vmem>>, vector<1x256xf32>
    %185 = vector.broadcast %184 : vector<1x256xf32> to vector<8x256xf32>
    %186 = arith.mulf %183, %185 : vector<8x256xf32>
    %c0_72 = arith.constant 0 : index
    %c32 = arith.constant 32 : index
    %187 = vector.load %arg2[%c0_72, %c32] : memref<8x180xf32, #tpu.memory_space<vmem>>, vector<8x1xf32>
    %188 = vector.broadcast %187 : vector<8x1xf32> to vector<8x256xf32>
    %189 = arith.mulf %188, %186 : vector<8x256xf32>
    %190 = arith.addf %182, %189 : vector<8x256xf32>
    %c6_i32_73 = arith.constant 6 : i32
    %191 = tpu.dynamic_rotate %186 by %c6_i32_73 dim 0 : vector<8x256xf32>, i32 -> vector<8x256xf32>
    %c0_74 = arith.constant 0 : index
    %c33 = arith.constant 33 : index
    %192 = vector.load %arg2[%c0_74, %c33] : memref<8x180xf32, #tpu.memory_space<vmem>>, vector<8x1xf32>
    %193 = vector.broadcast %192 : vector<8x1xf32> to vector<8x256xf32>
    %194 = arith.mulf %193, %191 : vector<8x256xf32>
    %195 = arith.addf %190, %194 : vector<8x256xf32>
    %c4_i32_75 = arith.constant 4 : i32
    %196 = tpu.dynamic_rotate %186 by %c4_i32_75 dim 0 : vector<8x256xf32>, i32 -> vector<8x256xf32>
    %c0_76 = arith.constant 0 : index
    %c34 = arith.constant 34 : index
    %197 = vector.load %arg2[%c0_76, %c34] : memref<8x180xf32, #tpu.memory_space<vmem>>, vector<8x1xf32>
    %198 = vector.broadcast %197 : vector<8x1xf32> to vector<8x256xf32>
    %199 = arith.mulf %198, %196 : vector<8x256xf32>
    %200 = arith.addf %195, %199 : vector<8x256xf32>
    %c2_i32_77 = arith.constant 2 : i32
    %201 = tpu.dynamic_rotate %186 by %c2_i32_77 dim 0 : vector<8x256xf32>, i32 -> vector<8x256xf32>
    %c0_78 = arith.constant 0 : index
    %c35 = arith.constant 35 : index
    %202 = vector.load %arg2[%c0_78, %c35] : memref<8x180xf32, #tpu.memory_space<vmem>>, vector<8x1xf32>
    %203 = vector.broadcast %202 : vector<8x1xf32> to vector<8x256xf32>
    %204 = arith.mulf %203, %201 : vector<8x256xf32>
    %205 = arith.addf %200, %204 : vector<8x256xf32>
    %c0_79 = arith.constant 0 : index
    %c0_80 = arith.constant 0 : index
    %206 = vector.load %arg3[%c0_79, %c0_80] : memref<8x5xf32, #tpu.memory_space<vmem>>, vector<8x1xf32>
    %207 = vector.broadcast %206 : vector<8x1xf32> to vector<8x256xf32>
    %208 = arith.addf %205, %207 : vector<8x256xf32>
    %cst_81 = arith.constant 0.707106769 : f32
    %209 = vector.broadcast %cst_81 : f32 to vector<8x256xf32>
    %210 = arith.mulf %208, %209 : vector<8x256xf32>
    %211 = math.absf %210 : vector<8x256xf32>
    %cst_82 = arith.constant 0.327591091 : f32
    %212 = vector.broadcast %cst_82 : f32 to vector<8x256xf32>
    %213 = arith.mulf %212, %211 : vector<8x256xf32>
    %cst_83 = arith.constant 1.000000e+00 : f32
    %214 = vector.broadcast %cst_83 : f32 to vector<8x256xf32>
    %215 = arith.addf %214, %213 : vector<8x256xf32>
    %cst_84 = arith.constant 1.000000e+00 : f32
    %216 = vector.broadcast %cst_84 : f32 to vector<8x256xf32>
    %217 = arith.divf %216, %215 : vector<8x256xf32>
    %cst_85 = arith.constant 1.06140542 : f32
    %218 = vector.broadcast %cst_85 : f32 to vector<8x256xf32>
    %219 = arith.mulf %218, %217 : vector<8x256xf32>
    %cst_86 = arith.constant -1.45315206 : f32
    %220 = vector.broadcast %cst_86 : f32 to vector<8x256xf32>
    %221 = arith.addf %219, %220 : vector<8x256xf32>
    %222 = arith.mulf %221, %217 : vector<8x256xf32>
    %cst_87 = arith.constant 1.42141378 : f32
    %223 = vector.broadcast %cst_87 : f32 to vector<8x256xf32>
    %224 = arith.addf %222, %223 : vector<8x256xf32>
    %225 = arith.mulf %224, %217 : vector<8x256xf32>
    %cst_88 = arith.constant -0.284496725 : f32
    %226 = vector.broadcast %cst_88 : f32 to vector<8x256xf32>
    %227 = arith.addf %225, %226 : vector<8x256xf32>
    %228 = arith.mulf %227, %217 : vector<8x256xf32>
    %cst_89 = arith.constant 0.254829586 : f32
    %229 = vector.broadcast %cst_89 : f32 to vector<8x256xf32>
    %230 = arith.addf %228, %229 : vector<8x256xf32>
    %231 = arith.mulf %230, %217 : vector<8x256xf32>
    %232 = arith.mulf %211, %211 : vector<8x256xf32>
    %cst_90 = arith.constant 0.000000e+00 : f32
    %233 = vector.broadcast %cst_90 : f32 to vector<8x256xf32>
    %234 = arith.subf %233, %232 : vector<8x256xf32>
    %235 = math.exp %234 : vector<8x256xf32>
    %236 = arith.mulf %231, %235 : vector<8x256xf32>
    %cst_91 = arith.constant 1.000000e+00 : f32
    %237 = vector.broadcast %cst_91 : f32 to vector<8x256xf32>
    %238 = arith.subf %237, %236 : vector<8x256xf32>
    %cst_92 = arith.constant 0.000000e+00 : f32
    %239 = vector.broadcast %cst_92 : f32 to vector<8x256xf32>
    %240 = arith.cmpf olt, %210, %239 : vector<8x256xf32>
    %cst_93 = arith.constant 0.000000e+00 : f32
    %241 = vector.broadcast %cst_93 : f32 to vector<8x256xf32>
    %242 = arith.subf %241, %238 : vector<8x256xf32>
    %243 = arith.select %240, %242, %238 : vector<8x256xi1>, vector<8x256xf32>
    %cst_94 = arith.constant 5.000000e-01 : f32
    %244 = vector.broadcast %cst_94 : f32 to vector<8x256xf32>
    %245 = arith.mulf %244, %208 : vector<8x256xf32>
    %cst_95 = arith.constant 1.000000e+00 : f32
    %246 = vector.broadcast %cst_95 : f32 to vector<8x256xf32>
    %247 = arith.addf %246, %243 : vector<8x256xf32>
    %248 = arith.mulf %245, %247 : vector<8x256xf32>
    %cst_96 = arith.constant 0.000000e+00 : f32
    %249 = vector.broadcast %cst_96 : f32 to vector<8x256xf32>
    %c34_i32 = arith.constant 34 : i32
    %250 = tpu.dynamic_rotate %248 by %c34_i32 dim 1 : vector<8x256xf32>, i32 -> vector<8x256xf32>
    %c8_97 = arith.constant 8 : index
    %c0_98 = arith.constant 0 : index
    %251 = vector.load %arg4[%c8_97, %c0_98] : memref<24x256xf32, #tpu.memory_space<vmem>>, vector<1x256xf32>
    %252 = vector.broadcast %251 : vector<1x256xf32> to vector<8x256xf32>
    %253 = arith.mulf %250, %252 : vector<8x256xf32>
    %c0_99 = arith.constant 0 : index
    %c36 = arith.constant 36 : index
    %254 = vector.load %arg2[%c0_99, %c36] : memref<8x180xf32, #tpu.memory_space<vmem>>, vector<8x1xf32>
    %255 = vector.broadcast %254 : vector<8x1xf32> to vector<8x256xf32>
    %256 = arith.mulf %255, %253 : vector<8x256xf32>
    %257 = arith.addf %249, %256 : vector<8x256xf32>
    %c6_i32_100 = arith.constant 6 : i32
    %258 = tpu.dynamic_rotate %253 by %c6_i32_100 dim 0 : vector<8x256xf32>, i32 -> vector<8x256xf32>
    %c0_101 = arith.constant 0 : index
    %c37 = arith.constant 37 : index
    %259 = vector.load %arg2[%c0_101, %c37] : memref<8x180xf32, #tpu.memory_space<vmem>>, vector<8x1xf32>
    %260 = vector.broadcast %259 : vector<8x1xf32> to vector<8x256xf32>
    %261 = arith.mulf %260, %258 : vector<8x256xf32>
    %262 = arith.addf %257, %261 : vector<8x256xf32>
    %c4_i32_102 = arith.constant 4 : i32
    %263 = tpu.dynamic_rotate %253 by %c4_i32_102 dim 0 : vector<8x256xf32>, i32 -> vector<8x256xf32>
    %c0_103 = arith.constant 0 : index
    %c38 = arith.constant 38 : index
    %264 = vector.load %arg2[%c0_103, %c38] : memref<8x180xf32, #tpu.memory_space<vmem>>, vector<8x1xf32>
    %265 = vector.broadcast %264 : vector<8x1xf32> to vector<8x256xf32>
    %266 = arith.mulf %265, %263 : vector<8x256xf32>
    %267 = arith.addf %262, %266 : vector<8x256xf32>
    %c2_i32_104 = arith.constant 2 : i32
    %268 = tpu.dynamic_rotate %253 by %c2_i32_104 dim 0 : vector<8x256xf32>, i32 -> vector<8x256xf32>
    %c0_105 = arith.constant 0 : index
    %c39 = arith.constant 39 : index
    %269 = vector.load %arg2[%c0_105, %c39] : memref<8x180xf32, #tpu.memory_space<vmem>>, vector<8x1xf32>
    %270 = vector.broadcast %269 : vector<8x1xf32> to vector<8x256xf32>
    %271 = arith.mulf %270, %268 : vector<8x256xf32>
    %272 = arith.addf %267, %271 : vector<8x256xf32>
    %c32_i32 = arith.constant 32 : i32
    %273 = tpu.dynamic_rotate %248 by %c32_i32 dim 1 : vector<8x256xf32>, i32 -> vector<8x256xf32>
    %c9_106 = arith.constant 9 : index
    %c0_107 = arith.constant 0 : index
    %274 = vector.load %arg4[%c9_106, %c0_107] : memref<24x256xf32, #tpu.memory_space<vmem>>, vector<1x256xf32>
    %275 = vector.broadcast %274 : vector<1x256xf32> to vector<8x256xf32>
    %276 = arith.mulf %273, %275 : vector<8x256xf32>
    %c0_108 = arith.constant 0 : index
    %c40 = arith.constant 40 : index
    %277 = vector.load %arg2[%c0_108, %c40] : memref<8x180xf32, #tpu.memory_space<vmem>>, vector<8x1xf32>
    %278 = vector.broadcast %277 : vector<8x1xf32> to vector<8x256xf32>
    %279 = arith.mulf %278, %276 : vector<8x256xf32>
    %280 = arith.addf %272, %279 : vector<8x256xf32>
    %c6_i32_109 = arith.constant 6 : i32
    %281 = tpu.dynamic_rotate %276 by %c6_i32_109 dim 0 : vector<8x256xf32>, i32 -> vector<8x256xf32>
    %c0_110 = arith.constant 0 : index
    %c41 = arith.constant 41 : index
    %282 = vector.load %arg2[%c0_110, %c41] : memref<8x180xf32, #tpu.memory_space<vmem>>, vector<8x1xf32>
    %283 = vector.broadcast %282 : vector<8x1xf32> to vector<8x256xf32>
    %284 = arith.mulf %283, %281 : vector<8x256xf32>
    %285 = arith.addf %280, %284 : vector<8x256xf32>
    %c4_i32_111 = arith.constant 4 : i32
    %286 = tpu.dynamic_rotate %276 by %c4_i32_111 dim 0 : vector<8x256xf32>, i32 -> vector<8x256xf32>
    %c0_112 = arith.constant 0 : index
    %c42 = arith.constant 42 : index
    %287 = vector.load %arg2[%c0_112, %c42] : memref<8x180xf32, #tpu.memory_space<vmem>>, vector<8x1xf32>
    %288 = vector.broadcast %287 : vector<8x1xf32> to vector<8x256xf32>
    %289 = arith.mulf %288, %286 : vector<8x256xf32>
    %290 = arith.addf %285, %289 : vector<8x256xf32>
    %c2_i32_113 = arith.constant 2 : i32
    %291 = tpu.dynamic_rotate %276 by %c2_i32_113 dim 0 : vector<8x256xf32>, i32 -> vector<8x256xf32>
    %c0_114 = arith.constant 0 : index
    %c43 = arith.constant 43 : index
    %292 = vector.load %arg2[%c0_114, %c43] : memref<8x180xf32, #tpu.memory_space<vmem>>, vector<8x1xf32>
    %293 = vector.broadcast %292 : vector<8x1xf32> to vector<8x256xf32>
    %294 = arith.mulf %293, %291 : vector<8x256xf32>
    %295 = arith.addf %290, %294 : vector<8x256xf32>
    %c30_i32 = arith.constant 30 : i32
    %296 = tpu.dynamic_rotate %248 by %c30_i32 dim 1 : vector<8x256xf32>, i32 -> vector<8x256xf32>
    %c10_115 = arith.constant 10 : index
    %c0_116 = arith.constant 0 : index
    %297 = vector.load %arg4[%c10_115, %c0_116] : memref<24x256xf32, #tpu.memory_space<vmem>>, vector<1x256xf32>
    %298 = vector.broadcast %297 : vector<1x256xf32> to vector<8x256xf32>
    %299 = arith.mulf %296, %298 : vector<8x256xf32>
    %c0_117 = arith.constant 0 : index
    %c44 = arith.constant 44 : index
    %300 = vector.load %arg2[%c0_117, %c44] : memref<8x180xf32, #tpu.memory_space<vmem>>, vector<8x1xf32>
    %301 = vector.broadcast %300 : vector<8x1xf32> to vector<8x256xf32>
    %302 = arith.mulf %301, %299 : vector<8x256xf32>
    %303 = arith.addf %295, %302 : vector<8x256xf32>
    %c6_i32_118 = arith.constant 6 : i32
    %304 = tpu.dynamic_rotate %299 by %c6_i32_118 dim 0 : vector<8x256xf32>, i32 -> vector<8x256xf32>
    %c0_119 = arith.constant 0 : index
    %c45 = arith.constant 45 : index
    %305 = vector.load %arg2[%c0_119, %c45] : memref<8x180xf32, #tpu.memory_space<vmem>>, vector<8x1xf32>
    %306 = vector.broadcast %305 : vector<8x1xf32> to vector<8x256xf32>
    %307 = arith.mulf %306, %304 : vector<8x256xf32>
    %308 = arith.addf %303, %307 : vector<8x256xf32>
    %c4_i32_120 = arith.constant 4 : i32
    %309 = tpu.dynamic_rotate %299 by %c4_i32_120 dim 0 : vector<8x256xf32>, i32 -> vector<8x256xf32>
    %c0_121 = arith.constant 0 : index
    %c46 = arith.constant 46 : index
    %310 = vector.load %arg2[%c0_121, %c46] : memref<8x180xf32, #tpu.memory_space<vmem>>, vector<8x1xf32>
    %311 = vector.broadcast %310 : vector<8x1xf32> to vector<8x256xf32>
    %312 = arith.mulf %311, %309 : vector<8x256xf32>
    %313 = arith.addf %308, %312 : vector<8x256xf32>
    %c2_i32_122 = arith.constant 2 : i32
    %314 = tpu.dynamic_rotate %299 by %c2_i32_122 dim 0 : vector<8x256xf32>, i32 -> vector<8x256xf32>
    %c0_123 = arith.constant 0 : index
    %c47 = arith.constant 47 : index
    %315 = vector.load %arg2[%c0_123, %c47] : memref<8x180xf32, #tpu.memory_space<vmem>>, vector<8x1xf32>
    %316 = vector.broadcast %315 : vector<8x1xf32> to vector<8x256xf32>
    %317 = arith.mulf %316, %314 : vector<8x256xf32>
    %318 = arith.addf %313, %317 : vector<8x256xf32>
    %c2_i32_124 = arith.constant 2 : i32
    %319 = tpu.dynamic_rotate %248 by %c2_i32_124 dim 1 : vector<8x256xf32>, i32 -> vector<8x256xf32>
    %c11_125 = arith.constant 11 : index
    %c0_126 = arith.constant 0 : index
    %320 = vector.load %arg4[%c11_125, %c0_126] : memref<24x256xf32, #tpu.memory_space<vmem>>, vector<1x256xf32>
    %321 = vector.broadcast %320 : vector<1x256xf32> to vector<8x256xf32>
    %322 = arith.mulf %319, %321 : vector<8x256xf32>
    %c0_127 = arith.constant 0 : index
    %c48 = arith.constant 48 : index
    %323 = vector.load %arg2[%c0_127, %c48] : memref<8x180xf32, #tpu.memory_space<vmem>>, vector<8x1xf32>
    %324 = vector.broadcast %323 : vector<8x1xf32> to vector<8x256xf32>
    %325 = arith.mulf %324, %322 : vector<8x256xf32>
    %326 = arith.addf %318, %325 : vector<8x256xf32>
    %c6_i32_128 = arith.constant 6 : i32
    %327 = tpu.dynamic_rotate %322 by %c6_i32_128 dim 0 : vector<8x256xf32>, i32 -> vector<8x256xf32>
    %c0_129 = arith.constant 0 : index
    %c49 = arith.constant 49 : index
    %328 = vector.load %arg2[%c0_129, %c49] : memref<8x180xf32, #tpu.memory_space<vmem>>, vector<8x1xf32>
    %329 = vector.broadcast %328 : vector<8x1xf32> to vector<8x256xf32>
    %330 = arith.mulf %329, %327 : vector<8x256xf32>
    %331 = arith.addf %326, %330 : vector<8x256xf32>
    %c4_i32_130 = arith.constant 4 : i32
    %332 = tpu.dynamic_rotate %322 by %c4_i32_130 dim 0 : vector<8x256xf32>, i32 -> vector<8x256xf32>
    %c0_131 = arith.constant 0 : index
    %c50 = arith.constant 50 : index
    %333 = vector.load %arg2[%c0_131, %c50] : memref<8x180xf32, #tpu.memory_space<vmem>>, vector<8x1xf32>
    %334 = vector.broadcast %333 : vector<8x1xf32> to vector<8x256xf32>
    %335 = arith.mulf %334, %332 : vector<8x256xf32>
    %336 = arith.addf %331, %335 : vector<8x256xf32>
    %c2_i32_132 = arith.constant 2 : i32
    %337 = tpu.dynamic_rotate %322 by %c2_i32_132 dim 0 : vector<8x256xf32>, i32 -> vector<8x256xf32>
    %c0_133 = arith.constant 0 : index
    %c51 = arith.constant 51 : index
    %338 = vector.load %arg2[%c0_133, %c51] : memref<8x180xf32, #tpu.memory_space<vmem>>, vector<8x1xf32>
    %339 = vector.broadcast %338 : vector<8x1xf32> to vector<8x256xf32>
    %340 = arith.mulf %339, %337 : vector<8x256xf32>
    %341 = arith.addf %336, %340 : vector<8x256xf32>
    %c0_134 = arith.constant 0 : index
    %c52 = arith.constant 52 : index
    %342 = vector.load %arg2[%c0_134, %c52] : memref<8x180xf32, #tpu.memory_space<vmem>>, vector<8x1xf32>
    %343 = vector.broadcast %342 : vector<8x1xf32> to vector<8x256xf32>
    %344 = arith.mulf %343, %248 : vector<8x256xf32>
    %345 = arith.addf %341, %344 : vector<8x256xf32>
    %c6_i32_135 = arith.constant 6 : i32
    %346 = tpu.dynamic_rotate %248 by %c6_i32_135 dim 0 : vector<8x256xf32>, i32 -> vector<8x256xf32>
    %c0_136 = arith.constant 0 : index
    %c53 = arith.constant 53 : index
    %347 = vector.load %arg2[%c0_136, %c53] : memref<8x180xf32, #tpu.memory_space<vmem>>, vector<8x1xf32>
    %348 = vector.broadcast %347 : vector<8x1xf32> to vector<8x256xf32>
    %349 = arith.mulf %348, %346 : vector<8x256xf32>
    %350 = arith.addf %345, %349 : vector<8x256xf32>
    %c4_i32_137 = arith.constant 4 : i32
    %351 = tpu.dynamic_rotate %248 by %c4_i32_137 dim 0 : vector<8x256xf32>, i32 -> vector<8x256xf32>
    %c0_138 = arith.constant 0 : index
    %c54 = arith.constant 54 : index
    %352 = vector.load %arg2[%c0_138, %c54] : memref<8x180xf32, #tpu.memory_space<vmem>>, vector<8x1xf32>
    %353 = vector.broadcast %352 : vector<8x1xf32> to vector<8x256xf32>
    %354 = arith.mulf %353, %351 : vector<8x256xf32>
    %355 = arith.addf %350, %354 : vector<8x256xf32>
    %c2_i32_139 = arith.constant 2 : i32
    %356 = tpu.dynamic_rotate %248 by %c2_i32_139 dim 0 : vector<8x256xf32>, i32 -> vector<8x256xf32>
    %c0_140 = arith.constant 0 : index
    %c55 = arith.constant 55 : index
    %357 = vector.load %arg2[%c0_140, %c55] : memref<8x180xf32, #tpu.memory_space<vmem>>, vector<8x1xf32>
    %358 = vector.broadcast %357 : vector<8x1xf32> to vector<8x256xf32>
    %359 = arith.mulf %358, %356 : vector<8x256xf32>
    %360 = arith.addf %355, %359 : vector<8x256xf32>
    %c254_i32 = arith.constant 254 : i32
    %361 = tpu.dynamic_rotate %248 by %c254_i32 dim 1 : vector<8x256xf32>, i32 -> vector<8x256xf32>
    %c12_141 = arith.constant 12 : index
    %c0_142 = arith.constant 0 : index
    %362 = vector.load %arg4[%c12_141, %c0_142] : memref<24x256xf32, #tpu.memory_space<vmem>>, vector<1x256xf32>
    %363 = vector.broadcast %362 : vector<1x256xf32> to vector<8x256xf32>
    %364 = arith.mulf %361, %363 : vector<8x256xf32>
    %c0_143 = arith.constant 0 : index
    %c56 = arith.constant 56 : index
    %365 = vector.load %arg2[%c0_143, %c56] : memref<8x180xf32, #tpu.memory_space<vmem>>, vector<8x1xf32>
    %366 = vector.broadcast %365 : vector<8x1xf32> to vector<8x256xf32>
    %367 = arith.mulf %366, %364 : vector<8x256xf32>
    %368 = arith.addf %360, %367 : vector<8x256xf32>
    %c6_i32_144 = arith.constant 6 : i32
    %369 = tpu.dynamic_rotate %364 by %c6_i32_144 dim 0 : vector<8x256xf32>, i32 -> vector<8x256xf32>
    %c0_145 = arith.constant 0 : index
    %c57 = arith.constant 57 : index
    %370 = vector.load %arg2[%c0_145, %c57] : memref<8x180xf32, #tpu.memory_space<vmem>>, vector<8x1xf32>
    %371 = vector.broadcast %370 : vector<8x1xf32> to vector<8x256xf32>
    %372 = arith.mulf %371, %369 : vector<8x256xf32>
    %373 = arith.addf %368, %372 : vector<8x256xf32>
    %c4_i32_146 = arith.constant 4 : i32
    %374 = tpu.dynamic_rotate %364 by %c4_i32_146 dim 0 : vector<8x256xf32>, i32 -> vector<8x256xf32>
    %c0_147 = arith.constant 0 : index
    %c58 = arith.constant 58 : index
    %375 = vector.load %arg2[%c0_147, %c58] : memref<8x180xf32, #tpu.memory_space<vmem>>, vector<8x1xf32>
    %376 = vector.broadcast %375 : vector<8x1xf32> to vector<8x256xf32>
    %377 = arith.mulf %376, %374 : vector<8x256xf32>
    %378 = arith.addf %373, %377 : vector<8x256xf32>
    %c2_i32_148 = arith.constant 2 : i32
    %379 = tpu.dynamic_rotate %364 by %c2_i32_148 dim 0 : vector<8x256xf32>, i32 -> vector<8x256xf32>
    %c0_149 = arith.constant 0 : index
    %c59 = arith.constant 59 : index
    %380 = vector.load %arg2[%c0_149, %c59] : memref<8x180xf32, #tpu.memory_space<vmem>>, vector<8x1xf32>
    %381 = vector.broadcast %380 : vector<8x1xf32> to vector<8x256xf32>
    %382 = arith.mulf %381, %379 : vector<8x256xf32>
    %383 = arith.addf %378, %382 : vector<8x256xf32>
    %c226_i32 = arith.constant 226 : i32
    %384 = tpu.dynamic_rotate %248 by %c226_i32 dim 1 : vector<8x256xf32>, i32 -> vector<8x256xf32>
    %c13_150 = arith.constant 13 : index
    %c0_151 = arith.constant 0 : index
    %385 = vector.load %arg4[%c13_150, %c0_151] : memref<24x256xf32, #tpu.memory_space<vmem>>, vector<1x256xf32>
    %386 = vector.broadcast %385 : vector<1x256xf32> to vector<8x256xf32>
    %387 = arith.mulf %384, %386 : vector<8x256xf32>
    %c0_152 = arith.constant 0 : index
    %c60 = arith.constant 60 : index
    %388 = vector.load %arg2[%c0_152, %c60] : memref<8x180xf32, #tpu.memory_space<vmem>>, vector<8x1xf32>
    %389 = vector.broadcast %388 : vector<8x1xf32> to vector<8x256xf32>
    %390 = arith.mulf %389, %387 : vector<8x256xf32>
    %391 = arith.addf %383, %390 : vector<8x256xf32>
    %c6_i32_153 = arith.constant 6 : i32
    %392 = tpu.dynamic_rotate %387 by %c6_i32_153 dim 0 : vector<8x256xf32>, i32 -> vector<8x256xf32>
    %c0_154 = arith.constant 0 : index
    %c61 = arith.constant 61 : index
    %393 = vector.load %arg2[%c0_154, %c61] : memref<8x180xf32, #tpu.memory_space<vmem>>, vector<8x1xf32>
    %394 = vector.broadcast %393 : vector<8x1xf32> to vector<8x256xf32>
    %395 = arith.mulf %394, %392 : vector<8x256xf32>
    %396 = arith.addf %391, %395 : vector<8x256xf32>
    %c4_i32_155 = arith.constant 4 : i32
    %397 = tpu.dynamic_rotate %387 by %c4_i32_155 dim 0 : vector<8x256xf32>, i32 -> vector<8x256xf32>
    %c0_156 = arith.constant 0 : index
    %c62 = arith.constant 62 : index
    %398 = vector.load %arg2[%c0_156, %c62] : memref<8x180xf32, #tpu.memory_space<vmem>>, vector<8x1xf32>
    %399 = vector.broadcast %398 : vector<8x1xf32> to vector<8x256xf32>
    %400 = arith.mulf %399, %397 : vector<8x256xf32>
    %401 = arith.addf %396, %400 : vector<8x256xf32>
    %c2_i32_157 = arith.constant 2 : i32
    %402 = tpu.dynamic_rotate %387 by %c2_i32_157 dim 0 : vector<8x256xf32>, i32 -> vector<8x256xf32>
    %c0_158 = arith.constant 0 : index
    %c63 = arith.constant 63 : index
    %403 = vector.load %arg2[%c0_158, %c63] : memref<8x180xf32, #tpu.memory_space<vmem>>, vector<8x1xf32>
    %404 = vector.broadcast %403 : vector<8x1xf32> to vector<8x256xf32>
    %405 = arith.mulf %404, %402 : vector<8x256xf32>
    %406 = arith.addf %401, %405 : vector<8x256xf32>
    %c224_i32 = arith.constant 224 : i32
    %407 = tpu.dynamic_rotate %248 by %c224_i32 dim 1 : vector<8x256xf32>, i32 -> vector<8x256xf32>
    %c14_159 = arith.constant 14 : index
    %c0_160 = arith.constant 0 : index
    %408 = vector.load %arg4[%c14_159, %c0_160] : memref<24x256xf32, #tpu.memory_space<vmem>>, vector<1x256xf32>
    %409 = vector.broadcast %408 : vector<1x256xf32> to vector<8x256xf32>
    %410 = arith.mulf %407, %409 : vector<8x256xf32>
    %c0_161 = arith.constant 0 : index
    %c64 = arith.constant 64 : index
    %411 = vector.load %arg2[%c0_161, %c64] : memref<8x180xf32, #tpu.memory_space<vmem>>, vector<8x1xf32>
    %412 = vector.broadcast %411 : vector<8x1xf32> to vector<8x256xf32>
    %413 = arith.mulf %412, %410 : vector<8x256xf32>
    %414 = arith.addf %406, %413 : vector<8x256xf32>
    %c6_i32_162 = arith.constant 6 : i32
    %415 = tpu.dynamic_rotate %410 by %c6_i32_162 dim 0 : vector<8x256xf32>, i32 -> vector<8x256xf32>
    %c0_163 = arith.constant 0 : index
    %c65 = arith.constant 65 : index
    %416 = vector.load %arg2[%c0_163, %c65] : memref<8x180xf32, #tpu.memory_space<vmem>>, vector<8x1xf32>
    %417 = vector.broadcast %416 : vector<8x1xf32> to vector<8x256xf32>
    %418 = arith.mulf %417, %415 : vector<8x256xf32>
    %419 = arith.addf %414, %418 : vector<8x256xf32>
    %c4_i32_164 = arith.constant 4 : i32
    %420 = tpu.dynamic_rotate %410 by %c4_i32_164 dim 0 : vector<8x256xf32>, i32 -> vector<8x256xf32>
    %c0_165 = arith.constant 0 : index
    %c66 = arith.constant 66 : index
    %421 = vector.load %arg2[%c0_165, %c66] : memref<8x180xf32, #tpu.memory_space<vmem>>, vector<8x1xf32>
    %422 = vector.broadcast %421 : vector<8x1xf32> to vector<8x256xf32>
    %423 = arith.mulf %422, %420 : vector<8x256xf32>
    %424 = arith.addf %419, %423 : vector<8x256xf32>
    %c2_i32_166 = arith.constant 2 : i32
    %425 = tpu.dynamic_rotate %410 by %c2_i32_166 dim 0 : vector<8x256xf32>, i32 -> vector<8x256xf32>
    %c0_167 = arith.constant 0 : index
    %c67 = arith.constant 67 : index
    %426 = vector.load %arg2[%c0_167, %c67] : memref<8x180xf32, #tpu.memory_space<vmem>>, vector<8x1xf32>
    %427 = vector.broadcast %426 : vector<8x1xf32> to vector<8x256xf32>
    %428 = arith.mulf %427, %425 : vector<8x256xf32>
    %429 = arith.addf %424, %428 : vector<8x256xf32>
    %c222_i32 = arith.constant 222 : i32
    %430 = tpu.dynamic_rotate %248 by %c222_i32 dim 1 : vector<8x256xf32>, i32 -> vector<8x256xf32>
    %c15_168 = arith.constant 15 : index
    %c0_169 = arith.constant 0 : index
    %431 = vector.load %arg4[%c15_168, %c0_169] : memref<24x256xf32, #tpu.memory_space<vmem>>, vector<1x256xf32>
    %432 = vector.broadcast %431 : vector<1x256xf32> to vector<8x256xf32>
    %433 = arith.mulf %430, %432 : vector<8x256xf32>
    %c0_170 = arith.constant 0 : index
    %c68 = arith.constant 68 : index
    %434 = vector.load %arg2[%c0_170, %c68] : memref<8x180xf32, #tpu.memory_space<vmem>>, vector<8x1xf32>
    %435 = vector.broadcast %434 : vector<8x1xf32> to vector<8x256xf32>
    %436 = arith.mulf %435, %433 : vector<8x256xf32>
    %437 = arith.addf %429, %436 : vector<8x256xf32>
    %c6_i32_171 = arith.constant 6 : i32
    %438 = tpu.dynamic_rotate %433 by %c6_i32_171 dim 0 : vector<8x256xf32>, i32 -> vector<8x256xf32>
    %c0_172 = arith.constant 0 : index
    %c69 = arith.constant 69 : index
    %439 = vector.load %arg2[%c0_172, %c69] : memref<8x180xf32, #tpu.memory_space<vmem>>, vector<8x1xf32>
    %440 = vector.broadcast %439 : vector<8x1xf32> to vector<8x256xf32>
    %441 = arith.mulf %440, %438 : vector<8x256xf32>
    %442 = arith.addf %437, %441 : vector<8x256xf32>
    %c4_i32_173 = arith.constant 4 : i32
    %443 = tpu.dynamic_rotate %433 by %c4_i32_173 dim 0 : vector<8x256xf32>, i32 -> vector<8x256xf32>
    %c0_174 = arith.constant 0 : index
    %c70 = arith.constant 70 : index
    %444 = vector.load %arg2[%c0_174, %c70] : memref<8x180xf32, #tpu.memory_space<vmem>>, vector<8x1xf32>
    %445 = vector.broadcast %444 : vector<8x1xf32> to vector<8x256xf32>
    %446 = arith.mulf %445, %443 : vector<8x256xf32>
    %447 = arith.addf %442, %446 : vector<8x256xf32>
    %c2_i32_175 = arith.constant 2 : i32
    %448 = tpu.dynamic_rotate %433 by %c2_i32_175 dim 0 : vector<8x256xf32>, i32 -> vector<8x256xf32>
    %c0_176 = arith.constant 0 : index
    %c71 = arith.constant 71 : index
    %449 = vector.load %arg2[%c0_176, %c71] : memref<8x180xf32, #tpu.memory_space<vmem>>, vector<8x1xf32>
    %450 = vector.broadcast %449 : vector<8x1xf32> to vector<8x256xf32>
    %451 = arith.mulf %450, %448 : vector<8x256xf32>
    %452 = arith.addf %447, %451 : vector<8x256xf32>
    %c0_177 = arith.constant 0 : index
    %c1_178 = arith.constant 1 : index
    %453 = vector.load %arg3[%c0_177, %c1_178] : memref<8x5xf32, #tpu.memory_space<vmem>>, vector<8x1xf32>
    %454 = vector.broadcast %453 : vector<8x1xf32> to vector<8x256xf32>
    %455 = arith.addf %452, %454 : vector<8x256xf32>
    %cst_179 = arith.constant 0.707106769 : f32
    %456 = vector.broadcast %cst_179 : f32 to vector<8x256xf32>
    %457 = arith.mulf %455, %456 : vector<8x256xf32>
    %458 = math.absf %457 : vector<8x256xf32>
    %cst_180 = arith.constant 0.327591091 : f32
    %459 = vector.broadcast %cst_180 : f32 to vector<8x256xf32>
    %460 = arith.mulf %459, %458 : vector<8x256xf32>
    %cst_181 = arith.constant 1.000000e+00 : f32
    %461 = vector.broadcast %cst_181 : f32 to vector<8x256xf32>
    %462 = arith.addf %461, %460 : vector<8x256xf32>
    %cst_182 = arith.constant 1.000000e+00 : f32
    %463 = vector.broadcast %cst_182 : f32 to vector<8x256xf32>
    %464 = arith.divf %463, %462 : vector<8x256xf32>
    %cst_183 = arith.constant 1.06140542 : f32
    %465 = vector.broadcast %cst_183 : f32 to vector<8x256xf32>
    %466 = arith.mulf %465, %464 : vector<8x256xf32>
    %cst_184 = arith.constant -1.45315206 : f32
    %467 = vector.broadcast %cst_184 : f32 to vector<8x256xf32>
    %468 = arith.addf %466, %467 : vector<8x256xf32>
    %469 = arith.mulf %468, %464 : vector<8x256xf32>
    %cst_185 = arith.constant 1.42141378 : f32
    %470 = vector.broadcast %cst_185 : f32 to vector<8x256xf32>
    %471 = arith.addf %469, %470 : vector<8x256xf32>
    %472 = arith.mulf %471, %464 : vector<8x256xf32>
    %cst_186 = arith.constant -0.284496725 : f32
    %473 = vector.broadcast %cst_186 : f32 to vector<8x256xf32>
    %474 = arith.addf %472, %473 : vector<8x256xf32>
    %475 = arith.mulf %474, %464 : vector<8x256xf32>
    %cst_187 = arith.constant 0.254829586 : f32
    %476 = vector.broadcast %cst_187 : f32 to vector<8x256xf32>
    %477 = arith.addf %475, %476 : vector<8x256xf32>
    %478 = arith.mulf %477, %464 : vector<8x256xf32>
    %479 = arith.mulf %458, %458 : vector<8x256xf32>
    %cst_188 = arith.constant 0.000000e+00 : f32
    %480 = vector.broadcast %cst_188 : f32 to vector<8x256xf32>
    %481 = arith.subf %480, %479 : vector<8x256xf32>
    %482 = math.exp %481 : vector<8x256xf32>
    %483 = arith.mulf %478, %482 : vector<8x256xf32>
    %cst_189 = arith.constant 1.000000e+00 : f32
    %484 = vector.broadcast %cst_189 : f32 to vector<8x256xf32>
    %485 = arith.subf %484, %483 : vector<8x256xf32>
    %cst_190 = arith.constant 0.000000e+00 : f32
    %486 = vector.broadcast %cst_190 : f32 to vector<8x256xf32>
    %487 = arith.cmpf olt, %457, %486 : vector<8x256xf32>
    %cst_191 = arith.constant 0.000000e+00 : f32
    %488 = vector.broadcast %cst_191 : f32 to vector<8x256xf32>
    %489 = arith.subf %488, %485 : vector<8x256xf32>
    %490 = arith.select %487, %489, %485 : vector<8x256xi1>, vector<8x256xf32>
    %cst_192 = arith.constant 5.000000e-01 : f32
    %491 = vector.broadcast %cst_192 : f32 to vector<8x256xf32>
    %492 = arith.mulf %491, %455 : vector<8x256xf32>
    %cst_193 = arith.constant 1.000000e+00 : f32
    %493 = vector.broadcast %cst_193 : f32 to vector<8x256xf32>
    %494 = arith.addf %493, %490 : vector<8x256xf32>
    %495 = arith.mulf %492, %494 : vector<8x256xf32>
    %cst_194 = arith.constant 0.000000e+00 : f32
    %496 = vector.broadcast %cst_194 : f32 to vector<8x256xf32>
    %c68_i32 = arith.constant 68 : i32
    %497 = tpu.dynamic_rotate %495 by %c68_i32 dim 1 : vector<8x256xf32>, i32 -> vector<8x256xf32>
    %c16_195 = arith.constant 16 : index
    %c0_196 = arith.constant 0 : index
    %498 = vector.load %arg4[%c16_195, %c0_196] : memref<24x256xf32, #tpu.memory_space<vmem>>, vector<1x256xf32>
    %499 = vector.broadcast %498 : vector<1x256xf32> to vector<8x256xf32>
    %500 = arith.mulf %497, %499 : vector<8x256xf32>
    %c0_197 = arith.constant 0 : index
    %c72 = arith.constant 72 : index
    %501 = vector.load %arg2[%c0_197, %c72] : memref<8x180xf32, #tpu.memory_space<vmem>>, vector<8x1xf32>
    %502 = vector.broadcast %501 : vector<8x1xf32> to vector<8x256xf32>
    %503 = arith.mulf %502, %500 : vector<8x256xf32>
    %504 = arith.addf %496, %503 : vector<8x256xf32>
    %c6_i32_198 = arith.constant 6 : i32
    %505 = tpu.dynamic_rotate %500 by %c6_i32_198 dim 0 : vector<8x256xf32>, i32 -> vector<8x256xf32>
    %c0_199 = arith.constant 0 : index
    %c73 = arith.constant 73 : index
    %506 = vector.load %arg2[%c0_199, %c73] : memref<8x180xf32, #tpu.memory_space<vmem>>, vector<8x1xf32>
    %507 = vector.broadcast %506 : vector<8x1xf32> to vector<8x256xf32>
    %508 = arith.mulf %507, %505 : vector<8x256xf32>
    %509 = arith.addf %504, %508 : vector<8x256xf32>
    %c4_i32_200 = arith.constant 4 : i32
    %510 = tpu.dynamic_rotate %500 by %c4_i32_200 dim 0 : vector<8x256xf32>, i32 -> vector<8x256xf32>
    %c0_201 = arith.constant 0 : index
    %c74 = arith.constant 74 : index
    %511 = vector.load %arg2[%c0_201, %c74] : memref<8x180xf32, #tpu.memory_space<vmem>>, vector<8x1xf32>
    %512 = vector.broadcast %511 : vector<8x1xf32> to vector<8x256xf32>
    %513 = arith.mulf %512, %510 : vector<8x256xf32>
    %514 = arith.addf %509, %513 : vector<8x256xf32>
    %c2_i32_202 = arith.constant 2 : i32
    %515 = tpu.dynamic_rotate %500 by %c2_i32_202 dim 0 : vector<8x256xf32>, i32 -> vector<8x256xf32>
    %c0_203 = arith.constant 0 : index
    %c75 = arith.constant 75 : index
    %516 = vector.load %arg2[%c0_203, %c75] : memref<8x180xf32, #tpu.memory_space<vmem>>, vector<8x1xf32>
    %517 = vector.broadcast %516 : vector<8x1xf32> to vector<8x256xf32>
    %518 = arith.mulf %517, %515 : vector<8x256xf32>
    %519 = arith.addf %514, %518 : vector<8x256xf32>
    %c64_i32 = arith.constant 64 : i32
    %520 = tpu.dynamic_rotate %495 by %c64_i32 dim 1 : vector<8x256xf32>, i32 -> vector<8x256xf32>
    %c17_204 = arith.constant 17 : index
    %c0_205 = arith.constant 0 : index
    %521 = vector.load %arg4[%c17_204, %c0_205] : memref<24x256xf32, #tpu.memory_space<vmem>>, vector<1x256xf32>
    %522 = vector.broadcast %521 : vector<1x256xf32> to vector<8x256xf32>
    %523 = arith.mulf %520, %522 : vector<8x256xf32>
    %c0_206 = arith.constant 0 : index
    %c76 = arith.constant 76 : index
    %524 = vector.load %arg2[%c0_206, %c76] : memref<8x180xf32, #tpu.memory_space<vmem>>, vector<8x1xf32>
    %525 = vector.broadcast %524 : vector<8x1xf32> to vector<8x256xf32>
    %526 = arith.mulf %525, %523 : vector<8x256xf32>
    %527 = arith.addf %519, %526 : vector<8x256xf32>
    %c6_i32_207 = arith.constant 6 : i32
    %528 = tpu.dynamic_rotate %523 by %c6_i32_207 dim 0 : vector<8x256xf32>, i32 -> vector<8x256xf32>
    %c0_208 = arith.constant 0 : index
    %c77 = arith.constant 77 : index
    %529 = vector.load %arg2[%c0_208, %c77] : memref<8x180xf32, #tpu.memory_space<vmem>>, vector<8x1xf32>
    %530 = vector.broadcast %529 : vector<8x1xf32> to vector<8x256xf32>
    %531 = arith.mulf %530, %528 : vector<8x256xf32>
    %532 = arith.addf %527, %531 : vector<8x256xf32>
    %c4_i32_209 = arith.constant 4 : i32
    %533 = tpu.dynamic_rotate %523 by %c4_i32_209 dim 0 : vector<8x256xf32>, i32 -> vector<8x256xf32>
    %c0_210 = arith.constant 0 : index
    %c78 = arith.constant 78 : index
    %534 = vector.load %arg2[%c0_210, %c78] : memref<8x180xf32, #tpu.memory_space<vmem>>, vector<8x1xf32>
    %535 = vector.broadcast %534 : vector<8x1xf32> to vector<8x256xf32>
    %536 = arith.mulf %535, %533 : vector<8x256xf32>
    %537 = arith.addf %532, %536 : vector<8x256xf32>
    %c2_i32_211 = arith.constant 2 : i32
    %538 = tpu.dynamic_rotate %523 by %c2_i32_211 dim 0 : vector<8x256xf32>, i32 -> vector<8x256xf32>
    %c0_212 = arith.constant 0 : index
    %c79 = arith.constant 79 : index
    %539 = vector.load %arg2[%c0_212, %c79] : memref<8x180xf32, #tpu.memory_space<vmem>>, vector<8x1xf32>
    %540 = vector.broadcast %539 : vector<8x1xf32> to vector<8x256xf32>
    %541 = arith.mulf %540, %538 : vector<8x256xf32>
    %542 = arith.addf %537, %541 : vector<8x256xf32>
    %c60_i32 = arith.constant 60 : i32
    %543 = tpu.dynamic_rotate %495 by %c60_i32 dim 1 : vector<8x256xf32>, i32 -> vector<8x256xf32>
    %c18_213 = arith.constant 18 : index
    %c0_214 = arith.constant 0 : index
    %544 = vector.load %arg4[%c18_213, %c0_214] : memref<24x256xf32, #tpu.memory_space<vmem>>, vector<1x256xf32>
    %545 = vector.broadcast %544 : vector<1x256xf32> to vector<8x256xf32>
    %546 = arith.mulf %543, %545 : vector<8x256xf32>
    %c0_215 = arith.constant 0 : index
    %c80 = arith.constant 80 : index
    %547 = vector.load %arg2[%c0_215, %c80] : memref<8x180xf32, #tpu.memory_space<vmem>>, vector<8x1xf32>
    %548 = vector.broadcast %547 : vector<8x1xf32> to vector<8x256xf32>
    %549 = arith.mulf %548, %546 : vector<8x256xf32>
    %550 = arith.addf %542, %549 : vector<8x256xf32>
    %c6_i32_216 = arith.constant 6 : i32
    %551 = tpu.dynamic_rotate %546 by %c6_i32_216 dim 0 : vector<8x256xf32>, i32 -> vector<8x256xf32>
    %c0_217 = arith.constant 0 : index
    %c81 = arith.constant 81 : index
    %552 = vector.load %arg2[%c0_217, %c81] : memref<8x180xf32, #tpu.memory_space<vmem>>, vector<8x1xf32>
    %553 = vector.broadcast %552 : vector<8x1xf32> to vector<8x256xf32>
    %554 = arith.mulf %553, %551 : vector<8x256xf32>
    %555 = arith.addf %550, %554 : vector<8x256xf32>
    %c4_i32_218 = arith.constant 4 : i32
    %556 = tpu.dynamic_rotate %546 by %c4_i32_218 dim 0 : vector<8x256xf32>, i32 -> vector<8x256xf32>
    %c0_219 = arith.constant 0 : index
    %c82 = arith.constant 82 : index
    %557 = vector.load %arg2[%c0_219, %c82] : memref<8x180xf32, #tpu.memory_space<vmem>>, vector<8x1xf32>
    %558 = vector.broadcast %557 : vector<8x1xf32> to vector<8x256xf32>
    %559 = arith.mulf %558, %556 : vector<8x256xf32>
    %560 = arith.addf %555, %559 : vector<8x256xf32>
    %c2_i32_220 = arith.constant 2 : i32
    %561 = tpu.dynamic_rotate %546 by %c2_i32_220 dim 0 : vector<8x256xf32>, i32 -> vector<8x256xf32>
    %c0_221 = arith.constant 0 : index
    %c83 = arith.constant 83 : index
    %562 = vector.load %arg2[%c0_221, %c83] : memref<8x180xf32, #tpu.memory_space<vmem>>, vector<8x1xf32>
    %563 = vector.broadcast %562 : vector<8x1xf32> to vector<8x256xf32>
    %564 = arith.mulf %563, %561 : vector<8x256xf32>
    %565 = arith.addf %560, %564 : vector<8x256xf32>
    %c4_i32_222 = arith.constant 4 : i32
    %566 = tpu.dynamic_rotate %495 by %c4_i32_222 dim 1 : vector<8x256xf32>, i32 -> vector<8x256xf32>
    %c19_223 = arith.constant 19 : index
    %c0_224 = arith.constant 0 : index
    %567 = vector.load %arg4[%c19_223, %c0_224] : memref<24x256xf32, #tpu.memory_space<vmem>>, vector<1x256xf32>
    %568 = vector.broadcast %567 : vector<1x256xf32> to vector<8x256xf32>
    %569 = arith.mulf %566, %568 : vector<8x256xf32>
    %c0_225 = arith.constant 0 : index
    %c84 = arith.constant 84 : index
    %570 = vector.load %arg2[%c0_225, %c84] : memref<8x180xf32, #tpu.memory_space<vmem>>, vector<8x1xf32>
    %571 = vector.broadcast %570 : vector<8x1xf32> to vector<8x256xf32>
    %572 = arith.mulf %571, %569 : vector<8x256xf32>
    %573 = arith.addf %565, %572 : vector<8x256xf32>
    %c6_i32_226 = arith.constant 6 : i32
    %574 = tpu.dynamic_rotate %569 by %c6_i32_226 dim 0 : vector<8x256xf32>, i32 -> vector<8x256xf32>
    %c0_227 = arith.constant 0 : index
    %c85 = arith.constant 85 : index
    %575 = vector.load %arg2[%c0_227, %c85] : memref<8x180xf32, #tpu.memory_space<vmem>>, vector<8x1xf32>
    %576 = vector.broadcast %575 : vector<8x1xf32> to vector<8x256xf32>
    %577 = arith.mulf %576, %574 : vector<8x256xf32>
    %578 = arith.addf %573, %577 : vector<8x256xf32>
    %c4_i32_228 = arith.constant 4 : i32
    %579 = tpu.dynamic_rotate %569 by %c4_i32_228 dim 0 : vector<8x256xf32>, i32 -> vector<8x256xf32>
    %c0_229 = arith.constant 0 : index
    %c86 = arith.constant 86 : index
    %580 = vector.load %arg2[%c0_229, %c86] : memref<8x180xf32, #tpu.memory_space<vmem>>, vector<8x1xf32>
    %581 = vector.broadcast %580 : vector<8x1xf32> to vector<8x256xf32>
    %582 = arith.mulf %581, %579 : vector<8x256xf32>
    %583 = arith.addf %578, %582 : vector<8x256xf32>
    %c2_i32_230 = arith.constant 2 : i32
    %584 = tpu.dynamic_rotate %569 by %c2_i32_230 dim 0 : vector<8x256xf32>, i32 -> vector<8x256xf32>
    %c0_231 = arith.constant 0 : index
    %c87 = arith.constant 87 : index
    %585 = vector.load %arg2[%c0_231, %c87] : memref<8x180xf32, #tpu.memory_space<vmem>>, vector<8x1xf32>
    %586 = vector.broadcast %585 : vector<8x1xf32> to vector<8x256xf32>
    %587 = arith.mulf %586, %584 : vector<8x256xf32>
    %588 = arith.addf %583, %587 : vector<8x256xf32>
    %c0_232 = arith.constant 0 : index
    %c88 = arith.constant 88 : index
    %589 = vector.load %arg2[%c0_232, %c88] : memref<8x180xf32, #tpu.memory_space<vmem>>, vector<8x1xf32>
    %590 = vector.broadcast %589 : vector<8x1xf32> to vector<8x256xf32>
    %591 = arith.mulf %590, %495 : vector<8x256xf32>
    %592 = arith.addf %588, %591 : vector<8x256xf32>
    %c6_i32_233 = arith.constant 6 : i32
    %593 = tpu.dynamic_rotate %495 by %c6_i32_233 dim 0 : vector<8x256xf32>, i32 -> vector<8x256xf32>
    %c0_234 = arith.constant 0 : index
    %c89 = arith.constant 89 : index
    %594 = vector.load %arg2[%c0_234, %c89] : memref<8x180xf32, #tpu.memory_space<vmem>>, vector<8x1xf32>
    %595 = vector.broadcast %594 : vector<8x1xf32> to vector<8x256xf32>
    %596 = arith.mulf %595, %593 : vector<8x256xf32>
    %597 = arith.addf %592, %596 : vector<8x256xf32>
    %c4_i32_235 = arith.constant 4 : i32
    %598 = tpu.dynamic_rotate %495 by %c4_i32_235 dim 0 : vector<8x256xf32>, i32 -> vector<8x256xf32>
    %c0_236 = arith.constant 0 : index
    %c90 = arith.constant 90 : index
    %599 = vector.load %arg2[%c0_236, %c90] : memref<8x180xf32, #tpu.memory_space<vmem>>, vector<8x1xf32>
    %600 = vector.broadcast %599 : vector<8x1xf32> to vector<8x256xf32>
    %601 = arith.mulf %600, %598 : vector<8x256xf32>
    %602 = arith.addf %597, %601 : vector<8x256xf32>
    %c2_i32_237 = arith.constant 2 : i32
    %603 = tpu.dynamic_rotate %495 by %c2_i32_237 dim 0 : vector<8x256xf32>, i32 -> vector<8x256xf32>
    %c0_238 = arith.constant 0 : index
    %c91 = arith.constant 91 : index
    %604 = vector.load %arg2[%c0_238, %c91] : memref<8x180xf32, #tpu.memory_space<vmem>>, vector<8x1xf32>
    %605 = vector.broadcast %604 : vector<8x1xf32> to vector<8x256xf32>
    %606 = arith.mulf %605, %603 : vector<8x256xf32>
    %607 = arith.addf %602, %606 : vector<8x256xf32>
    %c252_i32 = arith.constant 252 : i32
    %608 = tpu.dynamic_rotate %495 by %c252_i32 dim 1 : vector<8x256xf32>, i32 -> vector<8x256xf32>
    %c20_239 = arith.constant 20 : index
    %c0_240 = arith.constant 0 : index
    %609 = vector.load %arg4[%c20_239, %c0_240] : memref<24x256xf32, #tpu.memory_space<vmem>>, vector<1x256xf32>
    %610 = vector.broadcast %609 : vector<1x256xf32> to vector<8x256xf32>
    %611 = arith.mulf %608, %610 : vector<8x256xf32>
    %c0_241 = arith.constant 0 : index
    %c92 = arith.constant 92 : index
    %612 = vector.load %arg2[%c0_241, %c92] : memref<8x180xf32, #tpu.memory_space<vmem>>, vector<8x1xf32>
    %613 = vector.broadcast %612 : vector<8x1xf32> to vector<8x256xf32>
    %614 = arith.mulf %613, %611 : vector<8x256xf32>
    %615 = arith.addf %607, %614 : vector<8x256xf32>
    %c6_i32_242 = arith.constant 6 : i32
    %616 = tpu.dynamic_rotate %611 by %c6_i32_242 dim 0 : vector<8x256xf32>, i32 -> vector<8x256xf32>
    %c0_243 = arith.constant 0 : index
    %c93 = arith.constant 93 : index
    %617 = vector.load %arg2[%c0_243, %c93] : memref<8x180xf32, #tpu.memory_space<vmem>>, vector<8x1xf32>
    %618 = vector.broadcast %617 : vector<8x1xf32> to vector<8x256xf32>
    %619 = arith.mulf %618, %616 : vector<8x256xf32>
    %620 = arith.addf %615, %619 : vector<8x256xf32>
    %c4_i32_244 = arith.constant 4 : i32
    %621 = tpu.dynamic_rotate %611 by %c4_i32_244 dim 0 : vector<8x256xf32>, i32 -> vector<8x256xf32>
    %c0_245 = arith.constant 0 : index
    %c94 = arith.constant 94 : index
    %622 = vector.load %arg2[%c0_245, %c94] : memref<8x180xf32, #tpu.memory_space<vmem>>, vector<8x1xf32>
    %623 = vector.broadcast %622 : vector<8x1xf32> to vector<8x256xf32>
    %624 = arith.mulf %623, %621 : vector<8x256xf32>
    %625 = arith.addf %620, %624 : vector<8x256xf32>
    %c2_i32_246 = arith.constant 2 : i32
    %626 = tpu.dynamic_rotate %611 by %c2_i32_246 dim 0 : vector<8x256xf32>, i32 -> vector<8x256xf32>
    %c0_247 = arith.constant 0 : index
    %c95 = arith.constant 95 : index
    %627 = vector.load %arg2[%c0_247, %c95] : memref<8x180xf32, #tpu.memory_space<vmem>>, vector<8x1xf32>
    %628 = vector.broadcast %627 : vector<8x1xf32> to vector<8x256xf32>
    %629 = arith.mulf %628, %626 : vector<8x256xf32>
    %630 = arith.addf %625, %629 : vector<8x256xf32>
    %c196_i32 = arith.constant 196 : i32
    %631 = tpu.dynamic_rotate %495 by %c196_i32 dim 1 : vector<8x256xf32>, i32 -> vector<8x256xf32>
    %c21_248 = arith.constant 21 : index
    %c0_249 = arith.constant 0 : index
    %632 = vector.load %arg4[%c21_248, %c0_249] : memref<24x256xf32, #tpu.memory_space<vmem>>, vector<1x256xf32>
    %633 = vector.broadcast %632 : vector<1x256xf32> to vector<8x256xf32>
    %634 = arith.mulf %631, %633 : vector<8x256xf32>
    %c0_250 = arith.constant 0 : index
    %c96 = arith.constant 96 : index
    %635 = vector.load %arg2[%c0_250, %c96] : memref<8x180xf32, #tpu.memory_space<vmem>>, vector<8x1xf32>
    %636 = vector.broadcast %635 : vector<8x1xf32> to vector<8x256xf32>
    %637 = arith.mulf %636, %634 : vector<8x256xf32>
    %638 = arith.addf %630, %637 : vector<8x256xf32>
    %c6_i32_251 = arith.constant 6 : i32
    %639 = tpu.dynamic_rotate %634 by %c6_i32_251 dim 0 : vector<8x256xf32>, i32 -> vector<8x256xf32>
    %c0_252 = arith.constant 0 : index
    %c97 = arith.constant 97 : index
    %640 = vector.load %arg2[%c0_252, %c97] : memref<8x180xf32, #tpu.memory_space<vmem>>, vector<8x1xf32>
    %641 = vector.broadcast %640 : vector<8x1xf32> to vector<8x256xf32>
    %642 = arith.mulf %641, %639 : vector<8x256xf32>
    %643 = arith.addf %638, %642 : vector<8x256xf32>
    %c4_i32_253 = arith.constant 4 : i32
    %644 = tpu.dynamic_rotate %634 by %c4_i32_253 dim 0 : vector<8x256xf32>, i32 -> vector<8x256xf32>
    %c0_254 = arith.constant 0 : index
    %c98 = arith.constant 98 : index
    %645 = vector.load %arg2[%c0_254, %c98] : memref<8x180xf32, #tpu.memory_space<vmem>>, vector<8x1xf32>
    %646 = vector.broadcast %645 : vector<8x1xf32> to vector<8x256xf32>
    %647 = arith.mulf %646, %644 : vector<8x256xf32>
    %648 = arith.addf %643, %647 : vector<8x256xf32>
    %c2_i32_255 = arith.constant 2 : i32
    %649 = tpu.dynamic_rotate %634 by %c2_i32_255 dim 0 : vector<8x256xf32>, i32 -> vector<8x256xf32>
    %c0_256 = arith.constant 0 : index
    %c99 = arith.constant 99 : index
    %650 = vector.load %arg2[%c0_256, %c99] : memref<8x180xf32, #tpu.memory_space<vmem>>, vector<8x1xf32>
    %651 = vector.broadcast %650 : vector<8x1xf32> to vector<8x256xf32>
    %652 = arith.mulf %651, %649 : vector<8x256xf32>
    %653 = arith.addf %648, %652 : vector<8x256xf32>
    %c192_i32 = arith.constant 192 : i32
    %654 = tpu.dynamic_rotate %495 by %c192_i32 dim 1 : vector<8x256xf32>, i32 -> vector<8x256xf32>
    %c22_257 = arith.constant 22 : index
    %c0_258 = arith.constant 0 : index
    %655 = vector.load %arg4[%c22_257, %c0_258] : memref<24x256xf32, #tpu.memory_space<vmem>>, vector<1x256xf32>
    %656 = vector.broadcast %655 : vector<1x256xf32> to vector<8x256xf32>
    %657 = arith.mulf %654, %656 : vector<8x256xf32>
    %c0_259 = arith.constant 0 : index
    %c100 = arith.constant 100 : index
    %658 = vector.load %arg2[%c0_259, %c100] : memref<8x180xf32, #tpu.memory_space<vmem>>, vector<8x1xf32>
    %659 = vector.broadcast %658 : vector<8x1xf32> to vector<8x256xf32>
    %660 = arith.mulf %659, %657 : vector<8x256xf32>
    %661 = arith.addf %653, %660 : vector<8x256xf32>
    %c6_i32_260 = arith.constant 6 : i32
    %662 = tpu.dynamic_rotate %657 by %c6_i32_260 dim 0 : vector<8x256xf32>, i32 -> vector<8x256xf32>
    %c0_261 = arith.constant 0 : index
    %c101 = arith.constant 101 : index
    %663 = vector.load %arg2[%c0_261, %c101] : memref<8x180xf32, #tpu.memory_space<vmem>>, vector<8x1xf32>
    %664 = vector.broadcast %663 : vector<8x1xf32> to vector<8x256xf32>
    %665 = arith.mulf %664, %662 : vector<8x256xf32>
    %666 = arith.addf %661, %665 : vector<8x256xf32>
    %c4_i32_262 = arith.constant 4 : i32
    %667 = tpu.dynamic_rotate %657 by %c4_i32_262 dim 0 : vector<8x256xf32>, i32 -> vector<8x256xf32>
    %c0_263 = arith.constant 0 : index
    %c102 = arith.constant 102 : index
    %668 = vector.load %arg2[%c0_263, %c102] : memref<8x180xf32, #tpu.memory_space<vmem>>, vector<8x1xf32>
    %669 = vector.broadcast %668 : vector<8x1xf32> to vector<8x256xf32>
    %670 = arith.mulf %669, %667 : vector<8x256xf32>
    %671 = arith.addf %666, %670 : vector<8x256xf32>
    %c2_i32_264 = arith.constant 2 : i32
    %672 = tpu.dynamic_rotate %657 by %c2_i32_264 dim 0 : vector<8x256xf32>, i32 -> vector<8x256xf32>
    %c0_265 = arith.constant 0 : index
    %c103 = arith.constant 103 : index
    %673 = vector.load %arg2[%c0_265, %c103] : memref<8x180xf32, #tpu.memory_space<vmem>>, vector<8x1xf32>
    %674 = vector.broadcast %673 : vector<8x1xf32> to vector<8x256xf32>
    %675 = arith.mulf %674, %672 : vector<8x256xf32>
    %676 = arith.addf %671, %675 : vector<8x256xf32>
    %c188_i32 = arith.constant 188 : i32
    %677 = tpu.dynamic_rotate %495 by %c188_i32 dim 1 : vector<8x256xf32>, i32 -> vector<8x256xf32>
    %c23_266 = arith.constant 23 : index
    %c0_267 = arith.constant 0 : index
    %678 = vector.load %arg4[%c23_266, %c0_267] : memref<24x256xf32, #tpu.memory_space<vmem>>, vector<1x256xf32>
    %679 = vector.broadcast %678 : vector<1x256xf32> to vector<8x256xf32>
    %680 = arith.mulf %677, %679 : vector<8x256xf32>
    %c0_268 = arith.constant 0 : index
    %c104 = arith.constant 104 : index
    %681 = vector.load %arg2[%c0_268, %c104] : memref<8x180xf32, #tpu.memory_space<vmem>>, vector<8x1xf32>
    %682 = vector.broadcast %681 : vector<8x1xf32> to vector<8x256xf32>
    %683 = arith.mulf %682, %680 : vector<8x256xf32>
    %684 = arith.addf %676, %683 : vector<8x256xf32>
    %c6_i32_269 = arith.constant 6 : i32
    %685 = tpu.dynamic_rotate %680 by %c6_i32_269 dim 0 : vector<8x256xf32>, i32 -> vector<8x256xf32>
    %c0_270 = arith.constant 0 : index
    %c105 = arith.constant 105 : index
    %686 = vector.load %arg2[%c0_270, %c105] : memref<8x180xf32, #tpu.memory_space<vmem>>, vector<8x1xf32>
    %687 = vector.broadcast %686 : vector<8x1xf32> to vector<8x256xf32>
    %688 = arith.mulf %687, %685 : vector<8x256xf32>
    %689 = arith.addf %684, %688 : vector<8x256xf32>
    %c4_i32_271 = arith.constant 4 : i32
    %690 = tpu.dynamic_rotate %680 by %c4_i32_271 dim 0 : vector<8x256xf32>, i32 -> vector<8x256xf32>
    %c0_272 = arith.constant 0 : index
    %c106 = arith.constant 106 : index
    %691 = vector.load %arg2[%c0_272, %c106] : memref<8x180xf32, #tpu.memory_space<vmem>>, vector<8x1xf32>
    %692 = vector.broadcast %691 : vector<8x1xf32> to vector<8x256xf32>
    %693 = arith.mulf %692, %690 : vector<8x256xf32>
    %694 = arith.addf %689, %693 : vector<8x256xf32>
    %c2_i32_273 = arith.constant 2 : i32
    %695 = tpu.dynamic_rotate %680 by %c2_i32_273 dim 0 : vector<8x256xf32>, i32 -> vector<8x256xf32>
    %c0_274 = arith.constant 0 : index
    %c107 = arith.constant 107 : index
    %696 = vector.load %arg2[%c0_274, %c107] : memref<8x180xf32, #tpu.memory_space<vmem>>, vector<8x1xf32>
    %697 = vector.broadcast %696 : vector<8x1xf32> to vector<8x256xf32>
    %698 = arith.mulf %697, %695 : vector<8x256xf32>
    %699 = arith.addf %694, %698 : vector<8x256xf32>
    %c0_275 = arith.constant 0 : index
    %c2_276 = arith.constant 2 : index
    %700 = vector.load %arg3[%c0_275, %c2_276] : memref<8x5xf32, #tpu.memory_space<vmem>>, vector<8x1xf32>
    %701 = vector.broadcast %700 : vector<8x1xf32> to vector<8x256xf32>
    %702 = arith.addf %699, %701 : vector<8x256xf32>
    %cst_277 = arith.constant 0.707106769 : f32
    %703 = vector.broadcast %cst_277 : f32 to vector<8x256xf32>
    %704 = arith.mulf %702, %703 : vector<8x256xf32>
    %705 = math.absf %704 : vector<8x256xf32>
    %cst_278 = arith.constant 0.327591091 : f32
    %706 = vector.broadcast %cst_278 : f32 to vector<8x256xf32>
    %707 = arith.mulf %706, %705 : vector<8x256xf32>
    %cst_279 = arith.constant 1.000000e+00 : f32
    %708 = vector.broadcast %cst_279 : f32 to vector<8x256xf32>
    %709 = arith.addf %708, %707 : vector<8x256xf32>
    %cst_280 = arith.constant 1.000000e+00 : f32
    %710 = vector.broadcast %cst_280 : f32 to vector<8x256xf32>
    %711 = arith.divf %710, %709 : vector<8x256xf32>
    %cst_281 = arith.constant 1.06140542 : f32
    %712 = vector.broadcast %cst_281 : f32 to vector<8x256xf32>
    %713 = arith.mulf %712, %711 : vector<8x256xf32>
    %cst_282 = arith.constant -1.45315206 : f32
    %714 = vector.broadcast %cst_282 : f32 to vector<8x256xf32>
    %715 = arith.addf %713, %714 : vector<8x256xf32>
    %716 = arith.mulf %715, %711 : vector<8x256xf32>
    %cst_283 = arith.constant 1.42141378 : f32
    %717 = vector.broadcast %cst_283 : f32 to vector<8x256xf32>
    %718 = arith.addf %716, %717 : vector<8x256xf32>
    %719 = arith.mulf %718, %711 : vector<8x256xf32>
    %cst_284 = arith.constant -0.284496725 : f32
    %720 = vector.broadcast %cst_284 : f32 to vector<8x256xf32>
    %721 = arith.addf %719, %720 : vector<8x256xf32>
    %722 = arith.mulf %721, %711 : vector<8x256xf32>
    %cst_285 = arith.constant 0.254829586 : f32
    %723 = vector.broadcast %cst_285 : f32 to vector<8x256xf32>
    %724 = arith.addf %722, %723 : vector<8x256xf32>
    %725 = arith.mulf %724, %711 : vector<8x256xf32>
    %726 = arith.mulf %705, %705 : vector<8x256xf32>
    %cst_286 = arith.constant 0.000000e+00 : f32
    %727 = vector.broadcast %cst_286 : f32 to vector<8x256xf32>
    %728 = arith.subf %727, %726 : vector<8x256xf32>
    %729 = math.exp %728 : vector<8x256xf32>
    %730 = arith.mulf %725, %729 : vector<8x256xf32>
    %cst_287 = arith.constant 1.000000e+00 : f32
    %731 = vector.broadcast %cst_287 : f32 to vector<8x256xf32>
    %732 = arith.subf %731, %730 : vector<8x256xf32>
    %cst_288 = arith.constant 0.000000e+00 : f32
    %733 = vector.broadcast %cst_288 : f32 to vector<8x256xf32>
    %734 = arith.cmpf olt, %704, %733 : vector<8x256xf32>
    %cst_289 = arith.constant 0.000000e+00 : f32
    %735 = vector.broadcast %cst_289 : f32 to vector<8x256xf32>
    %736 = arith.subf %735, %732 : vector<8x256xf32>
    %737 = arith.select %734, %736, %732 : vector<8x256xi1>, vector<8x256xf32>
    %cst_290 = arith.constant 5.000000e-01 : f32
    %738 = vector.broadcast %cst_290 : f32 to vector<8x256xf32>
    %739 = arith.mulf %738, %702 : vector<8x256xf32>
    %cst_291 = arith.constant 1.000000e+00 : f32
    %740 = vector.broadcast %cst_291 : f32 to vector<8x256xf32>
    %741 = arith.addf %740, %737 : vector<8x256xf32>
    %742 = arith.mulf %739, %741 : vector<8x256xf32>
    %cst_292 = arith.constant 0.000000e+00 : f32
    %743 = vector.broadcast %cst_292 : f32 to vector<8x256xf32>
    %c34_i32_293 = arith.constant 34 : i32
    %744 = tpu.dynamic_rotate %742 by %c34_i32_293 dim 1 : vector<8x256xf32>, i32 -> vector<8x256xf32>
    %c8_294 = arith.constant 8 : index
    %c0_295 = arith.constant 0 : index
    %745 = vector.load %arg4[%c8_294, %c0_295] : memref<24x256xf32, #tpu.memory_space<vmem>>, vector<1x256xf32>
    %746 = vector.broadcast %745 : vector<1x256xf32> to vector<8x256xf32>
    %747 = arith.mulf %744, %746 : vector<8x256xf32>
    %c0_296 = arith.constant 0 : index
    %c108 = arith.constant 108 : index
    %748 = vector.load %arg2[%c0_296, %c108] : memref<8x180xf32, #tpu.memory_space<vmem>>, vector<8x1xf32>
    %749 = vector.broadcast %748 : vector<8x1xf32> to vector<8x256xf32>
    %750 = arith.mulf %749, %747 : vector<8x256xf32>
    %751 = arith.addf %743, %750 : vector<8x256xf32>
    %c6_i32_297 = arith.constant 6 : i32
    %752 = tpu.dynamic_rotate %747 by %c6_i32_297 dim 0 : vector<8x256xf32>, i32 -> vector<8x256xf32>
    %c0_298 = arith.constant 0 : index
    %c109 = arith.constant 109 : index
    %753 = vector.load %arg2[%c0_298, %c109] : memref<8x180xf32, #tpu.memory_space<vmem>>, vector<8x1xf32>
    %754 = vector.broadcast %753 : vector<8x1xf32> to vector<8x256xf32>
    %755 = arith.mulf %754, %752 : vector<8x256xf32>
    %756 = arith.addf %751, %755 : vector<8x256xf32>
    %c4_i32_299 = arith.constant 4 : i32
    %757 = tpu.dynamic_rotate %747 by %c4_i32_299 dim 0 : vector<8x256xf32>, i32 -> vector<8x256xf32>
    %c0_300 = arith.constant 0 : index
    %c110 = arith.constant 110 : index
    %758 = vector.load %arg2[%c0_300, %c110] : memref<8x180xf32, #tpu.memory_space<vmem>>, vector<8x1xf32>
    %759 = vector.broadcast %758 : vector<8x1xf32> to vector<8x256xf32>
    %760 = arith.mulf %759, %757 : vector<8x256xf32>
    %761 = arith.addf %756, %760 : vector<8x256xf32>
    %c2_i32_301 = arith.constant 2 : i32
    %762 = tpu.dynamic_rotate %747 by %c2_i32_301 dim 0 : vector<8x256xf32>, i32 -> vector<8x256xf32>
    %c0_302 = arith.constant 0 : index
    %c111 = arith.constant 111 : index
    %763 = vector.load %arg2[%c0_302, %c111] : memref<8x180xf32, #tpu.memory_space<vmem>>, vector<8x1xf32>
    %764 = vector.broadcast %763 : vector<8x1xf32> to vector<8x256xf32>
    %765 = arith.mulf %764, %762 : vector<8x256xf32>
    %766 = arith.addf %761, %765 : vector<8x256xf32>
    %c32_i32_303 = arith.constant 32 : i32
    %767 = tpu.dynamic_rotate %742 by %c32_i32_303 dim 1 : vector<8x256xf32>, i32 -> vector<8x256xf32>
    %c9_304 = arith.constant 9 : index
    %c0_305 = arith.constant 0 : index
    %768 = vector.load %arg4[%c9_304, %c0_305] : memref<24x256xf32, #tpu.memory_space<vmem>>, vector<1x256xf32>
    %769 = vector.broadcast %768 : vector<1x256xf32> to vector<8x256xf32>
    %770 = arith.mulf %767, %769 : vector<8x256xf32>
    %c0_306 = arith.constant 0 : index
    %c112 = arith.constant 112 : index
    %771 = vector.load %arg2[%c0_306, %c112] : memref<8x180xf32, #tpu.memory_space<vmem>>, vector<8x1xf32>
    %772 = vector.broadcast %771 : vector<8x1xf32> to vector<8x256xf32>
    %773 = arith.mulf %772, %770 : vector<8x256xf32>
    %774 = arith.addf %766, %773 : vector<8x256xf32>
    %c6_i32_307 = arith.constant 6 : i32
    %775 = tpu.dynamic_rotate %770 by %c6_i32_307 dim 0 : vector<8x256xf32>, i32 -> vector<8x256xf32>
    %c0_308 = arith.constant 0 : index
    %c113 = arith.constant 113 : index
    %776 = vector.load %arg2[%c0_308, %c113] : memref<8x180xf32, #tpu.memory_space<vmem>>, vector<8x1xf32>
    %777 = vector.broadcast %776 : vector<8x1xf32> to vector<8x256xf32>
    %778 = arith.mulf %777, %775 : vector<8x256xf32>
    %779 = arith.addf %774, %778 : vector<8x256xf32>
    %c4_i32_309 = arith.constant 4 : i32
    %780 = tpu.dynamic_rotate %770 by %c4_i32_309 dim 0 : vector<8x256xf32>, i32 -> vector<8x256xf32>
    %c0_310 = arith.constant 0 : index
    %c114 = arith.constant 114 : index
    %781 = vector.load %arg2[%c0_310, %c114] : memref<8x180xf32, #tpu.memory_space<vmem>>, vector<8x1xf32>
    %782 = vector.broadcast %781 : vector<8x1xf32> to vector<8x256xf32>
    %783 = arith.mulf %782, %780 : vector<8x256xf32>
    %784 = arith.addf %779, %783 : vector<8x256xf32>
    %c2_i32_311 = arith.constant 2 : i32
    %785 = tpu.dynamic_rotate %770 by %c2_i32_311 dim 0 : vector<8x256xf32>, i32 -> vector<8x256xf32>
    %c0_312 = arith.constant 0 : index
    %c115 = arith.constant 115 : index
    %786 = vector.load %arg2[%c0_312, %c115] : memref<8x180xf32, #tpu.memory_space<vmem>>, vector<8x1xf32>
    %787 = vector.broadcast %786 : vector<8x1xf32> to vector<8x256xf32>
    %788 = arith.mulf %787, %785 : vector<8x256xf32>
    %789 = arith.addf %784, %788 : vector<8x256xf32>
    %c30_i32_313 = arith.constant 30 : i32
    %790 = tpu.dynamic_rotate %742 by %c30_i32_313 dim 1 : vector<8x256xf32>, i32 -> vector<8x256xf32>
    %c10_314 = arith.constant 10 : index
    %c0_315 = arith.constant 0 : index
    %791 = vector.load %arg4[%c10_314, %c0_315] : memref<24x256xf32, #tpu.memory_space<vmem>>, vector<1x256xf32>
    %792 = vector.broadcast %791 : vector<1x256xf32> to vector<8x256xf32>
    %793 = arith.mulf %790, %792 : vector<8x256xf32>
    %c0_316 = arith.constant 0 : index
    %c116 = arith.constant 116 : index
    %794 = vector.load %arg2[%c0_316, %c116] : memref<8x180xf32, #tpu.memory_space<vmem>>, vector<8x1xf32>
    %795 = vector.broadcast %794 : vector<8x1xf32> to vector<8x256xf32>
    %796 = arith.mulf %795, %793 : vector<8x256xf32>
    %797 = arith.addf %789, %796 : vector<8x256xf32>
    %c6_i32_317 = arith.constant 6 : i32
    %798 = tpu.dynamic_rotate %793 by %c6_i32_317 dim 0 : vector<8x256xf32>, i32 -> vector<8x256xf32>
    %c0_318 = arith.constant 0 : index
    %c117 = arith.constant 117 : index
    %799 = vector.load %arg2[%c0_318, %c117] : memref<8x180xf32, #tpu.memory_space<vmem>>, vector<8x1xf32>
    %800 = vector.broadcast %799 : vector<8x1xf32> to vector<8x256xf32>
    %801 = arith.mulf %800, %798 : vector<8x256xf32>
    %802 = arith.addf %797, %801 : vector<8x256xf32>
    %c4_i32_319 = arith.constant 4 : i32
    %803 = tpu.dynamic_rotate %793 by %c4_i32_319 dim 0 : vector<8x256xf32>, i32 -> vector<8x256xf32>
    %c0_320 = arith.constant 0 : index
    %c118 = arith.constant 118 : index
    %804 = vector.load %arg2[%c0_320, %c118] : memref<8x180xf32, #tpu.memory_space<vmem>>, vector<8x1xf32>
    %805 = vector.broadcast %804 : vector<8x1xf32> to vector<8x256xf32>
    %806 = arith.mulf %805, %803 : vector<8x256xf32>
    %807 = arith.addf %802, %806 : vector<8x256xf32>
    %c2_i32_321 = arith.constant 2 : i32
    %808 = tpu.dynamic_rotate %793 by %c2_i32_321 dim 0 : vector<8x256xf32>, i32 -> vector<8x256xf32>
    %c0_322 = arith.constant 0 : index
    %c119 = arith.constant 119 : index
    %809 = vector.load %arg2[%c0_322, %c119] : memref<8x180xf32, #tpu.memory_space<vmem>>, vector<8x1xf32>
    %810 = vector.broadcast %809 : vector<8x1xf32> to vector<8x256xf32>
    %811 = arith.mulf %810, %808 : vector<8x256xf32>
    %812 = arith.addf %807, %811 : vector<8x256xf32>
    %c2_i32_323 = arith.constant 2 : i32
    %813 = tpu.dynamic_rotate %742 by %c2_i32_323 dim 1 : vector<8x256xf32>, i32 -> vector<8x256xf32>
    %c11_324 = arith.constant 11 : index
    %c0_325 = arith.constant 0 : index
    %814 = vector.load %arg4[%c11_324, %c0_325] : memref<24x256xf32, #tpu.memory_space<vmem>>, vector<1x256xf32>
    %815 = vector.broadcast %814 : vector<1x256xf32> to vector<8x256xf32>
    %816 = arith.mulf %813, %815 : vector<8x256xf32>
    %c0_326 = arith.constant 0 : index
    %c120 = arith.constant 120 : index
    %817 = vector.load %arg2[%c0_326, %c120] : memref<8x180xf32, #tpu.memory_space<vmem>>, vector<8x1xf32>
    %818 = vector.broadcast %817 : vector<8x1xf32> to vector<8x256xf32>
    %819 = arith.mulf %818, %816 : vector<8x256xf32>
    %820 = arith.addf %812, %819 : vector<8x256xf32>
    %c6_i32_327 = arith.constant 6 : i32
    %821 = tpu.dynamic_rotate %816 by %c6_i32_327 dim 0 : vector<8x256xf32>, i32 -> vector<8x256xf32>
    %c0_328 = arith.constant 0 : index
    %c121 = arith.constant 121 : index
    %822 = vector.load %arg2[%c0_328, %c121] : memref<8x180xf32, #tpu.memory_space<vmem>>, vector<8x1xf32>
    %823 = vector.broadcast %822 : vector<8x1xf32> to vector<8x256xf32>
    %824 = arith.mulf %823, %821 : vector<8x256xf32>
    %825 = arith.addf %820, %824 : vector<8x256xf32>
    %c4_i32_329 = arith.constant 4 : i32
    %826 = tpu.dynamic_rotate %816 by %c4_i32_329 dim 0 : vector<8x256xf32>, i32 -> vector<8x256xf32>
    %c0_330 = arith.constant 0 : index
    %c122 = arith.constant 122 : index
    %827 = vector.load %arg2[%c0_330, %c122] : memref<8x180xf32, #tpu.memory_space<vmem>>, vector<8x1xf32>
    %828 = vector.broadcast %827 : vector<8x1xf32> to vector<8x256xf32>
    %829 = arith.mulf %828, %826 : vector<8x256xf32>
    %830 = arith.addf %825, %829 : vector<8x256xf32>
    %c2_i32_331 = arith.constant 2 : i32
    %831 = tpu.dynamic_rotate %816 by %c2_i32_331 dim 0 : vector<8x256xf32>, i32 -> vector<8x256xf32>
    %c0_332 = arith.constant 0 : index
    %c123 = arith.constant 123 : index
    %832 = vector.load %arg2[%c0_332, %c123] : memref<8x180xf32, #tpu.memory_space<vmem>>, vector<8x1xf32>
    %833 = vector.broadcast %832 : vector<8x1xf32> to vector<8x256xf32>
    %834 = arith.mulf %833, %831 : vector<8x256xf32>
    %835 = arith.addf %830, %834 : vector<8x256xf32>
    %c0_333 = arith.constant 0 : index
    %c124 = arith.constant 124 : index
    %836 = vector.load %arg2[%c0_333, %c124] : memref<8x180xf32, #tpu.memory_space<vmem>>, vector<8x1xf32>
    %837 = vector.broadcast %836 : vector<8x1xf32> to vector<8x256xf32>
    %838 = arith.mulf %837, %742 : vector<8x256xf32>
    %839 = arith.addf %835, %838 : vector<8x256xf32>
    %c6_i32_334 = arith.constant 6 : i32
    %840 = tpu.dynamic_rotate %742 by %c6_i32_334 dim 0 : vector<8x256xf32>, i32 -> vector<8x256xf32>
    %c0_335 = arith.constant 0 : index
    %c125 = arith.constant 125 : index
    %841 = vector.load %arg2[%c0_335, %c125] : memref<8x180xf32, #tpu.memory_space<vmem>>, vector<8x1xf32>
    %842 = vector.broadcast %841 : vector<8x1xf32> to vector<8x256xf32>
    %843 = arith.mulf %842, %840 : vector<8x256xf32>
    %844 = arith.addf %839, %843 : vector<8x256xf32>
    %c4_i32_336 = arith.constant 4 : i32
    %845 = tpu.dynamic_rotate %742 by %c4_i32_336 dim 0 : vector<8x256xf32>, i32 -> vector<8x256xf32>
    %c0_337 = arith.constant 0 : index
    %c126 = arith.constant 126 : index
    %846 = vector.load %arg2[%c0_337, %c126] : memref<8x180xf32, #tpu.memory_space<vmem>>, vector<8x1xf32>
    %847 = vector.broadcast %846 : vector<8x1xf32> to vector<8x256xf32>
    %848 = arith.mulf %847, %845 : vector<8x256xf32>
    %849 = arith.addf %844, %848 : vector<8x256xf32>
    %c2_i32_338 = arith.constant 2 : i32
    %850 = tpu.dynamic_rotate %742 by %c2_i32_338 dim 0 : vector<8x256xf32>, i32 -> vector<8x256xf32>
    %c0_339 = arith.constant 0 : index
    %c127 = arith.constant 127 : index
    %851 = vector.load %arg2[%c0_339, %c127] : memref<8x180xf32, #tpu.memory_space<vmem>>, vector<8x1xf32>
    %852 = vector.broadcast %851 : vector<8x1xf32> to vector<8x256xf32>
    %853 = arith.mulf %852, %850 : vector<8x256xf32>
    %854 = arith.addf %849, %853 : vector<8x256xf32>
    %c254_i32_340 = arith.constant 254 : i32
    %855 = tpu.dynamic_rotate %742 by %c254_i32_340 dim 1 : vector<8x256xf32>, i32 -> vector<8x256xf32>
    %c12_341 = arith.constant 12 : index
    %c0_342 = arith.constant 0 : index
    %856 = vector.load %arg4[%c12_341, %c0_342] : memref<24x256xf32, #tpu.memory_space<vmem>>, vector<1x256xf32>
    %857 = vector.broadcast %856 : vector<1x256xf32> to vector<8x256xf32>
    %858 = arith.mulf %855, %857 : vector<8x256xf32>
    %c0_343 = arith.constant 0 : index
    %c128 = arith.constant 128 : index
    %859 = vector.load %arg2[%c0_343, %c128] : memref<8x180xf32, #tpu.memory_space<vmem>>, vector<8x1xf32>
    %860 = vector.broadcast %859 : vector<8x1xf32> to vector<8x256xf32>
    %861 = arith.mulf %860, %858 : vector<8x256xf32>
    %862 = arith.addf %854, %861 : vector<8x256xf32>
    %c6_i32_344 = arith.constant 6 : i32
    %863 = tpu.dynamic_rotate %858 by %c6_i32_344 dim 0 : vector<8x256xf32>, i32 -> vector<8x256xf32>
    %c0_345 = arith.constant 0 : index
    %c129 = arith.constant 129 : index
    %864 = vector.load %arg2[%c0_345, %c129] : memref<8x180xf32, #tpu.memory_space<vmem>>, vector<8x1xf32>
    %865 = vector.broadcast %864 : vector<8x1xf32> to vector<8x256xf32>
    %866 = arith.mulf %865, %863 : vector<8x256xf32>
    %867 = arith.addf %862, %866 : vector<8x256xf32>
    %c4_i32_346 = arith.constant 4 : i32
    %868 = tpu.dynamic_rotate %858 by %c4_i32_346 dim 0 : vector<8x256xf32>, i32 -> vector<8x256xf32>
    %c0_347 = arith.constant 0 : index
    %c130 = arith.constant 130 : index
    %869 = vector.load %arg2[%c0_347, %c130] : memref<8x180xf32, #tpu.memory_space<vmem>>, vector<8x1xf32>
    %870 = vector.broadcast %869 : vector<8x1xf32> to vector<8x256xf32>
    %871 = arith.mulf %870, %868 : vector<8x256xf32>
    %872 = arith.addf %867, %871 : vector<8x256xf32>
    %c2_i32_348 = arith.constant 2 : i32
    %873 = tpu.dynamic_rotate %858 by %c2_i32_348 dim 0 : vector<8x256xf32>, i32 -> vector<8x256xf32>
    %c0_349 = arith.constant 0 : index
    %c131 = arith.constant 131 : index
    %874 = vector.load %arg2[%c0_349, %c131] : memref<8x180xf32, #tpu.memory_space<vmem>>, vector<8x1xf32>
    %875 = vector.broadcast %874 : vector<8x1xf32> to vector<8x256xf32>
    %876 = arith.mulf %875, %873 : vector<8x256xf32>
    %877 = arith.addf %872, %876 : vector<8x256xf32>
    %c226_i32_350 = arith.constant 226 : i32
    %878 = tpu.dynamic_rotate %742 by %c226_i32_350 dim 1 : vector<8x256xf32>, i32 -> vector<8x256xf32>
    %c13_351 = arith.constant 13 : index
    %c0_352 = arith.constant 0 : index
    %879 = vector.load %arg4[%c13_351, %c0_352] : memref<24x256xf32, #tpu.memory_space<vmem>>, vector<1x256xf32>
    %880 = vector.broadcast %879 : vector<1x256xf32> to vector<8x256xf32>
    %881 = arith.mulf %878, %880 : vector<8x256xf32>
    %c0_353 = arith.constant 0 : index
    %c132 = arith.constant 132 : index
    %882 = vector.load %arg2[%c0_353, %c132] : memref<8x180xf32, #tpu.memory_space<vmem>>, vector<8x1xf32>
    %883 = vector.broadcast %882 : vector<8x1xf32> to vector<8x256xf32>
    %884 = arith.mulf %883, %881 : vector<8x256xf32>
    %885 = arith.addf %877, %884 : vector<8x256xf32>
    %c6_i32_354 = arith.constant 6 : i32
    %886 = tpu.dynamic_rotate %881 by %c6_i32_354 dim 0 : vector<8x256xf32>, i32 -> vector<8x256xf32>
    %c0_355 = arith.constant 0 : index
    %c133 = arith.constant 133 : index
    %887 = vector.load %arg2[%c0_355, %c133] : memref<8x180xf32, #tpu.memory_space<vmem>>, vector<8x1xf32>
    %888 = vector.broadcast %887 : vector<8x1xf32> to vector<8x256xf32>
    %889 = arith.mulf %888, %886 : vector<8x256xf32>
    %890 = arith.addf %885, %889 : vector<8x256xf32>
    %c4_i32_356 = arith.constant 4 : i32
    %891 = tpu.dynamic_rotate %881 by %c4_i32_356 dim 0 : vector<8x256xf32>, i32 -> vector<8x256xf32>
    %c0_357 = arith.constant 0 : index
    %c134 = arith.constant 134 : index
    %892 = vector.load %arg2[%c0_357, %c134] : memref<8x180xf32, #tpu.memory_space<vmem>>, vector<8x1xf32>
    %893 = vector.broadcast %892 : vector<8x1xf32> to vector<8x256xf32>
    %894 = arith.mulf %893, %891 : vector<8x256xf32>
    %895 = arith.addf %890, %894 : vector<8x256xf32>
    %c2_i32_358 = arith.constant 2 : i32
    %896 = tpu.dynamic_rotate %881 by %c2_i32_358 dim 0 : vector<8x256xf32>, i32 -> vector<8x256xf32>
    %c0_359 = arith.constant 0 : index
    %c135 = arith.constant 135 : index
    %897 = vector.load %arg2[%c0_359, %c135] : memref<8x180xf32, #tpu.memory_space<vmem>>, vector<8x1xf32>
    %898 = vector.broadcast %897 : vector<8x1xf32> to vector<8x256xf32>
    %899 = arith.mulf %898, %896 : vector<8x256xf32>
    %900 = arith.addf %895, %899 : vector<8x256xf32>
    %c224_i32_360 = arith.constant 224 : i32
    %901 = tpu.dynamic_rotate %742 by %c224_i32_360 dim 1 : vector<8x256xf32>, i32 -> vector<8x256xf32>
    %c14_361 = arith.constant 14 : index
    %c0_362 = arith.constant 0 : index
    %902 = vector.load %arg4[%c14_361, %c0_362] : memref<24x256xf32, #tpu.memory_space<vmem>>, vector<1x256xf32>
    %903 = vector.broadcast %902 : vector<1x256xf32> to vector<8x256xf32>
    %904 = arith.mulf %901, %903 : vector<8x256xf32>
    %c0_363 = arith.constant 0 : index
    %c136 = arith.constant 136 : index
    %905 = vector.load %arg2[%c0_363, %c136] : memref<8x180xf32, #tpu.memory_space<vmem>>, vector<8x1xf32>
    %906 = vector.broadcast %905 : vector<8x1xf32> to vector<8x256xf32>
    %907 = arith.mulf %906, %904 : vector<8x256xf32>
    %908 = arith.addf %900, %907 : vector<8x256xf32>
    %c6_i32_364 = arith.constant 6 : i32
    %909 = tpu.dynamic_rotate %904 by %c6_i32_364 dim 0 : vector<8x256xf32>, i32 -> vector<8x256xf32>
    %c0_365 = arith.constant 0 : index
    %c137 = arith.constant 137 : index
    %910 = vector.load %arg2[%c0_365, %c137] : memref<8x180xf32, #tpu.memory_space<vmem>>, vector<8x1xf32>
    %911 = vector.broadcast %910 : vector<8x1xf32> to vector<8x256xf32>
    %912 = arith.mulf %911, %909 : vector<8x256xf32>
    %913 = arith.addf %908, %912 : vector<8x256xf32>
    %c4_i32_366 = arith.constant 4 : i32
    %914 = tpu.dynamic_rotate %904 by %c4_i32_366 dim 0 : vector<8x256xf32>, i32 -> vector<8x256xf32>
    %c0_367 = arith.constant 0 : index
    %c138 = arith.constant 138 : index
    %915 = vector.load %arg2[%c0_367, %c138] : memref<8x180xf32, #tpu.memory_space<vmem>>, vector<8x1xf32>
    %916 = vector.broadcast %915 : vector<8x1xf32> to vector<8x256xf32>
    %917 = arith.mulf %916, %914 : vector<8x256xf32>
    %918 = arith.addf %913, %917 : vector<8x256xf32>
    %c2_i32_368 = arith.constant 2 : i32
    %919 = tpu.dynamic_rotate %904 by %c2_i32_368 dim 0 : vector<8x256xf32>, i32 -> vector<8x256xf32>
    %c0_369 = arith.constant 0 : index
    %c139 = arith.constant 139 : index
    %920 = vector.load %arg2[%c0_369, %c139] : memref<8x180xf32, #tpu.memory_space<vmem>>, vector<8x1xf32>
    %921 = vector.broadcast %920 : vector<8x1xf32> to vector<8x256xf32>
    %922 = arith.mulf %921, %919 : vector<8x256xf32>
    %923 = arith.addf %918, %922 : vector<8x256xf32>
    %c222_i32_370 = arith.constant 222 : i32
    %924 = tpu.dynamic_rotate %742 by %c222_i32_370 dim 1 : vector<8x256xf32>, i32 -> vector<8x256xf32>
    %c15_371 = arith.constant 15 : index
    %c0_372 = arith.constant 0 : index
    %925 = vector.load %arg4[%c15_371, %c0_372] : memref<24x256xf32, #tpu.memory_space<vmem>>, vector<1x256xf32>
    %926 = vector.broadcast %925 : vector<1x256xf32> to vector<8x256xf32>
    %927 = arith.mulf %924, %926 : vector<8x256xf32>
    %c0_373 = arith.constant 0 : index
    %c140 = arith.constant 140 : index
    %928 = vector.load %arg2[%c0_373, %c140] : memref<8x180xf32, #tpu.memory_space<vmem>>, vector<8x1xf32>
    %929 = vector.broadcast %928 : vector<8x1xf32> to vector<8x256xf32>
    %930 = arith.mulf %929, %927 : vector<8x256xf32>
    %931 = arith.addf %923, %930 : vector<8x256xf32>
    %c6_i32_374 = arith.constant 6 : i32
    %932 = tpu.dynamic_rotate %927 by %c6_i32_374 dim 0 : vector<8x256xf32>, i32 -> vector<8x256xf32>
    %c0_375 = arith.constant 0 : index
    %c141 = arith.constant 141 : index
    %933 = vector.load %arg2[%c0_375, %c141] : memref<8x180xf32, #tpu.memory_space<vmem>>, vector<8x1xf32>
    %934 = vector.broadcast %933 : vector<8x1xf32> to vector<8x256xf32>
    %935 = arith.mulf %934, %932 : vector<8x256xf32>
    %936 = arith.addf %931, %935 : vector<8x256xf32>
    %c4_i32_376 = arith.constant 4 : i32
    %937 = tpu.dynamic_rotate %927 by %c4_i32_376 dim 0 : vector<8x256xf32>, i32 -> vector<8x256xf32>
    %c0_377 = arith.constant 0 : index
    %c142 = arith.constant 142 : index
    %938 = vector.load %arg2[%c0_377, %c142] : memref<8x180xf32, #tpu.memory_space<vmem>>, vector<8x1xf32>
    %939 = vector.broadcast %938 : vector<8x1xf32> to vector<8x256xf32>
    %940 = arith.mulf %939, %937 : vector<8x256xf32>
    %941 = arith.addf %936, %940 : vector<8x256xf32>
    %c2_i32_378 = arith.constant 2 : i32
    %942 = tpu.dynamic_rotate %927 by %c2_i32_378 dim 0 : vector<8x256xf32>, i32 -> vector<8x256xf32>
    %c0_379 = arith.constant 0 : index
    %c143 = arith.constant 143 : index
    %943 = vector.load %arg2[%c0_379, %c143] : memref<8x180xf32, #tpu.memory_space<vmem>>, vector<8x1xf32>
    %944 = vector.broadcast %943 : vector<8x1xf32> to vector<8x256xf32>
    %945 = arith.mulf %944, %942 : vector<8x256xf32>
    %946 = arith.addf %941, %945 : vector<8x256xf32>
    %c0_380 = arith.constant 0 : index
    %c3_381 = arith.constant 3 : index
    %947 = vector.load %arg3[%c0_380, %c3_381] : memref<8x5xf32, #tpu.memory_space<vmem>>, vector<8x1xf32>
    %948 = vector.broadcast %947 : vector<8x1xf32> to vector<8x256xf32>
    %949 = arith.addf %946, %948 : vector<8x256xf32>
    %cst_382 = arith.constant 0.707106769 : f32
    %950 = vector.broadcast %cst_382 : f32 to vector<8x256xf32>
    %951 = arith.mulf %949, %950 : vector<8x256xf32>
    %952 = math.absf %951 : vector<8x256xf32>
    %cst_383 = arith.constant 0.327591091 : f32
    %953 = vector.broadcast %cst_383 : f32 to vector<8x256xf32>
    %954 = arith.mulf %953, %952 : vector<8x256xf32>
    %cst_384 = arith.constant 1.000000e+00 : f32
    %955 = vector.broadcast %cst_384 : f32 to vector<8x256xf32>
    %956 = arith.addf %955, %954 : vector<8x256xf32>
    %cst_385 = arith.constant 1.000000e+00 : f32
    %957 = vector.broadcast %cst_385 : f32 to vector<8x256xf32>
    %958 = arith.divf %957, %956 : vector<8x256xf32>
    %cst_386 = arith.constant 1.06140542 : f32
    %959 = vector.broadcast %cst_386 : f32 to vector<8x256xf32>
    %960 = arith.mulf %959, %958 : vector<8x256xf32>
    %cst_387 = arith.constant -1.45315206 : f32
    %961 = vector.broadcast %cst_387 : f32 to vector<8x256xf32>
    %962 = arith.addf %960, %961 : vector<8x256xf32>
    %963 = arith.mulf %962, %958 : vector<8x256xf32>
    %cst_388 = arith.constant 1.42141378 : f32
    %964 = vector.broadcast %cst_388 : f32 to vector<8x256xf32>
    %965 = arith.addf %963, %964 : vector<8x256xf32>
    %966 = arith.mulf %965, %958 : vector<8x256xf32>
    %cst_389 = arith.constant -0.284496725 : f32
    %967 = vector.broadcast %cst_389 : f32 to vector<8x256xf32>
    %968 = arith.addf %966, %967 : vector<8x256xf32>
    %969 = arith.mulf %968, %958 : vector<8x256xf32>
    %cst_390 = arith.constant 0.254829586 : f32
    %970 = vector.broadcast %cst_390 : f32 to vector<8x256xf32>
    %971 = arith.addf %969, %970 : vector<8x256xf32>
    %972 = arith.mulf %971, %958 : vector<8x256xf32>
    %973 = arith.mulf %952, %952 : vector<8x256xf32>
    %cst_391 = arith.constant 0.000000e+00 : f32
    %974 = vector.broadcast %cst_391 : f32 to vector<8x256xf32>
    %975 = arith.subf %974, %973 : vector<8x256xf32>
    %976 = math.exp %975 : vector<8x256xf32>
    %977 = arith.mulf %972, %976 : vector<8x256xf32>
    %cst_392 = arith.constant 1.000000e+00 : f32
    %978 = vector.broadcast %cst_392 : f32 to vector<8x256xf32>
    %979 = arith.subf %978, %977 : vector<8x256xf32>
    %cst_393 = arith.constant 0.000000e+00 : f32
    %980 = vector.broadcast %cst_393 : f32 to vector<8x256xf32>
    %981 = arith.cmpf olt, %951, %980 : vector<8x256xf32>
    %cst_394 = arith.constant 0.000000e+00 : f32
    %982 = vector.broadcast %cst_394 : f32 to vector<8x256xf32>
    %983 = arith.subf %982, %979 : vector<8x256xf32>
    %984 = arith.select %981, %983, %979 : vector<8x256xi1>, vector<8x256xf32>
    %cst_395 = arith.constant 5.000000e-01 : f32
    %985 = vector.broadcast %cst_395 : f32 to vector<8x256xf32>
    %986 = arith.mulf %985, %949 : vector<8x256xf32>
    %cst_396 = arith.constant 1.000000e+00 : f32
    %987 = vector.broadcast %cst_396 : f32 to vector<8x256xf32>
    %988 = arith.addf %987, %984 : vector<8x256xf32>
    %989 = arith.mulf %986, %988 : vector<8x256xf32>
    %cst_397 = arith.constant 0.000000e+00 : f32
    %990 = vector.broadcast %cst_397 : f32 to vector<8x256xf32>
    %c17_i32_398 = arith.constant 17 : i32
    %991 = tpu.dynamic_rotate %989 by %c17_i32_398 dim 1 : vector<8x256xf32>, i32 -> vector<8x256xf32>
    %c0_399 = arith.constant 0 : index
    %c0_400 = arith.constant 0 : index
    %992 = vector.load %arg4[%c0_399, %c0_400] : memref<24x256xf32, #tpu.memory_space<vmem>>, vector<1x256xf32>
    %993 = vector.broadcast %992 : vector<1x256xf32> to vector<8x256xf32>
    %994 = arith.mulf %991, %993 : vector<8x256xf32>
    %c0_401 = arith.constant 0 : index
    %c144 = arith.constant 144 : index
    %995 = vector.load %arg2[%c0_401, %c144] : memref<8x180xf32, #tpu.memory_space<vmem>>, vector<8x1xf32>
    %996 = vector.broadcast %995 : vector<8x1xf32> to vector<8x256xf32>
    %997 = arith.mulf %996, %994 : vector<8x256xf32>
    %998 = arith.addf %990, %997 : vector<8x256xf32>
    %c6_i32_402 = arith.constant 6 : i32
    %999 = tpu.dynamic_rotate %994 by %c6_i32_402 dim 0 : vector<8x256xf32>, i32 -> vector<8x256xf32>
    %c0_403 = arith.constant 0 : index
    %c145 = arith.constant 145 : index
    %1000 = vector.load %arg2[%c0_403, %c145] : memref<8x180xf32, #tpu.memory_space<vmem>>, vector<8x1xf32>
    %1001 = vector.broadcast %1000 : vector<8x1xf32> to vector<8x256xf32>
    %1002 = arith.mulf %1001, %999 : vector<8x256xf32>
    %1003 = arith.addf %998, %1002 : vector<8x256xf32>
    %c4_i32_404 = arith.constant 4 : i32
    %1004 = tpu.dynamic_rotate %994 by %c4_i32_404 dim 0 : vector<8x256xf32>, i32 -> vector<8x256xf32>
    %c0_405 = arith.constant 0 : index
    %c146 = arith.constant 146 : index
    %1005 = vector.load %arg2[%c0_405, %c146] : memref<8x180xf32, #tpu.memory_space<vmem>>, vector<8x1xf32>
    %1006 = vector.broadcast %1005 : vector<8x1xf32> to vector<8x256xf32>
    %1007 = arith.mulf %1006, %1004 : vector<8x256xf32>
    %1008 = arith.addf %1003, %1007 : vector<8x256xf32>
    %c2_i32_406 = arith.constant 2 : i32
    %1009 = tpu.dynamic_rotate %994 by %c2_i32_406 dim 0 : vector<8x256xf32>, i32 -> vector<8x256xf32>
    %c0_407 = arith.constant 0 : index
    %c147 = arith.constant 147 : index
    %1010 = vector.load %arg2[%c0_407, %c147] : memref<8x180xf32, #tpu.memory_space<vmem>>, vector<8x1xf32>
    %1011 = vector.broadcast %1010 : vector<8x1xf32> to vector<8x256xf32>
    %1012 = arith.mulf %1011, %1009 : vector<8x256xf32>
    %1013 = arith.addf %1008, %1012 : vector<8x256xf32>
    %c16_i32_408 = arith.constant 16 : i32
    %1014 = tpu.dynamic_rotate %989 by %c16_i32_408 dim 1 : vector<8x256xf32>, i32 -> vector<8x256xf32>
    %c1_409 = arith.constant 1 : index
    %c0_410 = arith.constant 0 : index
    %1015 = vector.load %arg4[%c1_409, %c0_410] : memref<24x256xf32, #tpu.memory_space<vmem>>, vector<1x256xf32>
    %1016 = vector.broadcast %1015 : vector<1x256xf32> to vector<8x256xf32>
    %1017 = arith.mulf %1014, %1016 : vector<8x256xf32>
    %c0_411 = arith.constant 0 : index
    %c148 = arith.constant 148 : index
    %1018 = vector.load %arg2[%c0_411, %c148] : memref<8x180xf32, #tpu.memory_space<vmem>>, vector<8x1xf32>
    %1019 = vector.broadcast %1018 : vector<8x1xf32> to vector<8x256xf32>
    %1020 = arith.mulf %1019, %1017 : vector<8x256xf32>
    %1021 = arith.addf %1013, %1020 : vector<8x256xf32>
    %c6_i32_412 = arith.constant 6 : i32
    %1022 = tpu.dynamic_rotate %1017 by %c6_i32_412 dim 0 : vector<8x256xf32>, i32 -> vector<8x256xf32>
    %c0_413 = arith.constant 0 : index
    %c149 = arith.constant 149 : index
    %1023 = vector.load %arg2[%c0_413, %c149] : memref<8x180xf32, #tpu.memory_space<vmem>>, vector<8x1xf32>
    %1024 = vector.broadcast %1023 : vector<8x1xf32> to vector<8x256xf32>
    %1025 = arith.mulf %1024, %1022 : vector<8x256xf32>
    %1026 = arith.addf %1021, %1025 : vector<8x256xf32>
    %c4_i32_414 = arith.constant 4 : i32
    %1027 = tpu.dynamic_rotate %1017 by %c4_i32_414 dim 0 : vector<8x256xf32>, i32 -> vector<8x256xf32>
    %c0_415 = arith.constant 0 : index
    %c150 = arith.constant 150 : index
    %1028 = vector.load %arg2[%c0_415, %c150] : memref<8x180xf32, #tpu.memory_space<vmem>>, vector<8x1xf32>
    %1029 = vector.broadcast %1028 : vector<8x1xf32> to vector<8x256xf32>
    %1030 = arith.mulf %1029, %1027 : vector<8x256xf32>
    %1031 = arith.addf %1026, %1030 : vector<8x256xf32>
    %c2_i32_416 = arith.constant 2 : i32
    %1032 = tpu.dynamic_rotate %1017 by %c2_i32_416 dim 0 : vector<8x256xf32>, i32 -> vector<8x256xf32>
    %c0_417 = arith.constant 0 : index
    %c151 = arith.constant 151 : index
    %1033 = vector.load %arg2[%c0_417, %c151] : memref<8x180xf32, #tpu.memory_space<vmem>>, vector<8x1xf32>
    %1034 = vector.broadcast %1033 : vector<8x1xf32> to vector<8x256xf32>
    %1035 = arith.mulf %1034, %1032 : vector<8x256xf32>
    %1036 = arith.addf %1031, %1035 : vector<8x256xf32>
    %c15_i32_418 = arith.constant 15 : i32
    %1037 = tpu.dynamic_rotate %989 by %c15_i32_418 dim 1 : vector<8x256xf32>, i32 -> vector<8x256xf32>
    %c2_419 = arith.constant 2 : index
    %c0_420 = arith.constant 0 : index
    %1038 = vector.load %arg4[%c2_419, %c0_420] : memref<24x256xf32, #tpu.memory_space<vmem>>, vector<1x256xf32>
    %1039 = vector.broadcast %1038 : vector<1x256xf32> to vector<8x256xf32>
    %1040 = arith.mulf %1037, %1039 : vector<8x256xf32>
    %c0_421 = arith.constant 0 : index
    %c152 = arith.constant 152 : index
    %1041 = vector.load %arg2[%c0_421, %c152] : memref<8x180xf32, #tpu.memory_space<vmem>>, vector<8x1xf32>
    %1042 = vector.broadcast %1041 : vector<8x1xf32> to vector<8x256xf32>
    %1043 = arith.mulf %1042, %1040 : vector<8x256xf32>
    %1044 = arith.addf %1036, %1043 : vector<8x256xf32>
    %c6_i32_422 = arith.constant 6 : i32
    %1045 = tpu.dynamic_rotate %1040 by %c6_i32_422 dim 0 : vector<8x256xf32>, i32 -> vector<8x256xf32>
    %c0_423 = arith.constant 0 : index
    %c153 = arith.constant 153 : index
    %1046 = vector.load %arg2[%c0_423, %c153] : memref<8x180xf32, #tpu.memory_space<vmem>>, vector<8x1xf32>
    %1047 = vector.broadcast %1046 : vector<8x1xf32> to vector<8x256xf32>
    %1048 = arith.mulf %1047, %1045 : vector<8x256xf32>
    %1049 = arith.addf %1044, %1048 : vector<8x256xf32>
    %c4_i32_424 = arith.constant 4 : i32
    %1050 = tpu.dynamic_rotate %1040 by %c4_i32_424 dim 0 : vector<8x256xf32>, i32 -> vector<8x256xf32>
    %c0_425 = arith.constant 0 : index
    %c154 = arith.constant 154 : index
    %1051 = vector.load %arg2[%c0_425, %c154] : memref<8x180xf32, #tpu.memory_space<vmem>>, vector<8x1xf32>
    %1052 = vector.broadcast %1051 : vector<8x1xf32> to vector<8x256xf32>
    %1053 = arith.mulf %1052, %1050 : vector<8x256xf32>
    %1054 = arith.addf %1049, %1053 : vector<8x256xf32>
    %c2_i32_426 = arith.constant 2 : i32
    %1055 = tpu.dynamic_rotate %1040 by %c2_i32_426 dim 0 : vector<8x256xf32>, i32 -> vector<8x256xf32>
    %c0_427 = arith.constant 0 : index
    %c155 = arith.constant 155 : index
    %1056 = vector.load %arg2[%c0_427, %c155] : memref<8x180xf32, #tpu.memory_space<vmem>>, vector<8x1xf32>
    %1057 = vector.broadcast %1056 : vector<8x1xf32> to vector<8x256xf32>
    %1058 = arith.mulf %1057, %1055 : vector<8x256xf32>
    %1059 = arith.addf %1054, %1058 : vector<8x256xf32>
    %c1_i32_428 = arith.constant 1 : i32
    %1060 = tpu.dynamic_rotate %989 by %c1_i32_428 dim 1 : vector<8x256xf32>, i32 -> vector<8x256xf32>
    %c3_429 = arith.constant 3 : index
    %c0_430 = arith.constant 0 : index
    %1061 = vector.load %arg4[%c3_429, %c0_430] : memref<24x256xf32, #tpu.memory_space<vmem>>, vector<1x256xf32>
    %1062 = vector.broadcast %1061 : vector<1x256xf32> to vector<8x256xf32>
    %1063 = arith.mulf %1060, %1062 : vector<8x256xf32>
    %c0_431 = arith.constant 0 : index
    %c156 = arith.constant 156 : index
    %1064 = vector.load %arg2[%c0_431, %c156] : memref<8x180xf32, #tpu.memory_space<vmem>>, vector<8x1xf32>
    %1065 = vector.broadcast %1064 : vector<8x1xf32> to vector<8x256xf32>
    %1066 = arith.mulf %1065, %1063 : vector<8x256xf32>
    %1067 = arith.addf %1059, %1066 : vector<8x256xf32>
    %c6_i32_432 = arith.constant 6 : i32
    %1068 = tpu.dynamic_rotate %1063 by %c6_i32_432 dim 0 : vector<8x256xf32>, i32 -> vector<8x256xf32>
    %c0_433 = arith.constant 0 : index
    %c157 = arith.constant 157 : index
    %1069 = vector.load %arg2[%c0_433, %c157] : memref<8x180xf32, #tpu.memory_space<vmem>>, vector<8x1xf32>
    %1070 = vector.broadcast %1069 : vector<8x1xf32> to vector<8x256xf32>
    %1071 = arith.mulf %1070, %1068 : vector<8x256xf32>
    %1072 = arith.addf %1067, %1071 : vector<8x256xf32>
    %c4_i32_434 = arith.constant 4 : i32
    %1073 = tpu.dynamic_rotate %1063 by %c4_i32_434 dim 0 : vector<8x256xf32>, i32 -> vector<8x256xf32>
    %c0_435 = arith.constant 0 : index
    %c158 = arith.constant 158 : index
    %1074 = vector.load %arg2[%c0_435, %c158] : memref<8x180xf32, #tpu.memory_space<vmem>>, vector<8x1xf32>
    %1075 = vector.broadcast %1074 : vector<8x1xf32> to vector<8x256xf32>
    %1076 = arith.mulf %1075, %1073 : vector<8x256xf32>
    %1077 = arith.addf %1072, %1076 : vector<8x256xf32>
    %c2_i32_436 = arith.constant 2 : i32
    %1078 = tpu.dynamic_rotate %1063 by %c2_i32_436 dim 0 : vector<8x256xf32>, i32 -> vector<8x256xf32>
    %c0_437 = arith.constant 0 : index
    %c159 = arith.constant 159 : index
    %1079 = vector.load %arg2[%c0_437, %c159] : memref<8x180xf32, #tpu.memory_space<vmem>>, vector<8x1xf32>
    %1080 = vector.broadcast %1079 : vector<8x1xf32> to vector<8x256xf32>
    %1081 = arith.mulf %1080, %1078 : vector<8x256xf32>
    %1082 = arith.addf %1077, %1081 : vector<8x256xf32>
    %c0_438 = arith.constant 0 : index
    %c160 = arith.constant 160 : index
    %1083 = vector.load %arg2[%c0_438, %c160] : memref<8x180xf32, #tpu.memory_space<vmem>>, vector<8x1xf32>
    %1084 = vector.broadcast %1083 : vector<8x1xf32> to vector<8x256xf32>
    %1085 = arith.mulf %1084, %989 : vector<8x256xf32>
    %1086 = arith.addf %1082, %1085 : vector<8x256xf32>
    %c6_i32_439 = arith.constant 6 : i32
    %1087 = tpu.dynamic_rotate %989 by %c6_i32_439 dim 0 : vector<8x256xf32>, i32 -> vector<8x256xf32>
    %c0_440 = arith.constant 0 : index
    %c161 = arith.constant 161 : index
    %1088 = vector.load %arg2[%c0_440, %c161] : memref<8x180xf32, #tpu.memory_space<vmem>>, vector<8x1xf32>
    %1089 = vector.broadcast %1088 : vector<8x1xf32> to vector<8x256xf32>
    %1090 = arith.mulf %1089, %1087 : vector<8x256xf32>
    %1091 = arith.addf %1086, %1090 : vector<8x256xf32>
    %c4_i32_441 = arith.constant 4 : i32
    %1092 = tpu.dynamic_rotate %989 by %c4_i32_441 dim 0 : vector<8x256xf32>, i32 -> vector<8x256xf32>
    %c0_442 = arith.constant 0 : index
    %c162 = arith.constant 162 : index
    %1093 = vector.load %arg2[%c0_442, %c162] : memref<8x180xf32, #tpu.memory_space<vmem>>, vector<8x1xf32>
    %1094 = vector.broadcast %1093 : vector<8x1xf32> to vector<8x256xf32>
    %1095 = arith.mulf %1094, %1092 : vector<8x256xf32>
    %1096 = arith.addf %1091, %1095 : vector<8x256xf32>
    %c2_i32_443 = arith.constant 2 : i32
    %1097 = tpu.dynamic_rotate %989 by %c2_i32_443 dim 0 : vector<8x256xf32>, i32 -> vector<8x256xf32>
    %c0_444 = arith.constant 0 : index
    %c163 = arith.constant 163 : index
    %1098 = vector.load %arg2[%c0_444, %c163] : memref<8x180xf32, #tpu.memory_space<vmem>>, vector<8x1xf32>
    %1099 = vector.broadcast %1098 : vector<8x1xf32> to vector<8x256xf32>
    %1100 = arith.mulf %1099, %1097 : vector<8x256xf32>
    %1101 = arith.addf %1096, %1100 : vector<8x256xf32>
    %c255_i32_445 = arith.constant 255 : i32
    %1102 = tpu.dynamic_rotate %989 by %c255_i32_445 dim 1 : vector<8x256xf32>, i32 -> vector<8x256xf32>
    %c4_446 = arith.constant 4 : index
    %c0_447 = arith.constant 0 : index
    %1103 = vector.load %arg4[%c4_446, %c0_447] : memref<24x256xf32, #tpu.memory_space<vmem>>, vector<1x256xf32>
    %1104 = vector.broadcast %1103 : vector<1x256xf32> to vector<8x256xf32>
    %1105 = arith.mulf %1102, %1104 : vector<8x256xf32>
    %c0_448 = arith.constant 0 : index
    %c164 = arith.constant 164 : index
    %1106 = vector.load %arg2[%c0_448, %c164] : memref<8x180xf32, #tpu.memory_space<vmem>>, vector<8x1xf32>
    %1107 = vector.broadcast %1106 : vector<8x1xf32> to vector<8x256xf32>
    %1108 = arith.mulf %1107, %1105 : vector<8x256xf32>
    %1109 = arith.addf %1101, %1108 : vector<8x256xf32>
    %c6_i32_449 = arith.constant 6 : i32
    %1110 = tpu.dynamic_rotate %1105 by %c6_i32_449 dim 0 : vector<8x256xf32>, i32 -> vector<8x256xf32>
    %c0_450 = arith.constant 0 : index
    %c165 = arith.constant 165 : index
    %1111 = vector.load %arg2[%c0_450, %c165] : memref<8x180xf32, #tpu.memory_space<vmem>>, vector<8x1xf32>
    %1112 = vector.broadcast %1111 : vector<8x1xf32> to vector<8x256xf32>
    %1113 = arith.mulf %1112, %1110 : vector<8x256xf32>
    %1114 = arith.addf %1109, %1113 : vector<8x256xf32>
    %c4_i32_451 = arith.constant 4 : i32
    %1115 = tpu.dynamic_rotate %1105 by %c4_i32_451 dim 0 : vector<8x256xf32>, i32 -> vector<8x256xf32>
    %c0_452 = arith.constant 0 : index
    %c166 = arith.constant 166 : index
    %1116 = vector.load %arg2[%c0_452, %c166] : memref<8x180xf32, #tpu.memory_space<vmem>>, vector<8x1xf32>
    %1117 = vector.broadcast %1116 : vector<8x1xf32> to vector<8x256xf32>
    %1118 = arith.mulf %1117, %1115 : vector<8x256xf32>
    %1119 = arith.addf %1114, %1118 : vector<8x256xf32>
    %c2_i32_453 = arith.constant 2 : i32
    %1120 = tpu.dynamic_rotate %1105 by %c2_i32_453 dim 0 : vector<8x256xf32>, i32 -> vector<8x256xf32>
    %c0_454 = arith.constant 0 : index
    %c167 = arith.constant 167 : index
    %1121 = vector.load %arg2[%c0_454, %c167] : memref<8x180xf32, #tpu.memory_space<vmem>>, vector<8x1xf32>
    %1122 = vector.broadcast %1121 : vector<8x1xf32> to vector<8x256xf32>
    %1123 = arith.mulf %1122, %1120 : vector<8x256xf32>
    %1124 = arith.addf %1119, %1123 : vector<8x256xf32>
    %c241_i32_455 = arith.constant 241 : i32
    %1125 = tpu.dynamic_rotate %989 by %c241_i32_455 dim 1 : vector<8x256xf32>, i32 -> vector<8x256xf32>
    %c5_456 = arith.constant 5 : index
    %c0_457 = arith.constant 0 : index
    %1126 = vector.load %arg4[%c5_456, %c0_457] : memref<24x256xf32, #tpu.memory_space<vmem>>, vector<1x256xf32>
    %1127 = vector.broadcast %1126 : vector<1x256xf32> to vector<8x256xf32>
    %1128 = arith.mulf %1125, %1127 : vector<8x256xf32>
    %c0_458 = arith.constant 0 : index
    %c168 = arith.constant 168 : index
    %1129 = vector.load %arg2[%c0_458, %c168] : memref<8x180xf32, #tpu.memory_space<vmem>>, vector<8x1xf32>
    %1130 = vector.broadcast %1129 : vector<8x1xf32> to vector<8x256xf32>
    %1131 = arith.mulf %1130, %1128 : vector<8x256xf32>
    %1132 = arith.addf %1124, %1131 : vector<8x256xf32>
    %c6_i32_459 = arith.constant 6 : i32
    %1133 = tpu.dynamic_rotate %1128 by %c6_i32_459 dim 0 : vector<8x256xf32>, i32 -> vector<8x256xf32>
    %c0_460 = arith.constant 0 : index
    %c169 = arith.constant 169 : index
    %1134 = vector.load %arg2[%c0_460, %c169] : memref<8x180xf32, #tpu.memory_space<vmem>>, vector<8x1xf32>
    %1135 = vector.broadcast %1134 : vector<8x1xf32> to vector<8x256xf32>
    %1136 = arith.mulf %1135, %1133 : vector<8x256xf32>
    %1137 = arith.addf %1132, %1136 : vector<8x256xf32>
    %c4_i32_461 = arith.constant 4 : i32
    %1138 = tpu.dynamic_rotate %1128 by %c4_i32_461 dim 0 : vector<8x256xf32>, i32 -> vector<8x256xf32>
    %c0_462 = arith.constant 0 : index
    %c170 = arith.constant 170 : index
    %1139 = vector.load %arg2[%c0_462, %c170] : memref<8x180xf32, #tpu.memory_space<vmem>>, vector<8x1xf32>
    %1140 = vector.broadcast %1139 : vector<8x1xf32> to vector<8x256xf32>
    %1141 = arith.mulf %1140, %1138 : vector<8x256xf32>
    %1142 = arith.addf %1137, %1141 : vector<8x256xf32>
    %c2_i32_463 = arith.constant 2 : i32
    %1143 = tpu.dynamic_rotate %1128 by %c2_i32_463 dim 0 : vector<8x256xf32>, i32 -> vector<8x256xf32>
    %c0_464 = arith.constant 0 : index
    %c171 = arith.constant 171 : index
    %1144 = vector.load %arg2[%c0_464, %c171] : memref<8x180xf32, #tpu.memory_space<vmem>>, vector<8x1xf32>
    %1145 = vector.broadcast %1144 : vector<8x1xf32> to vector<8x256xf32>
    %1146 = arith.mulf %1145, %1143 : vector<8x256xf32>
    %1147 = arith.addf %1142, %1146 : vector<8x256xf32>
    %c240_i32_465 = arith.constant 240 : i32
    %1148 = tpu.dynamic_rotate %989 by %c240_i32_465 dim 1 : vector<8x256xf32>, i32 -> vector<8x256xf32>
    %c6_466 = arith.constant 6 : index
    %c0_467 = arith.constant 0 : index
    %1149 = vector.load %arg4[%c6_466, %c0_467] : memref<24x256xf32, #tpu.memory_space<vmem>>, vector<1x256xf32>
    %1150 = vector.broadcast %1149 : vector<1x256xf32> to vector<8x256xf32>
    %1151 = arith.mulf %1148, %1150 : vector<8x256xf32>
    %c0_468 = arith.constant 0 : index
    %c172 = arith.constant 172 : index
    %1152 = vector.load %arg2[%c0_468, %c172] : memref<8x180xf32, #tpu.memory_space<vmem>>, vector<8x1xf32>
    %1153 = vector.broadcast %1152 : vector<8x1xf32> to vector<8x256xf32>
    %1154 = arith.mulf %1153, %1151 : vector<8x256xf32>
    %1155 = arith.addf %1147, %1154 : vector<8x256xf32>
    %c6_i32_469 = arith.constant 6 : i32
    %1156 = tpu.dynamic_rotate %1151 by %c6_i32_469 dim 0 : vector<8x256xf32>, i32 -> vector<8x256xf32>
    %c0_470 = arith.constant 0 : index
    %c173 = arith.constant 173 : index
    %1157 = vector.load %arg2[%c0_470, %c173] : memref<8x180xf32, #tpu.memory_space<vmem>>, vector<8x1xf32>
    %1158 = vector.broadcast %1157 : vector<8x1xf32> to vector<8x256xf32>
    %1159 = arith.mulf %1158, %1156 : vector<8x256xf32>
    %1160 = arith.addf %1155, %1159 : vector<8x256xf32>
    %c4_i32_471 = arith.constant 4 : i32
    %1161 = tpu.dynamic_rotate %1151 by %c4_i32_471 dim 0 : vector<8x256xf32>, i32 -> vector<8x256xf32>
    %c0_472 = arith.constant 0 : index
    %c174 = arith.constant 174 : index
    %1162 = vector.load %arg2[%c0_472, %c174] : memref<8x180xf32, #tpu.memory_space<vmem>>, vector<8x1xf32>
    %1163 = vector.broadcast %1162 : vector<8x1xf32> to vector<8x256xf32>
    %1164 = arith.mulf %1163, %1161 : vector<8x256xf32>
    %1165 = arith.addf %1160, %1164 : vector<8x256xf32>
    %c2_i32_473 = arith.constant 2 : i32
    %1166 = tpu.dynamic_rotate %1151 by %c2_i32_473 dim 0 : vector<8x256xf32>, i32 -> vector<8x256xf32>
    %c0_474 = arith.constant 0 : index
    %c175 = arith.constant 175 : index
    %1167 = vector.load %arg2[%c0_474, %c175] : memref<8x180xf32, #tpu.memory_space<vmem>>, vector<8x1xf32>
    %1168 = vector.broadcast %1167 : vector<8x1xf32> to vector<8x256xf32>
    %1169 = arith.mulf %1168, %1166 : vector<8x256xf32>
    %1170 = arith.addf %1165, %1169 : vector<8x256xf32>
    %c239_i32_475 = arith.constant 239 : i32
    %1171 = tpu.dynamic_rotate %989 by %c239_i32_475 dim 1 : vector<8x256xf32>, i32 -> vector<8x256xf32>
    %c7_476 = arith.constant 7 : index
    %c0_477 = arith.constant 0 : index
    %1172 = vector.load %arg4[%c7_476, %c0_477] : memref<24x256xf32, #tpu.memory_space<vmem>>, vector<1x256xf32>
    %1173 = vector.broadcast %1172 : vector<1x256xf32> to vector<8x256xf32>
    %1174 = arith.mulf %1171, %1173 : vector<8x256xf32>
    %c0_478 = arith.constant 0 : index
    %c176 = arith.constant 176 : index
    %1175 = vector.load %arg2[%c0_478, %c176] : memref<8x180xf32, #tpu.memory_space<vmem>>, vector<8x1xf32>
    %1176 = vector.broadcast %1175 : vector<8x1xf32> to vector<8x256xf32>
    %1177 = arith.mulf %1176, %1174 : vector<8x256xf32>
    %1178 = arith.addf %1170, %1177 : vector<8x256xf32>
    %c6_i32_479 = arith.constant 6 : i32
    %1179 = tpu.dynamic_rotate %1174 by %c6_i32_479 dim 0 : vector<8x256xf32>, i32 -> vector<8x256xf32>
    %c0_480 = arith.constant 0 : index
    %c177 = arith.constant 177 : index
    %1180 = vector.load %arg2[%c0_480, %c177] : memref<8x180xf32, #tpu.memory_space<vmem>>, vector<8x1xf32>
    %1181 = vector.broadcast %1180 : vector<8x1xf32> to vector<8x256xf32>
    %1182 = arith.mulf %1181, %1179 : vector<8x256xf32>
    %1183 = arith.addf %1178, %1182 : vector<8x256xf32>
    %c4_i32_481 = arith.constant 4 : i32
    %1184 = tpu.dynamic_rotate %1174 by %c4_i32_481 dim 0 : vector<8x256xf32>, i32 -> vector<8x256xf32>
    %c0_482 = arith.constant 0 : index
    %c178 = arith.constant 178 : index
    %1185 = vector.load %arg2[%c0_482, %c178] : memref<8x180xf32, #tpu.memory_space<vmem>>, vector<8x1xf32>
    %1186 = vector.broadcast %1185 : vector<8x1xf32> to vector<8x256xf32>
    %1187 = arith.mulf %1186, %1184 : vector<8x256xf32>
    %1188 = arith.addf %1183, %1187 : vector<8x256xf32>
    %c2_i32_483 = arith.constant 2 : i32
    %1189 = tpu.dynamic_rotate %1174 by %c2_i32_483 dim 0 : vector<8x256xf32>, i32 -> vector<8x256xf32>
    %c0_484 = arith.constant 0 : index
    %c179 = arith.constant 179 : index
    %1190 = vector.load %arg2[%c0_484, %c179] : memref<8x180xf32, #tpu.memory_space<vmem>>, vector<8x1xf32>
    %1191 = vector.broadcast %1190 : vector<8x1xf32> to vector<8x256xf32>
    %1192 = arith.mulf %1191, %1189 : vector<8x256xf32>
    %1193 = arith.addf %1188, %1192 : vector<8x256xf32>
    %c0_485 = arith.constant 0 : index
    %c4_486 = arith.constant 4 : index
    %1194 = vector.load %arg3[%c0_485, %c4_486] : memref<8x5xf32, #tpu.memory_space<vmem>>, vector<8x1xf32>
    %1195 = vector.broadcast %1194 : vector<8x1xf32> to vector<8x256xf32>
    %1196 = arith.addf %1193, %1195 : vector<8x256xf32>
    %cst_487 = arith.constant 0.707106769 : f32
    %1197 = vector.broadcast %cst_487 : f32 to vector<8x256xf32>
    %1198 = arith.mulf %1196, %1197 : vector<8x256xf32>
    %1199 = math.absf %1198 : vector<8x256xf32>
    %cst_488 = arith.constant 0.327591091 : f32
    %1200 = vector.broadcast %cst_488 : f32 to vector<8x256xf32>
    %1201 = arith.mulf %1200, %1199 : vector<8x256xf32>
    %cst_489 = arith.constant 1.000000e+00 : f32
    %1202 = vector.broadcast %cst_489 : f32 to vector<8x256xf32>
    %1203 = arith.addf %1202, %1201 : vector<8x256xf32>
    %cst_490 = arith.constant 1.000000e+00 : f32
    %1204 = vector.broadcast %cst_490 : f32 to vector<8x256xf32>
    %1205 = arith.divf %1204, %1203 : vector<8x256xf32>
    %cst_491 = arith.constant 1.06140542 : f32
    %1206 = vector.broadcast %cst_491 : f32 to vector<8x256xf32>
    %1207 = arith.mulf %1206, %1205 : vector<8x256xf32>
    %cst_492 = arith.constant -1.45315206 : f32
    %1208 = vector.broadcast %cst_492 : f32 to vector<8x256xf32>
    %1209 = arith.addf %1207, %1208 : vector<8x256xf32>
    %1210 = arith.mulf %1209, %1205 : vector<8x256xf32>
    %cst_493 = arith.constant 1.42141378 : f32
    %1211 = vector.broadcast %cst_493 : f32 to vector<8x256xf32>
    %1212 = arith.addf %1210, %1211 : vector<8x256xf32>
    %1213 = arith.mulf %1212, %1205 : vector<8x256xf32>
    %cst_494 = arith.constant -0.284496725 : f32
    %1214 = vector.broadcast %cst_494 : f32 to vector<8x256xf32>
    %1215 = arith.addf %1213, %1214 : vector<8x256xf32>
    %1216 = arith.mulf %1215, %1205 : vector<8x256xf32>
    %cst_495 = arith.constant 0.254829586 : f32
    %1217 = vector.broadcast %cst_495 : f32 to vector<8x256xf32>
    %1218 = arith.addf %1216, %1217 : vector<8x256xf32>
    %1219 = arith.mulf %1218, %1205 : vector<8x256xf32>
    %1220 = arith.mulf %1199, %1199 : vector<8x256xf32>
    %cst_496 = arith.constant 0.000000e+00 : f32
    %1221 = vector.broadcast %cst_496 : f32 to vector<8x256xf32>
    %1222 = arith.subf %1221, %1220 : vector<8x256xf32>
    %1223 = math.exp %1222 : vector<8x256xf32>
    %1224 = arith.mulf %1219, %1223 : vector<8x256xf32>
    %cst_497 = arith.constant 1.000000e+00 : f32
    %1225 = vector.broadcast %cst_497 : f32 to vector<8x256xf32>
    %1226 = arith.subf %1225, %1224 : vector<8x256xf32>
    %cst_498 = arith.constant 0.000000e+00 : f32
    %1227 = vector.broadcast %cst_498 : f32 to vector<8x256xf32>
    %1228 = arith.cmpf olt, %1198, %1227 : vector<8x256xf32>
    %cst_499 = arith.constant 0.000000e+00 : f32
    %1229 = vector.broadcast %cst_499 : f32 to vector<8x256xf32>
    %1230 = arith.subf %1229, %1226 : vector<8x256xf32>
    %1231 = arith.select %1228, %1230, %1226 : vector<8x256xi1>, vector<8x256xf32>
    %cst_500 = arith.constant 5.000000e-01 : f32
    %1232 = vector.broadcast %cst_500 : f32 to vector<8x256xf32>
    %1233 = arith.mulf %1232, %1196 : vector<8x256xf32>
    %cst_501 = arith.constant 1.000000e+00 : f32
    %1234 = vector.broadcast %cst_501 : f32 to vector<8x256xf32>
    %1235 = arith.addf %1234, %1231 : vector<8x256xf32>
    %1236 = arith.mulf %1233, %1235 : vector<8x256xf32>
    %c0_502 = arith.constant 0 : index
    %c0_503 = arith.constant 0 : index
    %c0_504 = arith.constant 0 : index
    %1237 = vector.load %arg5[%c0_502, %c0_503, %c0_504] : memref<1x8x256xf32, #tpu.memory_space<vmem>>, vector<1x8x256xf32>
    %1238 = vector.shape_cast %1237 : vector<1x8x256xf32> to vector<8x256xf32>
    %1239 = vector.shape_cast %1236 : vector<8x256xf32> to vector<1x8x256xf32>
    tpu.vector_store %arg5[%c0_502, %c0_503, %c0_504], %1239 {strides = array<i32>} : memref<1x8x256xf32, #tpu.memory_space<vmem>>, vector<1x8x256xf32>,
    return
  }
  func.func @transform_0(%arg0: i32) -> (i32, i32, i32) {
    %c0_i32 = arith.constant 0 : i32
    %c0_i32_0 = arith.constant 0 : i32
    %c0_i32_1 = arith.constant 0 : i32
    return %arg0, %c0_i32, %c0_i32_0 : i32, i32, i32
  }
  func.func @transform_1(%arg0: i32) -> (i32, i32) {
    %c0_i32 = arith.constant 0 : i32
    %c0_i32_0 = arith.constant 0 : i32
    %c0_i32_1 = arith.constant 0 : i32
    return %c0_i32, %c0_i32_0 : i32, i32
  }
  func.func @transform_2(%arg0: i32) -> (i32, i32) {
    %c0_i32 = arith.constant 0 : i32
    %c0_i32_0 = arith.constant 0 : i32
    %c0_i32_1 = arith.constant 0 : i32
    return %c0_i32, %c0_i32_0 : i32, i32
  }
  func.func @transform_3(%arg0: i32) -> (i32, i32) {
    %c0_i32 = arith.constant 0 : i32
    %c0_i32_0 = arith.constant 0 : i32
    %c0_i32_1 = arith.constant 0 : i32
    return %c0_i32, %c0_i32_0 : i32, i32
  }
  func.func @transform_4(%arg0: i32) -> (i32, i32, i32) {
    %c0_i32 = arith.constant 0 : i32
    %c0_i32_0 = arith.constant 0 : i32
    %c0_i32_1 = arith.constant 0 : i32
    return %arg0, %c0_i32, %c0_i32_0 : i32, i32, i32
  }
}

</mosaic_0001>

<llo_original>
// kernel: _lambda_.1
$region0: #{_lambda_.1}
  #allocation0 [shape = 'u32[]', space=smem, size = 0x4, offset = 0x4, fixed_abs, tag = 'smem constant byte address 0x4 - core index']
  #allocation1 [shape = 'u32[144,128]{1,0:T(1,128)}', space=vmem, size = 0x12000, scoped, tag = 'internal scratch']
  %s0 = inlined_call_operand.vmem [shape: f32[1,8,256], index: 0, kind: input, shape index: {}]
  %s1 = inlined_call_operand.vmem [shape: f32[8,180], index: 1, kind: input, shape index: {}]
  %s2 = inlined_call_operand.vmem [shape: f32[8,5], index: 2, kind: input, shape index: {}]
  %s3 = inlined_call_operand.vmem [shape: f32[24,256], index: 3, kind: input, shape index: {}]
  %s4 = inlined_call_operand.vmem [shape: f32[1,8,256], index: 4, kind: output, shape index: {}]
  %s5 = sld [smem:[#allocation0]]
  $region26: #{_lambda_.1} parent=0
    _
  %s7 = ssub.s32 1, %s5
  %s8 = scalar_select 0, %s7, %s5
  // Predicated region
  $region2: #{_lambda_.1} parent=0 // pred_check
    _
  $region3: #{_lambda_.1} parent=0 // pred_check_branch
    %10 = sbr.rel (0) target = $region5
  $region4: #{_lambda_.1} parent=0 // pred_region
    _
  $region5: #{_lambda_.1} parent=0 // pred_fallthru
    _
  // Predicated region
  $region6: #{_lambda_.1} parent=0 // pred_check
    _
  $region7: #{_lambda_.1} parent=0 // pred_check_branch
    %12 = sbr.rel (0) target = $region9
  $region8: #{_lambda_.1} parent=0 // pred_region
    _
  $region9: #{_lambda_.1} parent=0 // pred_fallthru
    _
  // Predicated region
  $region10: #{_lambda_.1} parent=0 // pred_check
    _
  $region11: #{_lambda_.1} parent=0 // pred_check_branch
    %14 = sbr.rel (0) target = $region13
  $region12: #{_lambda_.1} parent=0 // pred_region
    _
  $region13: #{_lambda_.1} parent=0 // pred_fallthru
    _
  // Predicated region
  $region14: #{_lambda_.1} parent=0 // pred_check
    _
  $region15: #{_lambda_.1} parent=0 // pred_check_branch
    %16 = sbr.rel (0) target = $region17
  $region16: #{_lambda_.1} parent=0 // pred_region
    _
  $region17: #{_lambda_.1} parent=0 // pred_fallthru
    _
  %v17 = vld [vmem:[%s0] sm:$0xff]
  %v18 = vld [vmem:[%s0 + $0x8] sm:$0xff]
  %19 = vrot.lane.b32.xlu0 %v17, 17
  %v20 = vpop.permute.xlu0 %19
  %21 = vrot.lane.b32.xlu0 %v18, 17
  %v22 = vpop.permute.xlu0 %21
  %v23 = vlaneseq
  %v24 = vand.u32 %v23, 127
  %vm25 = vcmp.lt.s32.totalorder %v24, 17
  %v26 = vsel %vm25, %v20, %v22
  %v27 = vsel %vm25, %v22, %v20
  %v28 = vld [vmem:[%s3] ss:$8 sm:$0x3]
  %v30 = vlaneseq
  %v31 = vshrl.u32 %v30, 7
  %v32 = vsub.s32 0, %v31
  %v33 = vrot.slane %v28, %v32
  %v34 = vlaneseq
  %v35 = vshrl.u32 %v34, 7
  %v36 = vsub.s32 1, %v35
  %v37 = vrot.slane %v28, %v36
  %v40 = vmul.f32 %v27, %v33
  %v41 = vmul.f32 %v26, %v37
  %v42 = vld [vmem:[%s1] sm:$0xff]
  %44 = vset.pattern.permute.xlu0 0
  %45 = vperm.xlu0 %44, %v42
  %v46 = vpop.permute.xlu0 %45
  %v48 = vmul.f32 %v46, %v40
  %v49 = vmul.f32 %v46, %v41
  %v50 = vadd.f32 %v48, 0.0
  %v51 = vadd.f32 %v49, 0.0
  %v52 = vrot.slane %v40, 2
  %v53 = vrot.slane %v41, 2
  %54 = vset.pattern.permute.xlu0 1
  %55 = vperm.xlu0 %54, %v42
  %v56 = vpop.permute.xlu0 %55
  %v58 = vmul.f32 %v56, %v52
  %v59 = vmul.f32 %v56, %v53
  %v60 = vadd.f32 %v50, %v58
  %v61 = vadd.f32 %v51, %v59
  %v62 = vrot.slane %v40, 4
  %v63 = vrot.slane %v41, 4
  %64 = vset.pattern.permute.xlu0 2
  %65 = vperm.xlu0 %64, %v42
  %v66 = vpop.permute.xlu0 %65
  %v68 = vmul.f32 %v66, %v62
  %v69 = vmul.f32 %v66, %v63
  %v70 = vadd.f32 %v60, %v68
  %v71 = vadd.f32 %v61, %v69
  %v72 = vrot.slane %v40, 6
  %v73 = vrot.slane %v41, 6
  %74 = vset.pattern.permute.xlu0 3
  %75 = vperm.xlu0 %74, %v42
  %v76 = vpop.permute.xlu0 %75
  %v78 = vmul.f32 %v76, %v72
  %v79 = vmul.f32 %v76, %v73
  %v80 = vadd.f32 %v70, %v78
  %v81 = vadd.f32 %v71, %v79
  %82 = vrot.lane.b32.xlu0 %v17, 16
  %v83 = vpop.permute.xlu0 %82
  %84 = vrot.lane.b32.xlu0 %v18, 16
  %v85 = vpop.permute.xlu0 %84
  %vm86 = vcmp.lt.s32.totalorder %v24, 16
  %v87 = vsel %vm86, %v83, %v85
  %v88 = vsel %vm86, %v85, %v83
  %s89 = scalar_lea.vmem %s3, 1
  %v90 = vld [vmem:[%s89] ss:$8 sm:$0x3]
  %v92 = vlaneseq
  %v93 = vshrl.u32 %v92, 7
  %v94 = vsub.s32 0, %v93
  %v95 = vrot.slane %v90, %v94
  %v96 = vlaneseq
  %v97 = vshrl.u32 %v96, 7
  %v98 = vsub.s32 1, %v97
  %v99 = vrot.slane %v90, %v98
  %v102 = vmul.f32 %v88, %v95
  %v103 = vmul.f32 %v87, %v99
  %104 = vset.pattern.permute.xlu0 4
  %105 = vperm.xlu0 %104, %v42
  %v106 = vpop.permute.xlu0 %105
  %v108 = vmul.f32 %v106, %v102
  %v109 = vmul.f32 %v106, %v103
  %v110 = vadd.f32 %v80, %v108
  %v111 = vadd.f32 %v81, %v109
  %v112 = vrot.slane %v102, 2
  %v113 = vrot.slane %v103, 2
  %114 = vset.pattern.permute.xlu0 5
  %115 = vperm.xlu0 %114, %v42
  %v116 = vpop.permute.xlu0 %115
  %v118 = vmul.f32 %v116, %v112
  %v119 = vmul.f32 %v116, %v113
  %v120 = vadd.f32 %v110, %v118
  %v121 = vadd.f32 %v111, %v119
  %v122 = vrot.slane %v102, 4
  %v123 = vrot.slane %v103, 4
  %124 = vset.pattern.permute.xlu0 6
  %125 = vperm.xlu0 %124, %v42
  %v126 = vpop.permute.xlu0 %125
  %v128 = vmul.f32 %v126, %v122
  %v129 = vmul.f32 %v126, %v123
  %v130 = vadd.f32 %v120, %v128
  %v131 = vadd.f32 %v121, %v129
  %v132 = vrot.slane %v102, 6
  %v133 = vrot.slane %v103, 6
  %134 = vset.pattern.permute.xlu0 7
  %135 = vperm.xlu0 %134, %v42
  %v136 = vpop.permute.xlu0 %135
  %v138 = vmul.f32 %v136, %v132
  %v139 = vmul.f32 %v136, %v133
  %v140 = vadd.f32 %v130, %v138
  %v141 = vadd.f32 %v131, %v139
  %142 = vrot.lane.b32.xlu0 %v17, 15
  %v143 = vpop.permute.xlu0 %142
  %144 = vrot.lane.b32.xlu0 %v18, 15
  %v145 = vpop.permute.xlu0 %144
  %vm146 = vcmp.lt.s32.totalorder %v24, 15
  %v147 = vsel %vm146, %v143, %v145
  %v148 = vsel %vm146, %v145, %v143
  %s149 = scalar_lea.vmem %s3, 2
  %v150 = vld [vmem:[%s149] ss:$8 sm:$0x3]
  %v152 = vlaneseq
  %v153 = vshrl.u32 %v152, 7
  %v154 = vsub.s32 0, %v153
  %v155 = vrot.slane %v150, %v154
  %v156 = vlaneseq
  %v157 = vshrl.u32 %v156, 7
  %v158 = vsub.s32 1, %v157
  %v159 = vrot.slane %v150, %v158
  %v162 = vmul.f32 %v148, %v155
  %v163 = vmul.f32 %v147, %v159
  %164 = vset.pattern.permute.xlu0 8
  %165 = vperm.xlu0 %164, %v42
  %v166 = vpop.permute.xlu0 %165
  %v168 = vmul.f32 %v166, %v162
  %v169 = vmul.f32 %v166, %v163
  %v170 = vadd.f32 %v140, %v168
  %v171 = vadd.f32 %v141, %v169
  %v172 = vrot.slane %v162, 2
  %v173 = vrot.slane %v163, 2
  %174 = vset.pattern.permute.xlu0 9
  %175 = vperm.xlu0 %174, %v42
  %v176 = vpop.permute.xlu0 %175
  %v178 = vmul.f32 %v176, %v172
  %v179 = vmul.f32 %v176, %v173
  %v180 = vadd.f32 %v170, %v178
  %v181 = vadd.f32 %v171, %v179
  %v182 = vrot.slane %v162, 4
  %v183 = vrot.slane %v163, 4
  %184 = vset.pattern.permute.xlu0 10
  %185 = vperm.xlu0 %184, %v42
  %v186 = vpop.permute.xlu0 %185
  %v188 = vmul.f32 %v186, %v182
  %v189 = vmul.f32 %v186, %v183
  %v190 = vadd.f32 %v180, %v188
  %v191 = vadd.f32 %v181, %v189
  %v192 = vrot.slane %v162, 6
  %v193 = vrot.slane %v163, 6
  %194 = vset.pattern.permute.xlu0 11
  %195 = vperm.xlu0 %194, %v42
  %v196 = vpop.permute.xlu0 %195
  %v198 = vmul.f32 %v196, %v192
  %v199 = vmul.f32 %v196, %v193
  %v200 = vadd.f32 %v190, %v198
  %v201 = vadd.f32 %v191, %v199
  %202 = vrot.lane.b32.xlu0 %v17, 1
  %v203 = vpop.permute.xlu0 %202
  %204 = vrot.lane.b32.xlu0 %v18, 1
  %v205 = vpop.permute.xlu0 %204
  %vm206 = vcmp.lt.s32.totalorder %v24, 1
  %v207 = vsel %vm206, %v203, %v205
  %v208 = vsel %vm206, %v205, %v203
  %s209 = scalar_lea.vmem %s3, 3
  %v210 = vld [vmem:[%s209] ss:$8 sm:$0x3]
  %v212 = vlaneseq
  %v213 = vshrl.u32 %v212, 7
  %v214 = vsub.s32 0, %v213
  %v215 = vrot.slane %v210, %v214
  %v216 = vlaneseq
  %v217 = vshrl.u32 %v216, 7
  %v218 = vsub.s32 1, %v217
  %v219 = vrot.slane %v210, %v218
  %v222 = vmul.f32 %v208, %v215
  %v223 = vmul.f32 %v207, %v219
  %224 = vset.pattern.permute.xlu0 12
  %225 = vperm.xlu0 %224, %v42
  %v226 = vpop.permute.xlu0 %225
  %v228 = vmul.f32 %v226, %v222
  %v229 = vmul.f32 %v226, %v223
  %v230 = vadd.f32 %v200, %v228
  %v231 = vadd.f32 %v201, %v229
  %v232 = vrot.slane %v222, 2
  %v233 = vrot.slane %v223, 2
  %234 = vset.pattern.permute.xlu0 13
  %235 = vperm.xlu0 %234, %v42
  %v236 = vpop.permute.xlu0 %235
  %v238 = vmul.f32 %v236, %v232
  %v239 = vmul.f32 %v236, %v233
  %v240 = vadd.f32 %v230, %v238
  %v241 = vadd.f32 %v231, %v239
  %v242 = vrot.slane %v222, 4
  %v243 = vrot.slane %v223, 4
  %244 = vset.pattern.permute.xlu0 14
  %245 = vperm.xlu0 %244, %v42
  %v246 = vpop.permute.xlu0 %245
  %v248 = vmul.f32 %v246, %v242
  %v249 = vmul.f32 %v246, %v243
  %v250 = vadd.f32 %v240, %v248
  %v251 = vadd.f32 %v241, %v249
  %v252 = vrot.slane %v222, 6
  %v253 = vrot.slane %v223, 6
  %254 = vset.pattern.permute.xlu0 15
  %255 = vperm.xlu0 %254, %v42
  %v256 = vpop.permute.xlu0 %255
  %v258 = vmul.f32 %v256, %v252
  %v259 = vmul.f32 %v256, %v253
  %v260 = vadd.f32 %v250, %v258
  %v261 = vadd.f32 %v251, %v259
  %262 = vset.pattern.permute.xlu0 16
  %263 = vperm.xlu0 %262, %v42
  %v264 = vpop.permute.xlu0 %263
  %v266 = vmul.f32 %v264, %v17
  %v267 = vmul.f32 %v264, %v18
  %v268 = vadd.f32 %v260, %v266
  %v269 = vadd.f32 %v261, %v267
  %v270 = vrot.slane %v17, 2
  %v271 = vrot.slane %v18, 2
  %272 = vset.pattern.permute.xlu0 17
  %273 = vperm.xlu0 %272, %v42
  %v274 = vpop.permute.xlu0 %273
  %v276 = vmul.f32 %v274, %v270
  %v277 = vmul.f32 %v274, %v271
  %v278 = vadd.f32 %v268, %v276
  %v279 = vadd.f32 %v269, %v277
  %v280 = vrot.slane %v17, 4
  %v281 = vrot.slane %v18, 4
  %282 = vset.pattern.permute.xlu0 18
  %283 = vperm.xlu0 %282, %v42
  %v284 = vpop.permute.xlu0 %283
  %v286 = vmul.f32 %v284, %v280
  %v287 = vmul.f32 %v284, %v281
  %v288 = vadd.f32 %v278, %v286
  %v289 = vadd.f32 %v279, %v287
  %v290 = vrot.slane %v17, 6
  %v291 = vrot.slane %v18, 6
  %292 = vset.pattern.permute.xlu0 19
  %293 = vperm.xlu0 %292, %v42
  %v294 = vpop.permute.xlu0 %293
  %v296 = vmul.f32 %v294, %v290
  %v297 = vmul.f32 %v294, %v291
  %v298 = vadd.f32 %v288, %v296
  %v299 = vadd.f32 %v289, %v297
  %300 = vrot.lane.b32.xlu0 %v17, 127
  %v301 = vpop.permute.xlu0 %300
  %302 = vrot.lane.b32.xlu0 %v18, 127
  %v303 = vpop.permute.xlu0 %302
  %vm304 = vcmp.lt.s32.totalorder %v24, 127
  %v305 = vsel %vm304, %v301, %v303
  %v306 = vsel %vm304, %v303, %v301
  %s307 = scalar_lea.vmem %s3, 4
  %v308 = vld [vmem:[%s307] ss:$8 sm:$0x3]
  %v310 = vlaneseq
  %v311 = vshrl.u32 %v310, 7
  %v312 = vsub.s32 0, %v311
  %v313 = vrot.slane %v308, %v312
  %v314 = vlaneseq
  %v315 = vshrl.u32 %v314, 7
  %v316 = vsub.s32 1, %v315
  %v317 = vrot.slane %v308, %v316
  %v320 = vmul.f32 %v305, %v313
  %v321 = vmul.f32 %v306, %v317
  %322 = vset.pattern.permute.xlu0 20
  %323 = vperm.xlu0 %322, %v42
  %v324 = vpop.permute.xlu0 %323
  %v326 = vmul.f32 %v324, %v320
  %v327 = vmul.f32 %v324, %v321
  %v328 = vadd.f32 %v298, %v326
  %v329 = vadd.f32 %v299, %v327
  %v330 = vrot.slane %v320, 2
  %v331 = vrot.slane %v321, 2
  %332 = vset.pattern.permute.xlu0 21
  %333 = vperm.xlu0 %332, %v42
  %v334 = vpop.permute.xlu0 %333
  %v336 = vmul.f32 %v334, %v330
  %v337 = vmul.f32 %v334, %v331
  %v338 = vadd.f32 %v328, %v336
  %v339 = vadd.f32 %v329, %v337
  %v340 = vrot.slane %v320, 4
  %v341 = vrot.slane %v321, 4
  %342 = vset.pattern.permute.xlu0 22
  %343 = vperm.xlu0 %342, %v42
  %v344 = vpop.permute.xlu0 %343
  %v346 = vmul.f32 %v344, %v340
  %v347 = vmul.f32 %v344, %v341
  %v348 = vadd.f32 %v338, %v346
  %v349 = vadd.f32 %v339, %v347
  %v350 = vrot.slane %v320, 6
  %v351 = vrot.slane %v321, 6
  %352 = vset.pattern.permute.xlu0 23
  %353 = vperm.xlu0 %352, %v42
  %v354 = vpop.permute.xlu0 %353
  %v356 = vmul.f32 %v354, %v350
  %v357 = vmul.f32 %v354, %v351
  %v358 = vadd.f32 %v348, %v356
  %v359 = vadd.f32 %v349, %v357
  %360 = vrot.lane.b32.xlu0 %v17, 113
  %v361 = vpop.permute.xlu0 %360
  %362 = vrot.lane.b32.xlu0 %v18, 113
  %v363 = vpop.permute.xlu0 %362
  %vm364 = vcmp.lt.s32.totalorder %v24, 113
  %v365 = vsel %vm364, %v361, %v363
  %v366 = vsel %vm364, %v363, %v361
  %s367 = scalar_lea.vmem %s3, 5
  %v368 = vld [vmem:[%s367] ss:$8 sm:$0x3]
  %v370 = vlaneseq
  %v371 = vshrl.u32 %v370, 7
  %v372 = vsub.s32 0, %v371
  %v373 = vrot.slane %v368, %v372
  %v374 = vlaneseq
  %v375 = vshrl.u32 %v374, 7
  %v376 = vsub.s32 1, %v375
  %v377 = vrot.slane %v368, %v376
  %v380 = vmul.f32 %v365, %v373
  %v381 = vmul.f32 %v366, %v377
  %382 = vset.pattern.permute.xlu0 24
  %383 = vperm.xlu0 %382, %v42
  %v384 = vpop.permute.xlu0 %383
  %v386 = vmul.f32 %v384, %v380
  %v387 = vmul.f32 %v384, %v381
  %v388 = vadd.f32 %v358, %v386
  %v389 = vadd.f32 %v359, %v387
  %v390 = vrot.slane %v380, 2
  %v391 = vrot.slane %v381, 2
  %392 = vset.pattern.permute.xlu0 25
  %393 = vperm.xlu0 %392, %v42
  %v394 = vpop.permute.xlu0 %393
  %v396 = vmul.f32 %v394, %v390
  %v397 = vmul.f32 %v394, %v391
  %v398 = vadd.f32 %v388, %v396
  %v399 = vadd.f32 %v389, %v397
  %v400 = vrot.slane %v380, 4
  %v401 = vrot.slane %v381, 4
  %402 = vset.pattern.permute.xlu0 26
  %403 = vperm.xlu0 %402, %v42
  %v404 = vpop.permute.xlu0 %403
  %v406 = vmul.f32 %v404, %v400
  %v407 = vmul.f32 %v404, %v401
  %v408 = vadd.f32 %v398, %v406
  %v409 = vadd.f32 %v399, %v407
  %v410 = vrot.slane %v380, 6
  %v411 = vrot.slane %v381, 6
  %412 = vset.pattern.permute.xlu0 27
  %413 = vperm.xlu0 %412, %v42
  %v414 = vpop.permute.xlu0 %413
  %v416 = vmul.f32 %v414, %v410
  %v417 = vmul.f32 %v414, %v411
  %v418 = vadd.f32 %v408, %v416
  %v419 = vadd.f32 %v409, %v417
  %420 = vrot.lane.b32.xlu0 %v17, 112
  %v421 = vpop.permute.xlu0 %420
  %422 = vrot.lane.b32.xlu0 %v18, 112
  %v423 = vpop.permute.xlu0 %422
  %vm424 = vcmp.lt.s32.totalorder %v24, 112
  %v425 = vsel %vm424, %v421, %v423
  %v426 = vsel %vm424, %v423, %v421
  %s427 = scalar_lea.vmem %s3, 6
  %v428 = vld [vmem:[%s427] ss:$8 sm:$0x3]
  %v430 = vlaneseq
  %v431 = vshrl.u32 %v430, 7
  %v432 = vsub.s32 0, %v431
  %v433 = vrot.slane %v428, %v432
  %v434 = vlaneseq
  %v435 = vshrl.u32 %v434, 7
  %v436 = vsub.s32 1, %v435
  %v437 = vrot.slane %v428, %v436
  %v440 = vmul.f32 %v425, %v433
  %v441 = vmul.f32 %v426, %v437
  %442 = vset.pattern.permute.xlu0 28
  %443 = vperm.xlu0 %442, %v42
  %v444 = vpop.permute.xlu0 %443
  %v446 = vmul.f32 %v444, %v440
  %v447 = vmul.f32 %v444, %v441
  %v448 = vadd.f32 %v418, %v446
  %v449 = vadd.f32 %v419, %v447
  %v450 = vrot.slane %v440, 2
  %v451 = vrot.slane %v441, 2
  %452 = vset.pattern.permute.xlu0 29
  %453 = vperm.xlu0 %452, %v42
  %v454 = vpop.permute.xlu0 %453
  %v456 = vmul.f32 %v454, %v450
  %v457 = vmul.f32 %v454, %v451
  %v458 = vadd.f32 %v448, %v456
  %v459 = vadd.f32 %v449, %v457
  %v460 = vrot.slane %v440, 4
  %v461 = vrot.slane %v441, 4
  %462 = vset.pattern.permute.xlu0 30
  %463 = vperm.xlu0 %462, %v42
  %v464 = vpop.permute.xlu0 %463
  %v466 = vmul.f32 %v464, %v460
  %v467 = vmul.f32 %v464, %v461
  %v468 = vadd.f32 %v458, %v466
  %v469 = vadd.f32 %v459, %v467
  %v470 = vrot.slane %v440, 6
  %v471 = vrot.slane %v441, 6
  %472 = vset.pattern.permute.xlu0 31
  %473 = vperm.xlu0 %472, %v42
  %v474 = vpop.permute.xlu0 %473
  %v476 = vmul.f32 %v474, %v470
  %v477 = vmul.f32 %v474, %v471
  %v478 = vadd.f32 %v468, %v476
  %v479 = vadd.f32 %v469, %v477
  %480 = vrot.lane.b32.xlu0 %v17, 111
  %v481 = vpop.permute.xlu0 %480
  %482 = vrot.lane.b32.xlu0 %v18, 111
  %v483 = vpop.permute.xlu0 %482
  %vm484 = vcmp.lt.s32.totalorder %v24, 111
  %v485 = vsel %vm484, %v481, %v483
  %v486 = vsel %vm484, %v483, %v481
  %s487 = scalar_lea.vmem %s3, 7
  %v488 = vld [vmem:[%s487] ss:$8 sm:$0x3]
  %v490 = vlaneseq
  %v491 = vshrl.u32 %v490, 7
  %v492 = vsub.s32 0, %v491
  %v493 = vrot.slane %v488, %v492
  %v494 = vlaneseq
  %v495 = vshrl.u32 %v494, 7
  %v496 = vsub.s32 1, %v495
  %v497 = vrot.slane %v488, %v496
  %v500 = vmul.f32 %v485, %v493
  %v501 = vmul.f32 %v486, %v497
  %502 = vset.pattern.permute.xlu0 32
  %503 = vperm.xlu0 %502, %v42
  %v504 = vpop.permute.xlu0 %503
  %v506 = vmul.f32 %v504, %v500
  %v507 = vmul.f32 %v504, %v501
  %v508 = vadd.f32 %v478, %v506
  %v509 = vadd.f32 %v479, %v507
  %v510 = vrot.slane %v500, 2
  %v511 = vrot.slane %v501, 2
  %512 = vset.pattern.permute.xlu0 33
  %513 = vperm.xlu0 %512, %v42
  %v514 = vpop.permute.xlu0 %513
  %v516 = vmul.f32 %v514, %v510
  %v517 = vmul.f32 %v514, %v511
  %v518 = vadd.f32 %v508, %v516
  %v519 = vadd.f32 %v509, %v517
  %v520 = vrot.slane %v500, 4
  %v521 = vrot.slane %v501, 4
  %522 = vset.pattern.permute.xlu0 34
  %523 = vperm.xlu0 %522, %v42
  %v524 = vpop.permute.xlu0 %523
  %v526 = vmul.f32 %v524, %v520
  %v527 = vmul.f32 %v524, %v521
  %v528 = vadd.f32 %v518, %v526
  %v529 = vadd.f32 %v519, %v527
  %v530 = vrot.slane %v500, 6
  %v531 = vrot.slane %v501, 6
  %532 = vset.pattern.permute.xlu0 35
  %533 = vperm.xlu0 %532, %v42
  %v534 = vpop.permute.xlu0 %533
  %v536 = vmul.f32 %v534, %v530
  %v537 = vmul.f32 %v534, %v531
  %v538 = vadd.f32 %v528, %v536
  %v539 = vadd.f32 %v529, %v537
  %v540 = vld [vmem:[%s2] sm:$0xff]
  %542 = vset.pattern.permute.xlu0 0
  %543 = vperm.xlu0 %542, %v540
  %v544 = vpop.permute.xlu0 %543
  %v546 = vadd.f32 %v538, %v544
  %v547 = vadd.f32 %v539, %v544
  %v548 = vmul.f32 %v546, 0.70710677
  %v549 = vmul.f32 %v547, 0.70710677
  %v550 = vand.u32 2147483647, %v548
  %v551 = vand.u32 2147483647, %v549
  %v552 = vmul.f32 %v550, 0.3275911
  %v553 = vmul.f32 %v551, 0.3275911
  %v554 = vadd.f32 %v552, 1.0
  %v555 = vadd.f32 %v553, 1.0
  %v556 = vrcp.pop %v554
  %v557 = vmul.f32 1.0, %v556
  %v558 = vrcp.pop %v555
  %v559 = vmul.f32 1.0, %v558
  %v560 = vmul.f32 %v557, 1.0614054
  %v561 = vmul.f32 %v559, 1.0614054
  %v562 = vadd.f32 %v560, -1.4531521
  %v563 = vadd.f32 %v561, -1.4531521
  %v564 = vmul.f32 %v562, %v557
  %v565 = vmul.f32 %v563, %v559
  %v566 = vadd.f32 %v564, 1.4214138
  %v567 = vadd.f32 %v565, 1.4214138
  %v568 = vmul.f32 %v566, %v557
  %v569 = vmul.f32 %v567, %v559
  %v570 = vadd.f32 %v568, -0.28449672
  %v571 = vadd.f32 %v569, -0.28449672
  %v572 = vmul.f32 %v570, %v557
  %v573 = vmul.f32 %v571, %v559
  %v574 = vadd.f32 %v572, 0.2548296
  %v575 = vadd.f32 %v573, 0.2548296
  %v576 = vmul.f32 %v574, %v557
  %v577 = vmul.f32 %v575, %v559
  %v578 = vmul.f32 %v550, %v550
  %v579 = vmul.f32 %v551, %v551
  %v580 = vsub.f32 0.0, %v578
  %v581 = vsub.f32 0.0, %v579
  %v582 = vmul.f32 %v580, 1.442695
  %v583 = vpow.pop %v582
  %v584 = vmul.f32 %v581, 1.442695
  %v585 = vpow.pop %v584
  %v586 = vmul.f32 %v576, %v583
  %v587 = vmul.f32 %v577, %v585
  %v588 = vsub.f32 1.0, %v586
  %v589 = vsub.f32 1.0, %v587
  %vm590 = vcmp.lt.f32.partialorder %v548, 0.0
  %vm591 = vcmp.lt.f32.partialorder %v549, 0.0
  %v592 = vsub.f32 0.0, %v588
  %v593 = vsub.f32 0.0, %v589
  %v594 = vsel %vm590, %v592, %v588
  %v595 = vsel %vm591, %v593, %v589
  %v596 = vmul.f32 %v546, 0.5
  %v597 = vmul.f32 %v547, 0.5
  %v598 = vadd.f32 %v594, 1.0
  %v599 = vadd.f32 %v595, 1.0
  %v600 = vmul.f32 %v596, %v598
  %v601 = vmul.f32 %v597, %v599
  %602 = vrot.lane.b32.xlu0 %v600, 34
  %v603 = vpop.permute.xlu0 %602
  %604 = vrot.lane.b32.xlu0 %v601, 34
  %v605 = vpop.permute.xlu0 %604
  %vm606 = vcmp.lt.s32.totalorder %v24, 34
  %v607 = vsel %vm606, %v603, %v605
  %v608 = vsel %vm606, %v605, %v603
  %s609 = scalar_lea.vmem %s3, 16
  %v610 = vld [vmem:[%s609] ss:$8 sm:$0x3]
  %v612 = vlaneseq
  %v613 = vshrl.u32 %v612, 7
  %v614 = vsub.s32 0, %v613
  %v615 = vrot.slane %v610, %v614
  %v616 = vlaneseq
  %v617 = vshrl.u32 %v616, 7
  %v618 = vsub.s32 1, %v617
  %v619 = vrot.slane %v610, %v618
  %v622 = vmul.f32 %v608, %v615
  %v623 = vmul.f32 %v607, %v619
  %624 = vset.pattern.permute.xlu0 36
  %625 = vperm.xlu0 %624, %v42
  %v626 = vpop.permute.xlu0 %625
  %v628 = vmul.f32 %v626, %v622
  %v629 = vmul.f32 %v626, %v623
  %v630 = vadd.f32 %v628, 0.0
  %v631 = vadd.f32 %v629, 0.0
  %v632 = vrot.slane %v622, 2
  %v633 = vrot.slane %v623, 2
  %634 = vset.pattern.permute.xlu0 37
  %635 = vperm.xlu0 %634, %v42
  %v636 = vpop.permute.xlu0 %635
  %v638 = vmul.f32 %v636, %v632
  %v639 = vmul.f32 %v636, %v633
  %v640 = vadd.f32 %v630, %v638
  %v641 = vadd.f32 %v631, %v639
  %v642 = vrot.slane %v622, 4
  %v643 = vrot.slane %v623, 4
  %644 = vset.pattern.permute.xlu0 38
  %645 = vperm.xlu0 %644, %v42
  %v646 = vpop.permute.xlu0 %645
  %v648 = vmul.f32 %v646, %v642
  %v649 = vmul.f32 %v646, %v643
  %v650 = vadd.f32 %v640, %v648
  %v651 = vadd.f32 %v641, %v649
  %v652 = vrot.slane %v622, 6
  %v653 = vrot.slane %v623, 6
  %654 = vset.pattern.permute.xlu0 39
  %655 = vperm.xlu0 %654, %v42
  %v656 = vpop.permute.xlu0 %655
  %v658 = vmul.f32 %v656, %v652
  %v659 = vmul.f32 %v656, %v653
  %v660 = vadd.f32 %v650, %v658
  %v661 = vadd.f32 %v651, %v659
  %662 = vrot.lane.b32.xlu0 %v600, 32
  %v663 = vpop.permute.xlu0 %662
  %664 = vrot.lane.b32.xlu0 %v601, 32
  %v665 = vpop.permute.xlu0 %664
  %vm666 = vcmp.lt.s32.totalorder %v24, 32
  %v667 = vsel %vm666, %v663, %v665
  %v668 = vsel %vm666, %v665, %v663
  %s669 = scalar_lea.vmem %s3, 17
  %v670 = vld [vmem:[%s669] ss:$8 sm:$0x3]
  %v672 = vlaneseq
  %v673 = vshrl.u32 %v672, 7
  %v674 = vsub.s32 0, %v673
  %v675 = vrot.slane %v670, %v674
  %v676 = vlaneseq
  %v677 = vshrl.u32 %v676, 7
  %v678 = vsub.s32 1, %v677
  %v679 = vrot.slane %v670, %v678
  %v682 = vmul.f32 %v668, %v675
  %v683 = vmul.f32 %v667, %v679
  %684 = vset.pattern.permute.xlu0 40
  %685 = vperm.xlu0 %684, %v42
  %v686 = vpop.permute.xlu0 %685
  %v688 = vmul.f32 %v686, %v682
  %v689 = vmul.f32 %v686, %v683
  %v690 = vadd.f32 %v660, %v688
  %v691 = vadd.f32 %v661, %v689
  %v692 = vrot.slane %v682, 2
  %v693 = vrot.slane %v683, 2
  %694 = vset.pattern.permute.xlu0 41
  %695 = vperm.xlu0 %694, %v42
  %v696 = vpop.permute.xlu0 %695
  %v698 = vmul.f32 %v696, %v692
  %v699 = vmul.f32 %v696, %v693
  %v700 = vadd.f32 %v690, %v698
  %v701 = vadd.f32 %v691, %v699
  %v702 = vrot.slane %v682, 4
  %v703 = vrot.slane %v683, 4
  %704 = vset.pattern.permute.xlu0 42
  %705 = vperm.xlu0 %704, %v42
  %v706 = vpop.permute.xlu0 %705
  %v708 = vmul.f32 %v706, %v702
  %v709 = vmul.f32 %v706, %v703
  %v710 = vadd.f32 %v700, %v708
  %v711 = vadd.f32 %v701, %v709
  %v712 = vrot.slane %v682, 6
  %v713 = vrot.slane %v683, 6
  %714 = vset.pattern.permute.xlu0 43
  %715 = vperm.xlu0 %714, %v42
  %v716 = vpop.permute.xlu0 %715
  %v718 = vmul.f32 %v716, %v712
  %v719 = vmul.f32 %v716, %v713
  %v720 = vadd.f32 %v710, %v718
  %v721 = vadd.f32 %v711, %v719
  %722 = vrot.lane.b32.xlu0 %v600, 30
  %v723 = vpop.permute.xlu0 %722
  %724 = vrot.lane.b32.xlu0 %v601, 30
  %v725 = vpop.permute.xlu0 %724
  %vm726 = vcmp.lt.s32.totalorder %v24, 30
  %v727 = vsel %vm726, %v723, %v725
  %v728 = vsel %vm726, %v725, %v723
  %s729 = scalar_lea.vmem %s3, 18
  %v730 = vld [vmem:[%s729] ss:$8 sm:$0x3]
  %v732 = vlaneseq
  %v733 = vshrl.u32 %v732, 7
  %v734 = vsub.s32 0, %v733
  %v735 = vrot.slane %v730, %v734
  %v736 = vlaneseq
  %v737 = vshrl.u32 %v736, 7
  %v738 = vsub.s32 1, %v737
  %v739 = vrot.slane %v730, %v738
  %v742 = vmul.f32 %v728, %v735
  %v743 = vmul.f32 %v727, %v739
  %744 = vset.pattern.permute.xlu0 44
  %745 = vperm.xlu0 %744, %v42
  %v746 = vpop.permute.xlu0 %745
  %v748 = vmul.f32 %v746, %v742
  %v749 = vmul.f32 %v746, %v743
  %v750 = vadd.f32 %v720, %v748
  %v751 = vadd.f32 %v721, %v749
  %v752 = vrot.slane %v742, 2
  %v753 = vrot.slane %v743, 2
  %754 = vset.pattern.permute.xlu0 45
  %755 = vperm.xlu0 %754, %v42
  %v756 = vpop.permute.xlu0 %755
  %v758 = vmul.f32 %v756, %v752
  %v759 = vmul.f32 %v756, %v753
  %v760 = vadd.f32 %v750, %v758
  %v761 = vadd.f32 %v751, %v759
  %v762 = vrot.slane %v742, 4
  %v763 = vrot.slane %v743, 4
  %764 = vset.pattern.permute.xlu0 46
  %765 = vperm.xlu0 %764, %v42
  %v766 = vpop.permute.xlu0 %765
  %v768 = vmul.f32 %v766, %v762
  %v769 = vmul.f32 %v766, %v763
  %v770 = vadd.f32 %v760, %v768
  %v771 = vadd.f32 %v761, %v769
  %v772 = vrot.slane %v742, 6
  %v773 = vrot.slane %v743, 6
  %774 = vset.pattern.permute.xlu0 47
  %775 = vperm.xlu0 %774, %v42
  %v776 = vpop.permute.xlu0 %775
  %v778 = vmul.f32 %v776, %v772
  %v779 = vmul.f32 %v776, %v773
  %v780 = vadd.f32 %v770, %v778
  %v781 = vadd.f32 %v771, %v779
  %782 = vrot.lane.b32.xlu0 %v600, 2
  %v783 = vpop.permute.xlu0 %782
  %784 = vrot.lane.b32.xlu0 %v601, 2
  %v785 = vpop.permute.xlu0 %784
  %vm786 = vcmp.lt.s32.totalorder %v24, 2
  %v787 = vsel %vm786, %v783, %v785
  %v788 = vsel %vm786, %v785, %v783
  %s789 = scalar_lea.vmem %s3, 19
  %v790 = vld [vmem:[%s789] ss:$8 sm:$0x3]
  %v792 = vlaneseq
  %v793 = vshrl.u32 %v792, 7
  %v794 = vsub.s32 0, %v793
  %v795 = vrot.slane %v790, %v794
  %v796 = vlaneseq
  %v797 = vshrl.u32 %v796, 7
  %v798 = vsub.s32 1, %v797
  %v799 = vrot.slane %v790, %v798
  %v802 = vmul.f32 %v788, %v795
  %v803 = vmul.f32 %v787, %v799
  %804 = vset.pattern.permute.xlu0 48
  %805 = vperm.xlu0 %804, %v42
  %v806 = vpop.permute.xlu0 %805
  %v808 = vmul.f32 %v806, %v802
  %v809 = vmul.f32 %v806, %v803
  %v810 = vadd.f32 %v780, %v808
  %v811 = vadd.f32 %v781, %v809
  %v812 = vrot.slane %v802, 2
  %v813 = vrot.slane %v803, 2
  %814 = vset.pattern.permute.xlu0 49
  %815 = vperm.xlu0 %814, %v42
  %v816 = vpop.permute.xlu0 %815
  %v818 = vmul.f32 %v816, %v812
  %v819 = vmul.f32 %v816, %v813
  %v820 = vadd.f32 %v810, %v818
  %v821 = vadd.f32 %v811, %v819
  %v822 = vrot.slane %v802, 4
  %v823 = vrot.slane %v803, 4
  %824 = vset.pattern.permute.xlu0 50
  %825 = vperm.xlu0 %824, %v42
  %v826 = vpop.permute.xlu0 %825
  %v828 = vmul.f32 %v826, %v822
  %v829 = vmul.f32 %v826, %v823
  %v830 = vadd.f32 %v820, %v828
  %v831 = vadd.f32 %v821, %v829
  %v832 = vrot.slane %v802, 6
  %v833 = vrot.slane %v803, 6
  %834 = vset.pattern.permute.xlu0 51
  %835 = vperm.xlu0 %834, %v42
  %v836 = vpop.permute.xlu0 %835
  %v838 = vmul.f32 %v836, %v832
  %v839 = vmul.f32 %v836, %v833
  %v840 = vadd.f32 %v830, %v838
  %v841 = vadd.f32 %v831, %v839
  %842 = vset.pattern.permute.xlu0 52
  %843 = vperm.xlu0 %842, %v42
  %v844 = vpop.permute.xlu0 %843
  %v846 = vmul.f32 %v844, %v600
  %v847 = vmul.f32 %v844, %v601
  %v848 = vadd.f32 %v840, %v846
  %v849 = vadd.f32 %v841, %v847
  %v850 = vrot.slane %v600, 2
  %v851 = vrot.slane %v601, 2
  %852 = vset.pattern.permute.xlu0 53
  %853 = vperm.xlu0 %852, %v42
  %v854 = vpop.permute.xlu0 %853
  %v856 = vmul.f32 %v854, %v850
  %v857 = vmul.f32 %v854, %v851
  %v858 = vadd.f32 %v848, %v856
  %v859 = vadd.f32 %v849, %v857
  %v860 = vrot.slane %v600, 4
  %v861 = vrot.slane %v601, 4
  %862 = vset.pattern.permute.xlu0 54
  %863 = vperm.xlu0 %862, %v42
  %v864 = vpop.permute.xlu0 %863
  %v866 = vmul.f32 %v864, %v860
  %v867 = vmul.f32 %v864, %v861
  %v868 = vadd.f32 %v858, %v866
  %v869 = vadd.f32 %v859, %v867
  %v870 = vrot.slane %v600, 6
  %v871 = vrot.slane %v601, 6
  %872 = vset.pattern.permute.xlu0 55
  %873 = vperm.xlu0 %872, %v42
  %v874 = vpop.permute.xlu0 %873
  %v876 = vmul.f32 %v874, %v870
  %v877 = vmul.f32 %v874, %v871
  %v878 = vadd.f32 %v868, %v876
  %v879 = vadd.f32 %v869, %v877
  %880 = vrot.lane.b32.xlu0 %v600, 126
  %v881 = vpop.permute.xlu0 %880
  %882 = vrot.lane.b32.xlu0 %v601, 126
  %v883 = vpop.permute.xlu0 %882
  %vm884 = vcmp.lt.s32.totalorder %v24, 126
  %v885 = vsel %vm884, %v881, %v883
  %v886 = vsel %vm884, %v883, %v881
  %s887 = scalar_lea.vmem %s3, 20
  %v888 = vld [vmem:[%s887] ss:$8 sm:$0x3]
  %v890 = vlaneseq
  %v891 = vshrl.u32 %v890, 7
  %v892 = vsub.s32 0, %v891
  %v893 = vrot.slane %v888, %v892
  %v894 = vlaneseq
  %v895 = vshrl.u32 %v894, 7
  %v896 = vsub.s32 1, %v895
  %v897 = vrot.slane %v888, %v896
  %v900 = vmul.f32 %v885, %v893
  %v901 = vmul.f32 %v886, %v897
  %902 = vset.pattern.permute.xlu0 56
  %903 = vperm.xlu0 %902, %v42
  %v904 = vpop.permute.xlu0 %903
  %v906 = vmul.f32 %v904, %v900
  %v907 = vmul.f32 %v904, %v901
  %v908 = vadd.f32 %v878, %v906
  %v909 = vadd.f32 %v879, %v907
  %v910 = vrot.slane %v900, 2
  %v911 = vrot.slane %v901, 2
  %912 = vset.pattern.permute.xlu0 57
  %913 = vperm.xlu0 %912, %v42
  %v914 = vpop.permute.xlu0 %913
  %v916 = vmul.f32 %v914, %v910
  %v917 = vmul.f32 %v914, %v911
  %v918 = vadd.f32 %v908, %v916
  %v919 = vadd.f32 %v909, %v917
  %v920 = vrot.slane %v900, 4
  %v921 = vrot.slane %v901, 4
  %922 = vset.pattern.permute.xlu0 58
  %923 = vperm.xlu0 %922, %v42
  %v924 = vpop.permute.xlu0 %923
  %v926 = vmul.f32 %v924, %v920
  %v927 = vmul.f32 %v924, %v921
  %v928 = vadd.f32 %v918, %v926
  %v929 = vadd.f32 %v919, %v927
  %v930 = vrot.slane %v900, 6
  %v931 = vrot.slane %v901, 6
  %932 = vset.pattern.permute.xlu0 59
  %933 = vperm.xlu0 %932, %v42
  %v934 = vpop.permute.xlu0 %933
  %v936 = vmul.f32 %v934, %v930
  %v937 = vmul.f32 %v934, %v931
  %v938 = vadd.f32 %v928, %v936
  %v939 = vadd.f32 %v929, %v937
  %940 = vrot.lane.b32.xlu0 %v600, 98
  %v941 = vpop.permute.xlu0 %940
  %942 = vrot.lane.b32.xlu0 %v601, 98
  %v943 = vpop.permute.xlu0 %942
  %vm944 = vcmp.lt.s32.totalorder %v24, 98
  %v945 = vsel %vm944, %v941, %v943
  %v946 = vsel %vm944, %v943, %v941
  %s947 = scalar_lea.vmem %s3, 21
  %v948 = vld [vmem:[%s947] ss:$8 sm:$0x3]
  %v950 = vlaneseq
  %v951 = vshrl.u32 %v950, 7
  %v952 = vsub.s32 0, %v951
  %v953 = vrot.slane %v948, %v952
  %v954 = vlaneseq
  %v955 = vshrl.u32 %v954, 7
  %v956 = vsub.s32 1, %v955
  %v957 = vrot.slane %v948, %v956
  %v960 = vmul.f32 %v945, %v953
  %v961 = vmul.f32 %v946, %v957
  %962 = vset.pattern.permute.xlu0 60
  %963 = vperm.xlu0 %962, %v42
  %v964 = vpop.permute.xlu0 %963
  %v966 = vmul.f32 %v964, %v960
  %v967 = vmul.f32 %v964, %v961
  %v968 = vadd.f32 %v938, %v966
  %v969 = vadd.f32 %v939, %v967
  %v970 = vrot.slane %v960, 2
  %v971 = vrot.slane %v961, 2
  %972 = vset.pattern.permute.xlu0 61
  %973 = vperm.xlu0 %972, %v42
  %v974 = vpop.permute.xlu0 %973
  %v976 = vmul.f32 %v974, %v970
  %v977 = vmul.f32 %v974, %v971
  %v978 = vadd.f32 %v968, %v976
  %v979 = vadd.f32 %v969, %v977
  %v980 = vrot.slane %v960, 4
  %v981 = vrot.slane %v961, 4
  %982 = vset.pattern.permute.xlu0 62
  %983 = vperm.xlu0 %982, %v42
  %v984 = vpop.permute.xlu0 %983
  %v986 = vmul.f32 %v984, %v980
  %v987 = vmul.f32 %v984, %v981
  %v988 = vadd.f32 %v978, %v986
  %v989 = vadd.f32 %v979, %v987
  %v990 = vrot.slane %v960, 6
  %v991 = vrot.slane %v961, 6
  %992 = vset.pattern.permute.xlu0 63
  %993 = vperm.xlu0 %992, %v42
  %v994 = vpop.permute.xlu0 %993
  %v996 = vmul.f32 %v994, %v990
  %v997 = vmul.f32 %v994, %v991
  %v998 = vadd.f32 %v988, %v996
  %v999 = vadd.f32 %v989, %v997
  %1000 = vrot.lane.b32.xlu0 %v600, 96
  %v1001 = vpop.permute.xlu0 %1000
  %1002 = vrot.lane.b32.xlu0 %v601, 96
  %v1003 = vpop.permute.xlu0 %1002
  %vm1004 = vcmp.lt.s32.totalorder %v24, 96
  %v1005 = vsel %vm1004, %v1001, %v1003
  %v1006 = vsel %vm1004, %v1003, %v1001
  %s1007 = scalar_lea.vmem %s3, 22
  %v1008 = vld [vmem:[%s1007] ss:$8 sm:$0x3]
  %v1010 = vlaneseq
  %v1011 = vshrl.u32 %v1010, 7
  %v1012 = vsub.s32 0, %v1011
  %v1013 = vrot.slane %v1008, %v1012
  %v1014 = vlaneseq
  %v1015 = vshrl.u32 %v1014, 7
  %v1016 = vsub.s32 1, %v1015
  %v1017 = vrot.slane %v1008, %v1016
  %v1020 = vmul.f32 %v1005, %v1013
  %v1021 = vmul.f32 %v1006, %v1017
  %1022 = vset.pattern.permute.xlu0 64
  %1023 = vperm.xlu0 %1022, %v42
  %v1024 = vpop.permute.xlu0 %1023
  %v1026 = vmul.f32 %v1024, %v1020
  %v1027 = vmul.f32 %v1024, %v1021
  %v1028 = vadd.f32 %v998, %v1026
  %v1029 = vadd.f32 %v999, %v1027
  %v1030 = vrot.slane %v1020, 2
  %v1031 = vrot.slane %v1021, 2
  %1032 = vset.pattern.permute.xlu0 65
  %1033 = vperm.xlu0 %1032, %v42
  %v1034 = vpop.permute.xlu0 %1033
  %v1036 = vmul.f32 %v1034, %v1030
  %v1037 = vmul.f32 %v1034, %v1031
  %v1038 = vadd.f32 %v1028, %v1036
  %v1039 = vadd.f32 %v1029, %v1037
  %v1040 = vrot.slane %v1020, 4
  %v1041 = vrot.slane %v1021, 4
  %1042 = vset.pattern.permute.xlu0 66
  %1043 = vperm.xlu0 %1042, %v42
  %v1044 = vpop.permute.xlu0 %1043
  %v1046 = vmul.f32 %v1044, %v1040
  %v1047 = vmul.f32 %v1044, %v1041
  %v1048 = vadd.f32 %v1038, %v1046
  %v1049 = vadd.f32 %v1039, %v1047
  %v1050 = vrot.slane %v1020, 6
  %v1051 = vrot.slane %v1021, 6
  %1052 = vset.pattern.permute.xlu0 67
  %1053 = vperm.xlu0 %1052, %v42
  %v1054 = vpop.permute.xlu0 %1053
  %v1056 = vmul.f32 %v1054, %v1050
  %v1057 = vmul.f32 %v1054, %v1051
  %v1058 = vadd.f32 %v1048, %v1056
  %v1059 = vadd.f32 %v1049, %v1057
  %1060 = vrot.lane.b32.xlu0 %v600, 94
  %v1061 = vpop.permute.xlu0 %1060
  %1062 = vrot.lane.b32.xlu0 %v601, 94
  %v1063 = vpop.permute.xlu0 %1062
  %vm1064 = vcmp.lt.s32.totalorder %v24, 94
  %v1065 = vsel %vm1064, %v1061, %v1063
  %v1066 = vsel %vm1064, %v1063, %v1061
  %s1067 = scalar_lea.vmem %s3, 23
  %v1068 = vld [vmem:[%s1067] ss:$8 sm:$0x3]
  %v1070 = vlaneseq
  %v1071 = vshrl.u32 %v1070, 7
  %v1072 = vsub.s32 0, %v1071
  %v1073 = vrot.slane %v1068, %v1072
  %v1074 = vlaneseq
  %v1075 = vshrl.u32 %v1074, 7
  %v1076 = vsub.s32 1, %v1075
  %v1077 = vrot.slane %v1068, %v1076
  %v1080 = vmul.f32 %v1065, %v1073
  %v1081 = vmul.f32 %v1066, %v1077
  %1082 = vset.pattern.permute.xlu0 68
  %1083 = vperm.xlu0 %1082, %v42
  %v1084 = vpop.permute.xlu0 %1083
  %v1086 = vmul.f32 %v1084, %v1080
  %v1087 = vmul.f32 %v1084, %v1081
  %v1088 = vadd.f32 %v1058, %v1086
  %v1089 = vadd.f32 %v1059, %v1087
  %v1090 = vrot.slane %v1080, 2
  %v1091 = vrot.slane %v1081, 2
  %1092 = vset.pattern.permute.xlu0 69
  %1093 = vperm.xlu0 %1092, %v42
  %v1094 = vpop.permute.xlu0 %1093
  %v1096 = vmul.f32 %v1094, %v1090
  %v1097 = vmul.f32 %v1094, %v1091
  %v1098 = vadd.f32 %v1088, %v1096
  %v1099 = vadd.f32 %v1089, %v1097
  %v1100 = vrot.slane %v1080, 4
  %v1101 = vrot.slane %v1081, 4
  %1102 = vset.pattern.permute.xlu0 70
  %1103 = vperm.xlu0 %1102, %v42
  %v1104 = vpop.permute.xlu0 %1103
  %v1106 = vmul.f32 %v1104, %v1100
  %v1107 = vmul.f32 %v1104, %v1101
  %v1108 = vadd.f32 %v1098, %v1106
  %v1109 = vadd.f32 %v1099, %v1107
  %v1110 = vrot.slane %v1080, 6
  %v1111 = vrot.slane %v1081, 6
  %1112 = vset.pattern.permute.xlu0 71
  %1113 = vperm.xlu0 %1112, %v42
  %v1114 = vpop.permute.xlu0 %1113
  %v1116 = vmul.f32 %v1114, %v1110
  %v1117 = vmul.f32 %v1114, %v1111
  %v1118 = vadd.f32 %v1108, %v1116
  %v1119 = vadd.f32 %v1109, %v1117
  %1120 = vset.pattern.permute.xlu0 1
  %1121 = vperm.xlu0 %1120, %v540
  %v1122 = vpop.permute.xlu0 %1121
  %v1124 = vadd.f32 %v1118, %v1122
  %v1125 = vadd.f32 %v1119, %v1122
  %v1126 = vmul.f32 %v1124, 0.70710677
  %v1127 = vmul.f32 %v1125, 0.70710677
  %v1128 = vand.u32 2147483647, %v1126
  %v1129 = vand.u32 2147483647, %v1127
  %v1130 = vmul.f32 %v1128, 0.3275911
  %v1131 = vmul.f32 %v1129, 0.3275911
  %v1132 = vadd.f32 %v1130, 1.0
  %v1133 = vadd.f32 %v1131, 1.0
  %v1134 = vrcp.pop %v1132
  %v1135 = vmul.f32 1.0, %v1134
  %v1136 = vrcp.pop %v1133
  %v1137 = vmul.f32 1.0, %v1136
  %v1138 = vmul.f32 %v1135, 1.0614054
  %v1139 = vmul.f32 %v1137, 1.0614054
  %v1140 = vadd.f32 %v1138, -1.4531521
  %v1141 = vadd.f32 %v1139, -1.4531521
  %v1142 = vmul.f32 %v1140, %v1135
  %v1143 = vmul.f32 %v1141, %v1137
  %v1144 = vadd.f32 %v1142, 1.4214138
  %v1145 = vadd.f32 %v1143, 1.4214138
  %v1146 = vmul.f32 %v1144, %v1135
  %v1147 = vmul.f32 %v1145, %v1137
  %v1148 = vadd.f32 %v1146, -0.28449672
  %v1149 = vadd.f32 %v1147, -0.28449672
  %v1150 = vmul.f32 %v1148, %v1135
  %v1151 = vmul.f32 %v1149, %v1137
  %v1152 = vadd.f32 %v1150, 0.2548296
  %v1153 = vadd.f32 %v1151, 0.2548296
  %v1154 = vmul.f32 %v1152, %v1135
  %v1155 = vmul.f32 %v1153, %v1137
  %v1156 = vmul.f32 %v1128, %v1128
  %v1157 = vmul.f32 %v1129, %v1129
  %v1158 = vsub.f32 0.0, %v1156
  %v1159 = vsub.f32 0.0, %v1157
  %v1160 = vmul.f32 %v1158, 1.442695
  %v1161 = vpow.pop %v1160
  %v1162 = vmul.f32 %v1159, 1.442695
  %v1163 = vpow.pop %v1162
  %v1164 = vmul.f32 %v1154, %v1161
  %v1165 = vmul.f32 %v1155, %v1163
  %v1166 = vsub.f32 1.0, %v1164
  %v1167 = vsub.f32 1.0, %v1165
  %vm1168 = vcmp.lt.f32.partialorder %v1126, 0.0
  %vm1169 = vcmp.lt.f32.partialorder %v1127, 0.0
  %v1170 = vsub.f32 0.0, %v1166
  %v1171 = vsub.f32 0.0, %v1167
  %v1172 = vsel %vm1168, %v1170, %v1166
  %v1173 = vsel %vm1169, %v1171, %v1167
  %v1174 = vmul.f32 %v1124, 0.5
  %v1175 = vmul.f32 %v1125, 0.5
  %v1176 = vadd.f32 %v1172, 1.0
  %v1177 = vadd.f32 %v1173, 1.0
  %v1178 = vmul.f32 %v1174, %v1176
  %v1179 = vmul.f32 %v1175, %v1177
  %1180 = vrot.lane.b32.xlu0 %v1178, 68
  %v1181 = vpop.permute.xlu0 %1180
  %1182 = vrot.lane.b32.xlu0 %v1179, 68
  %v1183 = vpop.permute.xlu0 %1182
  %vm1184 = vcmp.lt.s32.totalorder %v24, 68
  %v1185 = vsel %vm1184, %v1181, %v1183
  %v1186 = vsel %vm1184, %v1183, %v1181
  %s1187 = scalar_lea.vmem %s3, 32
  %v1188 = vld [vmem:[%s1187] ss:$8 sm:$0x3]
  %v1190 = vlaneseq
  %v1191 = vshrl.u32 %v1190, 7
  %v1192 = vsub.s32 0, %v1191
  %v1193 = vrot.slane %v1188, %v1192
  %v1194 = vlaneseq
  %v1195 = vshrl.u32 %v1194, 7
  %v1196 = vsub.s32 1, %v1195
  %v1197 = vrot.slane %v1188, %v1196
  %v1200 = vmul.f32 %v1186, %v1193
  %v1201 = vmul.f32 %v1185, %v1197
  %1202 = vset.pattern.permute.xlu0 72
  %1203 = vperm.xlu0 %1202, %v42
  %v1204 = vpop.permute.xlu0 %1203
  %v1206 = vmul.f32 %v1204, %v1200
  %v1207 = vmul.f32 %v1204, %v1201
  %v1208 = vadd.f32 %v1206, 0.0
  %v1209 = vadd.f32 %v1207, 0.0
  %v1210 = vrot.slane %v1200, 2
  %v1211 = vrot.slane %v1201, 2
  %1212 = vset.pattern.permute.xlu0 73
  %1213 = vperm.xlu0 %1212, %v42
  %v1214 = vpop.permute.xlu0 %1213
  %v1216 = vmul.f32 %v1214, %v1210
  %v1217 = vmul.f32 %v1214, %v1211
  %v1218 = vadd.f32 %v1208, %v1216
  %v1219 = vadd.f32 %v1209, %v1217
  %v1220 = vrot.slane %v1200, 4
  %v1221 = vrot.slane %v1201, 4
  %1222 = vset.pattern.permute.xlu0 74
  %1223 = vperm.xlu0 %1222, %v42
  %v1224 = vpop.permute.xlu0 %1223
  %v1226 = vmul.f32 %v1224, %v1220
  %v1227 = vmul.f32 %v1224, %v1221
  %v1228 = vadd.f32 %v1218, %v1226
  %v1229 = vadd.f32 %v1219, %v1227
  %v1230 = vrot.slane %v1200, 6
  %v1231 = vrot.slane %v1201, 6
  %1232 = vset.pattern.permute.xlu0 75
  %1233 = vperm.xlu0 %1232, %v42
  %v1234 = vpop.permute.xlu0 %1233
  %v1236 = vmul.f32 %v1234, %v1230
  %v1237 = vmul.f32 %v1234, %v1231
  %v1238 = vadd.f32 %v1228, %v1236
  %v1239 = vadd.f32 %v1229, %v1237
  %1240 = vrot.lane.b32.xlu0 %v1178, 64
  %v1241 = vpop.permute.xlu0 %1240
  %1242 = vrot.lane.b32.xlu0 %v1179, 64
  %v1243 = vpop.permute.xlu0 %1242
  %vm1244 = vcmp.lt.s32.totalorder %v24, 64
  %v1245 = vsel %vm1244, %v1241, %v1243
  %v1246 = vsel %vm1244, %v1243, %v1241
  %s1247 = scalar_lea.vmem %s3, 33
  %v1248 = vld [vmem:[%s1247] ss:$8 sm:$0x3]
  %v1250 = vlaneseq
  %v1251 = vshrl.u32 %v1250, 7
  %v1252 = vsub.s32 0, %v1251
  %v1253 = vrot.slane %v1248, %v1252
  %v1254 = vlaneseq
  %v1255 = vshrl.u32 %v1254, 7
  %v1256 = vsub.s32 1, %v1255
  %v1257 = vrot.slane %v1248, %v1256
  %v1260 = vmul.f32 %v1246, %v1253
  %v1261 = vmul.f32 %v1245, %v1257
  %1262 = vset.pattern.permute.xlu0 76
  %1263 = vperm.xlu0 %1262, %v42
  %v1264 = vpop.permute.xlu0 %1263
  %v1266 = vmul.f32 %v1264, %v1260
  %v1267 = vmul.f32 %v1264, %v1261
  %v1268 = vadd.f32 %v1238, %v1266
  %v1269 = vadd.f32 %v1239, %v1267
  %v1270 = vrot.slane %v1260, 2
  %v1271 = vrot.slane %v1261, 2
  %1272 = vset.pattern.permute.xlu0 77
  %1273 = vperm.xlu0 %1272, %v42
  %v1274 = vpop.permute.xlu0 %1273
  %v1276 = vmul.f32 %v1274, %v1270
  %v1277 = vmul.f32 %v1274, %v1271
  %v1278 = vadd.f32 %v1268, %v1276
  %v1279 = vadd.f32 %v1269, %v1277
  %v1280 = vrot.slane %v1260, 4
  %v1281 = vrot.slane %v1261, 4
  %1282 = vset.pattern.permute.xlu0 78
  %1283 = vperm.xlu0 %1282, %v42
  %v1284 = vpop.permute.xlu0 %1283
  %v1286 = vmul.f32 %v1284, %v1280
  %v1287 = vmul.f32 %v1284, %v1281
  %v1288 = vadd.f32 %v1278, %v1286
  %v1289 = vadd.f32 %v1279, %v1287
  %v1290 = vrot.slane %v1260, 6
  %v1291 = vrot.slane %v1261, 6
  %1292 = vset.pattern.permute.xlu0 79
  %1293 = vperm.xlu0 %1292, %v42
  %v1294 = vpop.permute.xlu0 %1293
  %v1296 = vmul.f32 %v1294, %v1290
  %v1297 = vmul.f32 %v1294, %v1291
  %v1298 = vadd.f32 %v1288, %v1296
  %v1299 = vadd.f32 %v1289, %v1297
  %1300 = vrot.lane.b32.xlu0 %v1178, 60
  %v1301 = vpop.permute.xlu0 %1300
  %1302 = vrot.lane.b32.xlu0 %v1179, 60
  %v1303 = vpop.permute.xlu0 %1302
  %vm1304 = vcmp.lt.s32.totalorder %v24, 60
  %v1305 = vsel %vm1304, %v1301, %v1303
  %v1306 = vsel %vm1304, %v1303, %v1301
  %s1307 = scalar_lea.vmem %s3, 34
  %v1308 = vld [vmem:[%s1307] ss:$8 sm:$0x3]
  %v1310 = vlaneseq
  %v1311 = vshrl.u32 %v1310, 7
  %v1312 = vsub.s32 0, %v1311
  %v1313 = vrot.slane %v1308, %v1312
  %v1314 = vlaneseq
  %v1315 = vshrl.u32 %v1314, 7
  %v1316 = vsub.s32 1, %v1315
  %v1317 = vrot.slane %v1308, %v1316
  %v1320 = vmul.f32 %v1306, %v1313
  %v1321 = vmul.f32 %v1305, %v1317
  %1322 = vset.pattern.permute.xlu0 80
  %1323 = vperm.xlu0 %1322, %v42
  %v1324 = vpop.permute.xlu0 %1323
  %v1326 = vmul.f32 %v1324, %v1320
  %v1327 = vmul.f32 %v1324, %v1321
  %v1328 = vadd.f32 %v1298, %v1326
  %v1329 = vadd.f32 %v1299, %v1327
  %v1330 = vrot.slane %v1320, 2
  %v1331 = vrot.slane %v1321, 2
  %1332 = vset.pattern.permute.xlu0 81
  %1333 = vperm.xlu0 %1332, %v42
  %v1334 = vpop.permute.xlu0 %1333
  %v1336 = vmul.f32 %v1334, %v1330
  %v1337 = vmul.f32 %v1334, %v1331
  %v1338 = vadd.f32 %v1328, %v1336
  %v1339 = vadd.f32 %v1329, %v1337
  %v1340 = vrot.slane %v1320, 4
  %v1341 = vrot.slane %v1321, 4
  %1342 = vset.pattern.permute.xlu0 82
  %1343 = vperm.xlu0 %1342, %v42
  %v1344 = vpop.permute.xlu0 %1343
  %v1346 = vmul.f32 %v1344, %v1340
  %v1347 = vmul.f32 %v1344, %v1341
  %v1348 = vadd.f32 %v1338, %v1346
  %v1349 = vadd.f32 %v1339, %v1347
  %v1350 = vrot.slane %v1320, 6
  %v1351 = vrot.slane %v1321, 6
  %1352 = vset.pattern.permute.xlu0 83
  %1353 = vperm.xlu0 %1352, %v42
  %v1354 = vpop.permute.xlu0 %1353
  %v1356 = vmul.f32 %v1354, %v1350
  %v1357 = vmul.f32 %v1354, %v1351
  %v1358 = vadd.f32 %v1348, %v1356
  %v1359 = vadd.f32 %v1349, %v1357
  %1360 = vrot.lane.b32.xlu0 %v1178, 4
  %v1361 = vpop.permute.xlu0 %1360
  %1362 = vrot.lane.b32.xlu0 %v1179, 4
  %v1363 = vpop.permute.xlu0 %1362
  %vm1364 = vcmp.lt.s32.totalorder %v24, 4
  %v1365 = vsel %vm1364, %v1361, %v1363
  %v1366 = vsel %vm1364, %v1363, %v1361
  %s1367 = scalar_lea.vmem %s3, 35
  %v1368 = vld [vmem:[%s1367] ss:$8 sm:$0x3]
  %v1370 = vlaneseq
  %v1371 = vshrl.u32 %v1370, 7
  %v1372 = vsub.s32 0, %v1371
  %v1373 = vrot.slane %v1368, %v1372
  %v1374 = vlaneseq
  %v1375 = vshrl.u32 %v1374, 7
  %v1376 = vsub.s32 1, %v1375
  %v1377 = vrot.slane %v1368, %v1376
  %v1380 = vmul.f32 %v1366, %v1373
  %v1381 = vmul.f32 %v1365, %v1377
  %1382 = vset.pattern.permute.xlu0 84
  %1383 = vperm.xlu0 %1382, %v42
  %v1384 = vpop.permute.xlu0 %1383
  %v1386 = vmul.f32 %v1384, %v1380
  %v1387 = vmul.f32 %v1384, %v1381
  %v1388 = vadd.f32 %v1358, %v1386
  %v1389 = vadd.f32 %v1359, %v1387
  %v1390 = vrot.slane %v1380, 2
  %v1391 = vrot.slane %v1381, 2
  %1392 = vset.pattern.permute.xlu0 85
  %1393 = vperm.xlu0 %1392, %v42
  %v1394 = vpop.permute.xlu0 %1393
  %v1396 = vmul.f32 %v1394, %v1390
  %v1397 = vmul.f32 %v1394, %v1391
  %v1398 = vadd.f32 %v1388, %v1396
  %v1399 = vadd.f32 %v1389, %v1397
  %v1400 = vrot.slane %v1380, 4
  %v1401 = vrot.slane %v1381, 4
  %1402 = vset.pattern.permute.xlu0 86
  %1403 = vperm.xlu0 %1402, %v42
  %v1404 = vpop.permute.xlu0 %1403
  %v1406 = vmul.f32 %v1404, %v1400
  %v1407 = vmul.f32 %v1404, %v1401
  %v1408 = vadd.f32 %v1398, %v1406
  %v1409 = vadd.f32 %v1399, %v1407
  %v1410 = vrot.slane %v1380, 6
  %v1411 = vrot.slane %v1381, 6
  %1412 = vset.pattern.permute.xlu0 87
  %1413 = vperm.xlu0 %1412, %v42
  %v1414 = vpop.permute.xlu0 %1413
  %v1416 = vmul.f32 %v1414, %v1410
  %v1417 = vmul.f32 %v1414, %v1411
  %v1418 = vadd.f32 %v1408, %v1416
  %v1419 = vadd.f32 %v1409, %v1417
  %1420 = vset.pattern.permute.xlu0 88
  %1421 = vperm.xlu0 %1420, %v42
  %v1422 = vpop.permute.xlu0 %1421
  %v1424 = vmul.f32 %v1422, %v1178
  %v1425 = vmul.f32 %v1422, %v1179
  %v1426 = vadd.f32 %v1418, %v1424
  %v1427 = vadd.f32 %v1419, %v1425
  %v1428 = vrot.slane %v1178, 2
  %v1429 = vrot.slane %v1179, 2
  %1430 = vset.pattern.permute.xlu0 89
  %1431 = vperm.xlu0 %1430, %v42
  %v1432 = vpop.permute.xlu0 %1431
  %v1434 = vmul.f32 %v1432, %v1428
  %v1435 = vmul.f32 %v1432, %v1429
  %v1436 = vadd.f32 %v1426, %v1434
  %v1437 = vadd.f32 %v1427, %v1435
  %v1438 = vrot.slane %v1178, 4
  %v1439 = vrot.slane %v1179, 4
  %1440 = vset.pattern.permute.xlu0 90
  %1441 = vperm.xlu0 %1440, %v42
  %v1442 = vpop.permute.xlu0 %1441
  %v1444 = vmul.f32 %v1442, %v1438
  %v1445 = vmul.f32 %v1442, %v1439
  %v1446 = vadd.f32 %v1436, %v1444
  %v1447 = vadd.f32 %v1437, %v1445
  %v1448 = vrot.slane %v1178, 6
  %v1449 = vrot.slane %v1179, 6
  %1450 = vset.pattern.permute.xlu0 91
  %1451 = vperm.xlu0 %1450, %v42
  %v1452 = vpop.permute.xlu0 %1451
  %v1454 = vmul.f32 %v1452, %v1448
  %v1455 = vmul.f32 %v1452, %v1449
  %v1456 = vadd.f32 %v1446, %v1454
  %v1457 = vadd.f32 %v1447, %v1455
  %1458 = vrot.lane.b32.xlu0 %v1178, 124
  %v1459 = vpop.permute.xlu0 %1458
  %1460 = vrot.lane.b32.xlu0 %v1179, 124
  %v1461 = vpop.permute.xlu0 %1460
  %vm1462 = vcmp.lt.s32.totalorder %v24, 124
  %v1463 = vsel %vm1462, %v1459, %v1461
  %v1464 = vsel %vm1462, %v1461, %v1459
  %s1465 = scalar_lea.vmem %s3, 36
  %v1466 = vld [vmem:[%s1465] ss:$8 sm:$0x3]
  %v1468 = vlaneseq
  %v1469 = vshrl.u32 %v1468, 7
  %v1470 = vsub.s32 0, %v1469
  %v1471 = vrot.slane %v1466, %v1470
  %v1472 = vlaneseq
  %v1473 = vshrl.u32 %v1472, 7
  %v1474 = vsub.s32 1, %v1473
  %v1475 = vrot.slane %v1466, %v1474
  %v1478 = vmul.f32 %v1463, %v1471
  %v1479 = vmul.f32 %v1464, %v1475
  %1480 = vset.pattern.permute.xlu0 92
  %1481 = vperm.xlu0 %1480, %v42
  %v1482 = vpop.permute.xlu0 %1481
  %v1484 = vmul.f32 %v1482, %v1478
  %v1485 = vmul.f32 %v1482, %v1479
  %v1486 = vadd.f32 %v1456, %v1484
  %v1487 = vadd.f32 %v1457, %v1485
  %v1488 = vrot.slane %v1478, 2
  %v1489 = vrot.slane %v1479, 2
  %1490 = vset.pattern.permute.xlu0 93
  %1491 = vperm.xlu0 %1490, %v42
  %v1492 = vpop.permute.xlu0 %1491
  %v1494 = vmul.f32 %v1492, %v1488
  %v1495 = vmul.f32 %v1492, %v1489
  %v1496 = vadd.f32 %v1486, %v1494
  %v1497 = vadd.f32 %v1487, %v1495
  %v1498 = vrot.slane %v1478, 4
  %v1499 = vrot.slane %v1479, 4
  %1500 = vset.pattern.permute.xlu0 94
  %1501 = vperm.xlu0 %1500, %v42
  %v1502 = vpop.permute.xlu0 %1501
  %v1504 = vmul.f32 %v1502, %v1498
  %v1505 = vmul.f32 %v1502, %v1499
  %v1506 = vadd.f32 %v1496, %v1504
  %v1507 = vadd.f32 %v1497, %v1505
  %v1508 = vrot.slane %v1478, 6
  %v1509 = vrot.slane %v1479, 6
  %1510 = vset.pattern.permute.xlu0 95
  %1511 = vperm.xlu0 %1510, %v42
  %v1512 = vpop.permute.xlu0 %1511
  %v1514 = vmul.f32 %v1512, %v1508
  %v1515 = vmul.f32 %v1512, %v1509
  %v1516 = vadd.f32 %v1506, %v1514
  %v1517 = vadd.f32 %v1507, %v1515
  %s1518 = scalar_lea.vmem %s3, 37
  %v1519 = vld [vmem:[%s1518] ss:$8 sm:$0x3]
  %v1521 = vlaneseq
  %v1522 = vshrl.u32 %v1521, 7
  %v1523 = vsub.s32 0, %v1522
  %v1524 = vrot.slane %v1519, %v1523
  %v1525 = vlaneseq
  %v1526 = vshrl.u32 %v1525, 7
  %v1527 = vsub.s32 1, %v1526
  %v1528 = vrot.slane %v1519, %v1527
  %v1531 = vmul.f32 %v1185, %v1524
  %v1532 = vmul.f32 %v1186, %v1528
  %1533 = vset.pattern.permute.xlu0 96
  %1534 = vperm.xlu0 %1533, %v42
  %v1535 = vpop.permute.xlu0 %1534
  %v1537 = vmul.f32 %v1535, %v1531
  %v1538 = vmul.f32 %v1535, %v1532
  %v1539 = vadd.f32 %v1516, %v1537
  %v1540 = vadd.f32 %v1517, %v1538
  %v1541 = vrot.slane %v1531, 2
  %v1542 = vrot.slane %v1532, 2
  %1543 = vset.pattern.permute.xlu0 97
  %1544 = vperm.xlu0 %1543, %v42
  %v1545 = vpop.permute.xlu0 %1544
  %v1547 = vmul.f32 %v1545, %v1541
  %v1548 = vmul.f32 %v1545, %v1542
  %v1549 = vadd.f32 %v1539, %v1547
  %v1550 = vadd.f32 %v1540, %v1548
  %v1551 = vrot.slane %v1531, 4
  %v1552 = vrot.slane %v1532, 4
  %1553 = vset.pattern.permute.xlu0 98
  %1554 = vperm.xlu0 %1553, %v42
  %v1555 = vpop.permute.xlu0 %1554
  %v1557 = vmul.f32 %v1555, %v1551
  %v1558 = vmul.f32 %v1555, %v1552
  %v1559 = vadd.f32 %v1549, %v1557
  %v1560 = vadd.f32 %v1550, %v1558
  %v1561 = vrot.slane %v1531, 6
  %v1562 = vrot.slane %v1532, 6
  %1563 = vset.pattern.permute.xlu0 99
  %1564 = vperm.xlu0 %1563, %v42
  %v1565 = vpop.permute.xlu0 %1564
  %v1567 = vmul.f32 %v1565, %v1561
  %v1568 = vmul.f32 %v1565, %v1562
  %v1569 = vadd.f32 %v1559, %v1567
  %v1570 = vadd.f32 %v1560, %v1568
  %s1571 = scalar_lea.vmem %s3, 38
  %v1572 = vld [vmem:[%s1571] ss:$8 sm:$0x3]
  %v1574 = vlaneseq
  %v1575 = vshrl.u32 %v1574, 7
  %v1576 = vsub.s32 0, %v1575
  %v1577 = vrot.slane %v1572, %v1576
  %v1578 = vlaneseq
  %v1579 = vshrl.u32 %v1578, 7
  %v1580 = vsub.s32 1, %v1579
  %v1581 = vrot.slane %v1572, %v1580
  %v1584 = vmul.f32 %v1245, %v1577
  %v1585 = vmul.f32 %v1246, %v1581
  %1586 = vset.pattern.permute.xlu0 100
  %1587 = vperm.xlu0 %1586, %v42
  %v1588 = vpop.permute.xlu0 %1587
  %v1590 = vmul.f32 %v1588, %v1584
  %v1591 = vmul.f32 %v1588, %v1585
  %v1592 = vadd.f32 %v1569, %v1590
  %v1593 = vadd.f32 %v1570, %v1591
  %v1594 = vrot.slane %v1584, 2
  %v1595 = vrot.slane %v1585, 2
  %1596 = vset.pattern.permute.xlu0 101
  %1597 = vperm.xlu0 %1596, %v42
  %v1598 = vpop.permute.xlu0 %1597
  %v1600 = vmul.f32 %v1598, %v1594
  %v1601 = vmul.f32 %v1598, %v1595
  %v1602 = vadd.f32 %v1592, %v1600
  %v1603 = vadd.f32 %v1593, %v1601
  %v1604 = vrot.slane %v1584, 4
  %v1605 = vrot.slane %v1585, 4
  %1606 = vset.pattern.permute.xlu0 102
  %1607 = vperm.xlu0 %1606, %v42
  %v1608 = vpop.permute.xlu0 %1607
  %v1610 = vmul.f32 %v1608, %v1604
  %v1611 = vmul.f32 %v1608, %v1605
  %v1612 = vadd.f32 %v1602, %v1610
  %v1613 = vadd.f32 %v1603, %v1611
  %v1614 = vrot.slane %v1584, 6
  %v1615 = vrot.slane %v1585, 6
  %1616 = vset.pattern.permute.xlu0 103
  %1617 = vperm.xlu0 %1616, %v42
  %v1618 = vpop.permute.xlu0 %1617
  %v1620 = vmul.f32 %v1618, %v1614
  %v1621 = vmul.f32 %v1618, %v1615
  %v1622 = vadd.f32 %v1612, %v1620
  %v1623 = vadd.f32 %v1613, %v1621
  %s1624 = scalar_lea.vmem %s3, 39
  %v1625 = vld [vmem:[%s1624] ss:$8 sm:$0x3]
  %v1627 = vlaneseq
  %v1628 = vshrl.u32 %v1627, 7
  %v1629 = vsub.s32 0, %v1628
  %v1630 = vrot.slane %v1625, %v1629
  %v1631 = vlaneseq
  %v1632 = vshrl.u32 %v1631, 7
  %v1633 = vsub.s32 1, %v1632
  %v1634 = vrot.slane %v1625, %v1633
  %v1637 = vmul.f32 %v1305, %v1630
  %v1638 = vmul.f32 %v1306, %v1634
  %1639 = vset.pattern.permute.xlu0 104
  %1640 = vperm.xlu0 %1639, %v42
  %v1641 = vpop.permute.xlu0 %1640
  %v1643 = vmul.f32 %v1641, %v1637
  %v1644 = vmul.f32 %v1641, %v1638
  %v1645 = vadd.f32 %v1622, %v1643
  %v1646 = vadd.f32 %v1623, %v1644
  %v1647 = vrot.slane %v1637, 2
  %v1648 = vrot.slane %v1638, 2
  %1649 = vset.pattern.permute.xlu0 105
  %1650 = vperm.xlu0 %1649, %v42
  %v1651 = vpop.permute.xlu0 %1650
  %v1653 = vmul.f32 %v1651, %v1647
  %v1654 = vmul.f32 %v1651, %v1648
  %v1655 = vadd.f32 %v1645, %v1653
  %v1656 = vadd.f32 %v1646, %v1654
  %v1657 = vrot.slane %v1637, 4
  %v1658 = vrot.slane %v1638, 4
  %1659 = vset.pattern.permute.xlu0 106
  %1660 = vperm.xlu0 %1659, %v42
  %v1661 = vpop.permute.xlu0 %1660
  %v1663 = vmul.f32 %v1661, %v1657
  %v1664 = vmul.f32 %v1661, %v1658
  %v1665 = vadd.f32 %v1655, %v1663
  %v1666 = vadd.f32 %v1656, %v1664
  %v1667 = vrot.slane %v1637, 6
  %v1668 = vrot.slane %v1638, 6
  %1669 = vset.pattern.permute.xlu0 107
  %1670 = vperm.xlu0 %1669, %v42
  %v1671 = vpop.permute.xlu0 %1670
  %v1673 = vmul.f32 %v1671, %v1667
  %v1674 = vmul.f32 %v1671, %v1668
  %v1675 = vadd.f32 %v1665, %v1673
  %v1676 = vadd.f32 %v1666, %v1674
  %1677 = vset.pattern.permute.xlu0 2
  %1678 = vperm.xlu0 %1677, %v540
  %v1679 = vpop.permute.xlu0 %1678
  %v1681 = vadd.f32 %v1675, %v1679
  %v1682 = vadd.f32 %v1676, %v1679
  %v1683 = vmul.f32 %v1681, 0.70710677
  %v1684 = vmul.f32 %v1682, 0.70710677
  %v1685 = vand.u32 2147483647, %v1683
  %v1686 = vand.u32 2147483647, %v1684
  %v1687 = vmul.f32 %v1685, 0.3275911
  %v1688 = vmul.f32 %v1686, 0.3275911
  %v1689 = vadd.f32 %v1687, 1.0
  %v1690 = vadd.f32 %v1688, 1.0
  %v1691 = vrcp.pop %v1689
  %v1692 = vmul.f32 1.0, %v1691
  %v1693 = vrcp.pop %v1690
  %v1694 = vmul.f32 1.0, %v1693
  %v1695 = vmul.f32 %v1692, 1.0614054
  %v1696 = vmul.f32 %v1694, 1.0614054
  %v1697 = vadd.f32 %v1695, -1.4531521
  %v1698 = vadd.f32 %v1696, -1.4531521
  %v1699 = vmul.f32 %v1697, %v1692
  %v1700 = vmul.f32 %v1698, %v1694
  %v1701 = vadd.f32 %v1699, 1.4214138
  %v1702 = vadd.f32 %v1700, 1.4214138
  %v1703 = vmul.f32 %v1701, %v1692
  %v1704 = vmul.f32 %v1702, %v1694
  %v1705 = vadd.f32 %v1703, -0.28449672
  %v1706 = vadd.f32 %v1704, -0.28449672
  %v1707 = vmul.f32 %v1705, %v1692
  %v1708 = vmul.f32 %v1706, %v1694
  %v1709 = vadd.f32 %v1707, 0.2548296
  %v1710 = vadd.f32 %v1708, 0.2548296
  %v1711 = vmul.f32 %v1709, %v1692
  %v1712 = vmul.f32 %v1710, %v1694
  %v1713 = vmul.f32 %v1685, %v1685
  %v1714 = vmul.f32 %v1686, %v1686
  %v1715 = vsub.f32 0.0, %v1713
  %v1716 = vsub.f32 0.0, %v1714
  %v1717 = vmul.f32 %v1715, 1.442695
  %v1718 = vpow.pop %v1717
  %v1719 = vmul.f32 %v1716, 1.442695
  %v1720 = vpow.pop %v1719
  %v1721 = vmul.f32 %v1711, %v1718
  %v1722 = vmul.f32 %v1712, %v1720
  %v1723 = vsub.f32 1.0, %v1721
  %v1724 = vsub.f32 1.0, %v1722
  %vm1725 = vcmp.lt.f32.partialorder %v1683, 0.0
  %vm1726 = vcmp.lt.f32.partialorder %v1684, 0.0
  %v1727 = vsub.f32 0.0, %v1723
  %v1728 = vsub.f32 0.0, %v1724
  %v1729 = vsel %vm1725, %v1727, %v1723
  %v1730 = vsel %vm1726, %v1728, %v1724
  %v1731 = vmul.f32 %v1681, 0.5
  %v1732 = vmul.f32 %v1682, 0.5
  %v1733 = vadd.f32 %v1729, 1.0
  %v1734 = vadd.f32 %v1730, 1.0
  %v1735 = vmul.f32 %v1731, %v1733
  %v1736 = vmul.f32 %v1732, %v1734
  %1737 = vrot.lane.b32.xlu0 %v1735, 34
  %v1738 = vpop.permute.xlu0 %1737
  %1739 = vrot.lane.b32.xlu0 %v1736, 34
  %v1740 = vpop.permute.xlu0 %1739
  %v1741 = vsel %vm606, %v1738, %v1740
  %v1742 = vsel %vm606, %v1740, %v1738
  %v1743 = vmul.f32 %v1742, %v615
  %v1744 = vmul.f32 %v1741, %v619
  %1745 = vset.pattern.permute.xlu0 108
  %1746 = vperm.xlu0 %1745, %v42
  %v1747 = vpop.permute.xlu0 %1746
  %v1749 = vmul.f32 %v1747, %v1743
  %v1750 = vmul.f32 %v1747, %v1744
  %v1751 = vadd.f32 %v1749, 0.0
  %v1752 = vadd.f32 %v1750, 0.0
  %v1753 = vrot.slane %v1743, 2
  %v1754 = vrot.slane %v1744, 2
  %1755 = vset.pattern.permute.xlu0 109
  %1756 = vperm.xlu0 %1755, %v42
  %v1757 = vpop.permute.xlu0 %1756
  %v1759 = vmul.f32 %v1757, %v1753
  %v1760 = vmul.f32 %v1757, %v1754
  %v1761 = vadd.f32 %v1751, %v1759
  %v1762 = vadd.f32 %v1752, %v1760
  %v1763 = vrot.slane %v1743, 4
  %v1764 = vrot.slane %v1744, 4
  %1765 = vset.pattern.permute.xlu0 110
  %1766 = vperm.xlu0 %1765, %v42
  %v1767 = vpop.permute.xlu0 %1766
  %v1769 = vmul.f32 %v1767, %v1763
  %v1770 = vmul.f32 %v1767, %v1764
  %v1771 = vadd.f32 %v1761, %v1769
  %v1772 = vadd.f32 %v1762, %v1770
  %v1773 = vrot.slane %v1743, 6
  %v1774 = vrot.slane %v1744, 6
  %1775 = vset.pattern.permute.xlu0 111
  %1776 = vperm.xlu0 %1775, %v42
  %v1777 = vpop.permute.xlu0 %1776
  %v1779 = vmul.f32 %v1777, %v1773
  %v1780 = vmul.f32 %v1777, %v1774
  %v1781 = vadd.f32 %v1771, %v1779
  %v1782 = vadd.f32 %v1772, %v1780
  %1783 = vrot.lane.b32.xlu0 %v1735, 32
  %v1784 = vpop.permute.xlu0 %1783
  %1785 = vrot.lane.b32.xlu0 %v1736, 32
  %v1786 = vpop.permute.xlu0 %1785
  %v1787 = vsel %vm666, %v1784, %v1786
  %v1788 = vsel %vm666, %v1786, %v1784
  %v1789 = vmul.f32 %v1788, %v675
  %v1790 = vmul.f32 %v1787, %v679
  %1791 = vset.pattern.permute.xlu0 112
  %1792 = vperm.xlu0 %1791, %v42
  %v1793 = vpop.permute.xlu0 %1792
  %v1795 = vmul.f32 %v1793, %v1789
  %v1796 = vmul.f32 %v1793, %v1790
  %v1797 = vadd.f32 %v1781, %v1795
  %v1798 = vadd.f32 %v1782, %v1796
  %v1799 = vrot.slane %v1789, 2
  %v1800 = vrot.slane %v1790, 2
  %1801 = vset.pattern.permute.xlu0 113
  %1802 = vperm.xlu0 %1801, %v42
  %v1803 = vpop.permute.xlu0 %1802
  %v1805 = vmul.f32 %v1803, %v1799
  %v1806 = vmul.f32 %v1803, %v1800
  %v1807 = vadd.f32 %v1797, %v1805
  %v1808 = vadd.f32 %v1798, %v1806
  %v1809 = vrot.slane %v1789, 4
  %v1810 = vrot.slane %v1790, 4
  %1811 = vset.pattern.permute.xlu0 114
  %1812 = vperm.xlu0 %1811, %v42
  %v1813 = vpop.permute.xlu0 %1812
  %v1815 = vmul.f32 %v1813, %v1809
  %v1816 = vmul.f32 %v1813, %v1810
  %v1817 = vadd.f32 %v1807, %v1815
  %v1818 = vadd.f32 %v1808, %v1816
  %v1819 = vrot.slane %v1789, 6
  %v1820 = vrot.slane %v1790, 6
  %1821 = vset.pattern.permute.xlu0 115
  %1822 = vperm.xlu0 %1821, %v42
  %v1823 = vpop.permute.xlu0 %1822
  %v1825 = vmul.f32 %v1823, %v1819
  %v1826 = vmul.f32 %v1823, %v1820
  %v1827 = vadd.f32 %v1817, %v1825
  %v1828 = vadd.f32 %v1818, %v1826
  %1829 = vrot.lane.b32.xlu0 %v1735, 30
  %v1830 = vpop.permute.xlu0 %1829
  %1831 = vrot.lane.b32.xlu0 %v1736, 30
  %v1832 = vpop.permute.xlu0 %1831
  %v1833 = vsel %vm726, %v1830, %v1832
  %v1834 = vsel %vm726, %v1832, %v1830
  %v1835 = vmul.f32 %v1834, %v735
  %v1836 = vmul.f32 %v1833, %v739
  %1837 = vset.pattern.permute.xlu0 116
  %1838 = vperm.xlu0 %1837, %v42
  %v1839 = vpop.permute.xlu0 %1838
  %v1841 = vmul.f32 %v1839, %v1835
  %v1842 = vmul.f32 %v1839, %v1836
  %v1843 = vadd.f32 %v1827, %v1841
  %v1844 = vadd.f32 %v1828, %v1842
  %v1845 = vrot.slane %v1835, 2
  %v1846 = vrot.slane %v1836, 2
  %1847 = vset.pattern.permute.xlu0 117
  %1848 = vperm.xlu0 %1847, %v42
  %v1849 = vpop.permute.xlu0 %1848
  %v1851 = vmul.f32 %v1849, %v1845
  %v1852 = vmul.f32 %v1849, %v1846
  %v1853 = vadd.f32 %v1843, %v1851
  %v1854 = vadd.f32 %v1844, %v1852
  %v1855 = vrot.slane %v1835, 4
  %v1856 = vrot.slane %v1836, 4
  %1857 = vset.pattern.permute.xlu0 118
  %1858 = vperm.xlu0 %1857, %v42
  %v1859 = vpop.permute.xlu0 %1858
  %v1861 = vmul.f32 %v1859, %v1855
  %v1862 = vmul.f32 %v1859, %v1856
  %v1863 = vadd.f32 %v1853, %v1861
  %v1864 = vadd.f32 %v1854, %v1862
  %v1865 = vrot.slane %v1835, 6
  %v1866 = vrot.slane %v1836, 6
  %1867 = vset.pattern.permute.xlu0 119
  %1868 = vperm.xlu0 %1867, %v42
  %v1869 = vpop.permute.xlu0 %1868
  %v1871 = vmul.f32 %v1869, %v1865
  %v1872 = vmul.f32 %v1869, %v1866
  %v1873 = vadd.f32 %v1863, %v1871
  %v1874 = vadd.f32 %v1864, %v1872
  %1875 = vrot.lane.b32.xlu0 %v1735, 2
  %v1876 = vpop.permute.xlu0 %1875
  %1877 = vrot.lane.b32.xlu0 %v1736, 2
  %v1878 = vpop.permute.xlu0 %1877
  %v1879 = vsel %vm786, %v1876, %v1878
  %v1880 = vsel %vm786, %v1878, %v1876
  %v1881 = vmul.f32 %v1880, %v795
  %v1882 = vmul.f32 %v1879, %v799
  %1883 = vset.pattern.permute.xlu0 120
  %1884 = vperm.xlu0 %1883, %v42
  %v1885 = vpop.permute.xlu0 %1884
  %v1887 = vmul.f32 %v1885, %v1881
  %v1888 = vmul.f32 %v1885, %v1882
  %v1889 = vadd.f32 %v1873, %v1887
  %v1890 = vadd.f32 %v1874, %v1888
  %v1891 = vrot.slane %v1881, 2
  %v1892 = vrot.slane %v1882, 2
  %1893 = vset.pattern.permute.xlu0 121
  %1894 = vperm.xlu0 %1893, %v42
  %v1895 = vpop.permute.xlu0 %1894
  %v1897 = vmul.f32 %v1895, %v1891
  %v1898 = vmul.f32 %v1895, %v1892
  %v1899 = vadd.f32 %v1889, %v1897
  %v1900 = vadd.f32 %v1890, %v1898
  %v1901 = vrot.slane %v1881, 4
  %v1902 = vrot.slane %v1882, 4
  %1903 = vset.pattern.permute.xlu0 122
  %1904 = vperm.xlu0 %1903, %v42
  %v1905 = vpop.permute.xlu0 %1904
  %v1907 = vmul.f32 %v1905, %v1901
  %v1908 = vmul.f32 %v1905, %v1902
  %v1909 = vadd.f32 %v1899, %v1907
  %v1910 = vadd.f32 %v1900, %v1908
  %v1911 = vrot.slane %v1881, 6
  %v1912 = vrot.slane %v1882, 6
  %1913 = vset.pattern.permute.xlu0 123
  %1914 = vperm.xlu0 %1913, %v42
  %v1915 = vpop.permute.xlu0 %1914
  %v1917 = vmul.f32 %v1915, %v1911
  %v1918 = vmul.f32 %v1915, %v1912
  %v1919 = vadd.f32 %v1909, %v1917
  %v1920 = vadd.f32 %v1910, %v1918
  %1921 = vset.pattern.permute.xlu0 124
  %1922 = vperm.xlu0 %1921, %v42
  %v1923 = vpop.permute.xlu0 %1922
  %v1925 = vmul.f32 %v1923, %v1735
  %v1926 = vmul.f32 %v1923, %v1736
  %v1927 = vadd.f32 %v1919, %v1925
  %v1928 = vadd.f32 %v1920, %v1926
  %v1929 = vrot.slane %v1735, 2
  %v1930 = vrot.slane %v1736, 2
  %1931 = vset.pattern.permute.xlu0 125
  %1932 = vperm.xlu0 %1931, %v42
  %v1933 = vpop.permute.xlu0 %1932
  %v1935 = vmul.f32 %v1933, %v1929
  %v1936 = vmul.f32 %v1933, %v1930
  %v1937 = vadd.f32 %v1927, %v1935
  %v1938 = vadd.f32 %v1928, %v1936
  %v1939 = vrot.slane %v1735, 4
  %v1940 = vrot.slane %v1736, 4
  %1941 = vset.pattern.permute.xlu0 126
  %1942 = vperm.xlu0 %1941, %v42
  %v1943 = vpop.permute.xlu0 %1942
  %v1945 = vmul.f32 %v1943, %v1939
  %v1946 = vmul.f32 %v1943, %v1940
  %v1947 = vadd.f32 %v1937, %v1945
  %v1948 = vadd.f32 %v1938, %v1946
  %v1949 = vrot.slane %v1735, 6
  %v1950 = vrot.slane %v1736, 6
  %1951 = vset.pattern.permute.xlu0 127
  %1952 = vperm.xlu0 %1951, %v42
  %v1953 = vpop.permute.xlu0 %1952
  %v1955 = vmul.f32 %v1953, %v1949
  %v1956 = vmul.f32 %v1953, %v1950
  %v1957 = vadd.f32 %v1947, %v1955
  %v1958 = vadd.f32 %v1948, %v1956
  %1959 = vrot.lane.b32.xlu0 %v1735, 126
  %v1960 = vpop.permute.xlu0 %1959
  %1961 = vrot.lane.b32.xlu0 %v1736, 126
  %v1962 = vpop.permute.xlu0 %1961
  %v1963 = vsel %vm884, %v1960, %v1962
  %v1964 = vsel %vm884, %v1962, %v1960
  %v1965 = vmul.f32 %v1963, %v893
  %v1966 = vmul.f32 %v1964, %v897
  %v1967 = vld [vmem:[%s1 + $0x8] sm:$0xff]
  %1969 = vset.pattern.permute.xlu0 0
  %1970 = vperm.xlu0 %1969, %v1967
  %v1971 = vpop.permute.xlu0 %1970
  %v1973 = vmul.f32 %v1971, %v1965
  %v1974 = vmul.f32 %v1971, %v1966
  %v1975 = vadd.f32 %v1957, %v1973
  %v1976 = vadd.f32 %v1958, %v1974
  %v1977 = vrot.slane %v1965, 2
  %v1978 = vrot.slane %v1966, 2
  %1979 = vset.pattern.permute.xlu0 1
  %1980 = vperm.xlu0 %1979, %v1967
  %v1981 = vpop.permute.xlu0 %1980
  %v1983 = vmul.f32 %v1981, %v1977
  %v1984 = vmul.f32 %v1981, %v1978
  %v1985 = vadd.f32 %v1975, %v1983
  %v1986 = vadd.f32 %v1976, %v1984
  %v1987 = vrot.slane %v1965, 4
  %v1988 = vrot.slane %v1966, 4
  %1989 = vset.pattern.permute.xlu0 2
  %1990 = vperm.xlu0 %1989, %v1967
  %v1991 = vpop.permute.xlu0 %1990
  %v1993 = vmul.f32 %v1991, %v1987
  %v1994 = vmul.f32 %v1991, %v1988
  %v1995 = vadd.f32 %v1985, %v1993
  %v1996 = vadd.f32 %v1986, %v1994
  %v1997 = vrot.slane %v1965, 6
  %v1998 = vrot.slane %v1966, 6
  %1999 = vset.pattern.permute.xlu0 3
  %2000 = vperm.xlu0 %1999, %v1967
  %v2001 = vpop.permute.xlu0 %2000
  %v2003 = vmul.f32 %v2001, %v1997
  %v2004 = vmul.f32 %v2001, %v1998
  %v2005 = vadd.f32 %v1995, %v2003
  %v2006 = vadd.f32 %v1996, %v2004
  %2007 = vrot.lane.b32.xlu0 %v1735, 98
  %v2008 = vpop.permute.xlu0 %2007
  %2009 = vrot.lane.b32.xlu0 %v1736, 98
  %v2010 = vpop.permute.xlu0 %2009
  %v2011 = vsel %vm944, %v2008, %v2010
  %v2012 = vsel %vm944, %v2010, %v2008
  %v2013 = vmul.f32 %v2011, %v953
  %v2014 = vmul.f32 %v2012, %v957
  %2015 = vset.pattern.permute.xlu0 4
  %2016 = vperm.xlu0 %2015, %v1967
  %v2017 = vpop.permute.xlu0 %2016
  %v2019 = vmul.f32 %v2017, %v2013
  %v2020 = vmul.f32 %v2017, %v2014
  %v2021 = vadd.f32 %v2005, %v2019
  %v2022 = vadd.f32 %v2006, %v2020
  %v2023 = vrot.slane %v2013, 2
  %v2024 = vrot.slane %v2014, 2
  %2025 = vset.pattern.permute.xlu0 5
  %2026 = vperm.xlu0 %2025, %v1967
  %v2027 = vpop.permute.xlu0 %2026
  %v2029 = vmul.f32 %v2027, %v2023
  %v2030 = vmul.f32 %v2027, %v2024
  %v2031 = vadd.f32 %v2021, %v2029
  %v2032 = vadd.f32 %v2022, %v2030
  %v2033 = vrot.slane %v2013, 4
  %v2034 = vrot.slane %v2014, 4
  %2035 = vset.pattern.permute.xlu0 6
  %2036 = vperm.xlu0 %2035, %v1967
  %v2037 = vpop.permute.xlu0 %2036
  %v2039 = vmul.f32 %v2037, %v2033
  %v2040 = vmul.f32 %v2037, %v2034
  %v2041 = vadd.f32 %v2031, %v2039
  %v2042 = vadd.f32 %v2032, %v2040
  %v2043 = vrot.slane %v2013, 6
  %v2044 = vrot.slane %v2014, 6
  %2045 = vset.pattern.permute.xlu0 7
  %2046 = vperm.xlu0 %2045, %v1967
  %v2047 = vpop.permute.xlu0 %2046
  %v2049 = vmul.f32 %v2047, %v2043
  %v2050 = vmul.f32 %v2047, %v2044
  %v2051 = vadd.f32 %v2041, %v2049
  %v2052 = vadd.f32 %v2042, %v2050
  %2053 = vrot.lane.b32.xlu0 %v1735, 96
  %v2054 = vpop.permute.xlu0 %2053
  %2055 = vrot.lane.b32.xlu0 %v1736, 96
  %v2056 = vpop.permute.xlu0 %2055
  %v2057 = vsel %vm1004, %v2054, %v2056
  %v2058 = vsel %vm1004, %v2056, %v2054
  %v2059 = vmul.f32 %v2057, %v1013
  %v2060 = vmul.f32 %v2058, %v1017
  %2061 = vset.pattern.permute.xlu0 8
  %2062 = vperm.xlu0 %2061, %v1967
  %v2063 = vpop.permute.xlu0 %2062
  %v2065 = vmul.f32 %v2063, %v2059
  %v2066 = vmul.f32 %v2063, %v2060
  %v2067 = vadd.f32 %v2051, %v2065
  %v2068 = vadd.f32 %v2052, %v2066
  %v2069 = vrot.slane %v2059, 2
  %v2070 = vrot.slane %v2060, 2
  %2071 = vset.pattern.permute.xlu0 9
  %2072 = vperm.xlu0 %2071, %v1967
  %v2073 = vpop.permute.xlu0 %2072
  %v2075 = vmul.f32 %v2073, %v2069
  %v2076 = vmul.f32 %v2073, %v2070
  %v2077 = vadd.f32 %v2067, %v2075
  %v2078 = vadd.f32 %v2068, %v2076
  %v2079 = vrot.slane %v2059, 4
  %v2080 = vrot.slane %v2060, 4
  %2081 = vset.pattern.permute.xlu0 10
  %2082 = vperm.xlu0 %2081, %v1967
  %v2083 = vpop.permute.xlu0 %2082
  %v2085 = vmul.f32 %v2083, %v2079
  %v2086 = vmul.f32 %v2083, %v2080
  %v2087 = vadd.f32 %v2077, %v2085
  %v2088 = vadd.f32 %v2078, %v2086
  %v2089 = vrot.slane %v2059, 6
  %v2090 = vrot.slane %v2060, 6
  %2091 = vset.pattern.permute.xlu0 11
  %2092 = vperm.xlu0 %2091, %v1967
  %v2093 = vpop.permute.xlu0 %2092
  %v2095 = vmul.f32 %v2093, %v2089
  %v2096 = vmul.f32 %v2093, %v2090
  %v2097 = vadd.f32 %v2087, %v2095
  %v2098 = vadd.f32 %v2088, %v2096
  %2099 = vrot.lane.b32.xlu0 %v1735, 94
  %v2100 = vpop.permute.xlu0 %2099
  %2101 = vrot.lane.b32.xlu0 %v1736, 94
  %v2102 = vpop.permute.xlu0 %2101
  %v2103 = vsel %vm1064, %v2100, %v2102
  %v2104 = vsel %vm1064, %v2102, %v2100
  %v2105 = vmul.f32 %v2103, %v1073
  %v2106 = vmul.f32 %v2104, %v1077
  %2107 = vset.pattern.permute.xlu0 12
  %2108 = vperm.xlu0 %2107, %v1967
  %v2109 = vpop.permute.xlu0 %2108
  %v2111 = vmul.f32 %v2109, %v2105
  %v2112 = vmul.f32 %v2109, %v2106
  %v2113 = vadd.f32 %v2097, %v2111
  %v2114 = vadd.f32 %v2098, %v2112
  %v2115 = vrot.slane %v2105, 2
  %v2116 = vrot.slane %v2106, 2
  %2117 = vset.pattern.permute.xlu0 13
  %2118 = vperm.xlu0 %2117, %v1967
  %v2119 = vpop.permute.xlu0 %2118
  %v2121 = vmul.f32 %v2119, %v2115
  %v2122 = vmul.f32 %v2119, %v2116
  %v2123 = vadd.f32 %v2113, %v2121
  %v2124 = vadd.f32 %v2114, %v2122
  %v2125 = vrot.slane %v2105, 4
  %v2126 = vrot.slane %v2106, 4
  %2127 = vset.pattern.permute.xlu0 14
  %2128 = vperm.xlu0 %2127, %v1967
  %v2129 = vpop.permute.xlu0 %2128
  %v2131 = vmul.f32 %v2129, %v2125
  %v2132 = vmul.f32 %v2129, %v2126
  %v2133 = vadd.f32 %v2123, %v2131
  %v2134 = vadd.f32 %v2124, %v2132
  %v2135 = vrot.slane %v2105, 6
  %v2136 = vrot.slane %v2106, 6
  %2137 = vset.pattern.permute.xlu0 15
  %2138 = vperm.xlu0 %2137, %v1967
  %v2139 = vpop.permute.xlu0 %2138
  %v2141 = vmul.f32 %v2139, %v2135
  %v2142 = vmul.f32 %v2139, %v2136
  %v2143 = vadd.f32 %v2133, %v2141
  %v2144 = vadd.f32 %v2134, %v2142
  %2145 = vset.pattern.permute.xlu0 3
  %2146 = vperm.xlu0 %2145, %v540
  %v2147 = vpop.permute.xlu0 %2146
  %v2149 = vadd.f32 %v2143, %v2147
  %v2150 = vadd.f32 %v2144, %v2147
  %v2151 = vmul.f32 %v2149, 0.70710677
  %v2152 = vmul.f32 %v2150, 0.70710677
  %v2153 = vand.u32 2147483647, %v2151
  %v2154 = vand.u32 2147483647, %v2152
  %v2155 = vmul.f32 %v2153, 0.3275911
  %v2156 = vmul.f32 %v2154, 0.3275911
  %v2157 = vadd.f32 %v2155, 1.0
  %v2158 = vadd.f32 %v2156, 1.0
  %v2159 = vrcp.pop %v2157
  %v2160 = vmul.f32 1.0, %v2159
  %v2161 = vrcp.pop %v2158
  %v2162 = vmul.f32 1.0, %v2161
  %v2163 = vmul.f32 %v2160, 1.0614054
  %v2164 = vmul.f32 %v2162, 1.0614054
  %v2165 = vadd.f32 %v2163, -1.4531521
  %v2166 = vadd.f32 %v2164, -1.4531521
  %v2167 = vmul.f32 %v2165, %v2160
  %v2168 = vmul.f32 %v2166, %v2162
  %v2169 = vadd.f32 %v2167, 1.4214138
  %v2170 = vadd.f32 %v2168, 1.4214138
  %v2171 = vmul.f32 %v2169, %v2160
  %v2172 = vmul.f32 %v2170, %v2162
  %v2173 = vadd.f32 %v2171, -0.28449672
  %v2174 = vadd.f32 %v2172, -0.28449672
  %v2175 = vmul.f32 %v2173, %v2160
  %v2176 = vmul.f32 %v2174, %v2162
  %v2177 = vadd.f32 %v2175, 0.2548296
  %v2178 = vadd.f32 %v2176, 0.2548296
  %v2179 = vmul.f32 %v2177, %v2160
  %v2180 = vmul.f32 %v2178, %v2162
  %v2181 = vmul.f32 %v2153, %v2153
  %v2182 = vmul.f32 %v2154, %v2154
  %v2183 = vsub.f32 0.0, %v2181
  %v2184 = vsub.f32 0.0, %v2182
  %v2185 = vmul.f32 %v2183, 1.442695
  %v2186 = vpow.pop %v2185
  %v2187 = vmul.f32 %v2184, 1.442695
  %v2188 = vpow.pop %v2187
  %v2189 = vmul.f32 %v2179, %v2186
  %v2190 = vmul.f32 %v2180, %v2188
  %v2191 = vsub.f32 1.0, %v2189
  %v2192 = vsub.f32 1.0, %v2190
  %vm2193 = vcmp.lt.f32.partialorder %v2151, 0.0
  %vm2194 = vcmp.lt.f32.partialorder %v2152, 0.0
  %v2195 = vsub.f32 0.0, %v2191
  %v2196 = vsub.f32 0.0, %v2192
  %v2197 = vsel %vm2193, %v2195, %v2191
  %v2198 = vsel %vm2194, %v2196, %v2192
  %v2199 = vmul.f32 %v2149, 0.5
  %v2200 = vmul.f32 %v2150, 0.5
  %v2201 = vadd.f32 %v2197, 1.0
  %v2202 = vadd.f32 %v2198, 1.0
  %v2203 = vmul.f32 %v2199, %v2201
  %v2204 = vmul.f32 %v2200, %v2202
  %2205 = vrot.lane.b32.xlu0 %v2203, 17
  %v2206 = vpop.permute.xlu0 %2205
  %2207 = vrot.lane.b32.xlu0 %v2204, 17
  %v2208 = vpop.permute.xlu0 %2207
  %v2209 = vsel %vm25, %v2206, %v2208
  %v2210 = vsel %vm25, %v2208, %v2206
  %v2211 = vmul.f32 %v2210, %v33
  %v2212 = vmul.f32 %v2209, %v37
  %2213 = vset.pattern.permute.xlu0 16
  %2214 = vperm.xlu0 %2213, %v1967
  %v2215 = vpop.permute.xlu0 %2214
  %v2217 = vmul.f32 %v2215, %v2211
  %v2218 = vmul.f32 %v2215, %v2212
  %v2219 = vadd.f32 %v2217, 0.0
  %v2220 = vadd.f32 %v2218, 0.0
  %v2221 = vrot.slane %v2211, 2
  %v2222 = vrot.slane %v2212, 2
  %2223 = vset.pattern.permute.xlu0 17
  %2224 = vperm.xlu0 %2223, %v1967
  %v2225 = vpop.permute.xlu0 %2224
  %v2227 = vmul.f32 %v2225, %v2221
  %v2228 = vmul.f32 %v2225, %v2222
  %v2229 = vadd.f32 %v2219, %v2227
  %v2230 = vadd.f32 %v2220, %v2228
  %v2231 = vrot.slane %v2211, 4
  %v2232 = vrot.slane %v2212, 4
  %2233 = vset.pattern.permute.xlu0 18
  %2234 = vperm.xlu0 %2233, %v1967
  %v2235 = vpop.permute.xlu0 %2234
  %v2237 = vmul.f32 %v2235, %v2231
  %v2238 = vmul.f32 %v2235, %v2232
  %v2239 = vadd.f32 %v2229, %v2237
  %v2240 = vadd.f32 %v2230, %v2238
  %v2241 = vrot.slane %v2211, 6
  %v2242 = vrot.slane %v2212, 6
  %2243 = vset.pattern.permute.xlu0 19
  %2244 = vperm.xlu0 %2243, %v1967
  %v2245 = vpop.permute.xlu0 %2244
  %v2247 = vmul.f32 %v2245, %v2241
  %v2248 = vmul.f32 %v2245, %v2242
  %v2249 = vadd.f32 %v2239, %v2247
  %v2250 = vadd.f32 %v2240, %v2248
  %2251 = vrot.lane.b32.xlu0 %v2203, 16
  %v2252 = vpop.permute.xlu0 %2251
  %2253 = vrot.lane.b32.xlu0 %v2204, 16
  %v2254 = vpop.permute.xlu0 %2253
  %v2255 = vsel %vm86, %v2252, %v2254
  %v2256 = vsel %vm86, %v2254, %v2252
  %v2257 = vmul.f32 %v2256, %v95
  %v2258 = vmul.f32 %v2255, %v99
  %2259 = vset.pattern.permute.xlu0 20
  %2260 = vperm.xlu0 %2259, %v1967
  %v2261 = vpop.permute.xlu0 %2260
  %v2263 = vmul.f32 %v2261, %v2257
  %v2264 = vmul.f32 %v2261, %v2258
  %v2265 = vadd.f32 %v2249, %v2263
  %v2266 = vadd.f32 %v2250, %v2264
  %v2267 = vrot.slane %v2257, 2
  %v2268 = vrot.slane %v2258, 2
  %2269 = vset.pattern.permute.xlu0 21
  %2270 = vperm.xlu0 %2269, %v1967
  %v2271 = vpop.permute.xlu0 %2270
  %v2273 = vmul.f32 %v2271, %v2267
  %v2274 = vmul.f32 %v2271, %v2268
  %v2275 = vadd.f32 %v2265, %v2273
  %v2276 = vadd.f32 %v2266, %v2274
  %v2277 = vrot.slane %v2257, 4
  %v2278 = vrot.slane %v2258, 4
  %2279 = vset.pattern.permute.xlu0 22
  %2280 = vperm.xlu0 %2279, %v1967
  %v2281 = vpop.permute.xlu0 %2280
  %v2283 = vmul.f32 %v2281, %v2277
  %v2284 = vmul.f32 %v2281, %v2278
  %v2285 = vadd.f32 %v2275, %v2283
  %v2286 = vadd.f32 %v2276, %v2284
  %v2287 = vrot.slane %v2257, 6
  %v2288 = vrot.slane %v2258, 6
  %2289 = vset.pattern.permute.xlu0 23
  %2290 = vperm.xlu0 %2289, %v1967
  %v2291 = vpop.permute.xlu0 %2290
  %v2293 = vmul.f32 %v2291, %v2287
  %v2294 = vmul.f32 %v2291, %v2288
  %v2295 = vadd.f32 %v2285, %v2293
  %v2296 = vadd.f32 %v2286, %v2294
  %2297 = vrot.lane.b32.xlu0 %v2203, 15
  %v2298 = vpop.permute.xlu0 %2297
  %2299 = vrot.lane.b32.xlu0 %v2204, 15
  %v2300 = vpop.permute.xlu0 %2299
  %v2301 = vsel %vm146, %v2298, %v2300
  %v2302 = vsel %vm146, %v2300, %v2298
  %v2303 = vmul.f32 %v2302, %v155
  %v2304 = vmul.f32 %v2301, %v159
  %2305 = vset.pattern.permute.xlu0 24
  %2306 = vperm.xlu0 %2305, %v1967
  %v2307 = vpop.permute.xlu0 %2306
  %v2309 = vmul.f32 %v2307, %v2303
  %v2310 = vmul.f32 %v2307, %v2304
  %v2311 = vadd.f32 %v2295, %v2309
  %v2312 = vadd.f32 %v2296, %v2310
  %v2313 = vrot.slane %v2303, 2
  %v2314 = vrot.slane %v2304, 2
  %2315 = vset.pattern.permute.xlu0 25
  %2316 = vperm.xlu0 %2315, %v1967
  %v2317 = vpop.permute.xlu0 %2316
  %v2319 = vmul.f32 %v2317, %v2313
  %v2320 = vmul.f32 %v2317, %v2314
  %v2321 = vadd.f32 %v2311, %v2319
  %v2322 = vadd.f32 %v2312, %v2320
  %v2323 = vrot.slane %v2303, 4
  %v2324 = vrot.slane %v2304, 4
  %2325 = vset.pattern.permute.xlu0 26
  %2326 = vperm.xlu0 %2325, %v1967
  %v2327 = vpop.permute.xlu0 %2326
  %v2329 = vmul.f32 %v2327, %v2323
  %v2330 = vmul.f32 %v2327, %v2324
  %v2331 = vadd.f32 %v2321, %v2329
  %v2332 = vadd.f32 %v2322, %v2330
  %v2333 = vrot.slane %v2303, 6
  %v2334 = vrot.slane %v2304, 6
  %2335 = vset.pattern.permute.xlu0 27
  %2336 = vperm.xlu0 %2335, %v1967
  %v2337 = vpop.permute.xlu0 %2336
  %v2339 = vmul.f32 %v2337, %v2333
  %v2340 = vmul.f32 %v2337, %v2334
  %v2341 = vadd.f32 %v2331, %v2339
  %v2342 = vadd.f32 %v2332, %v2340
  %2343 = vrot.lane.b32.xlu0 %v2203, 1
  %v2344 = vpop.permute.xlu0 %2343
  %2345 = vrot.lane.b32.xlu0 %v2204, 1
  %v2346 = vpop.permute.xlu0 %2345
  %v2347 = vsel %vm206, %v2344, %v2346
  %v2348 = vsel %vm206, %v2346, %v2344
  %v2349 = vmul.f32 %v2348, %v215
  %v2350 = vmul.f32 %v2347, %v219
  %2351 = vset.pattern.permute.xlu0 28
  %2352 = vperm.xlu0 %2351, %v1967
  %v2353 = vpop.permute.xlu0 %2352
  %v2355 = vmul.f32 %v2353, %v2349
  %v2356 = vmul.f32 %v2353, %v2350
  %v2357 = vadd.f32 %v2341, %v2355
  %v2358 = vadd.f32 %v2342, %v2356
  %v2359 = vrot.slane %v2349, 2
  %v2360 = vrot.slane %v2350, 2
  %2361 = vset.pattern.permute.xlu0 29
  %2362 = vperm.xlu0 %2361, %v1967
  %v2363 = vpop.permute.xlu0 %2362
  %v2365 = vmul.f32 %v2363, %v2359
  %v2366 = vmul.f32 %v2363, %v2360
  %v2367 = vadd.f32 %v2357, %v2365
  %v2368 = vadd.f32 %v2358, %v2366
  %v2369 = vrot.slane %v2349, 4
  %v2370 = vrot.slane %v2350, 4
  %2371 = vset.pattern.permute.xlu0 30
  %2372 = vperm.xlu0 %2371, %v1967
  %v2373 = vpop.permute.xlu0 %2372
  %v2375 = vmul.f32 %v2373, %v2369
  %v2376 = vmul.f32 %v2373, %v2370
  %v2377 = vadd.f32 %v2367, %v2375
  %v2378 = vadd.f32 %v2368, %v2376
  %v2379 = vrot.slane %v2349, 6
  %v2380 = vrot.slane %v2350, 6
  %2381 = vset.pattern.permute.xlu0 31
  %2382 = vperm.xlu0 %2381, %v1967
  %v2383 = vpop.permute.xlu0 %2382
  %v2385 = vmul.f32 %v2383, %v2379
  %v2386 = vmul.f32 %v2383, %v2380
  %v2387 = vadd.f32 %v2377, %v2385
  %v2388 = vadd.f32 %v2378, %v2386
  %2389 = vset.pattern.permute.xlu0 32
  %2390 = vperm.xlu0 %2389, %v1967
  %v2391 = vpop.permute.xlu0 %2390
  %v2393 = vmul.f32 %v2391, %v2203
  %v2394 = vmul.f32 %v2391, %v2204
  %v2395 = vadd.f32 %v2387, %v2393
  %v2396 = vadd.f32 %v2388, %v2394
  %v2397 = vrot.slane %v2203, 2
  %v2398 = vrot.slane %v2204, 2
  %2399 = vset.pattern.permute.xlu0 33
  %2400 = vperm.xlu0 %2399, %v1967
  %v2401 = vpop.permute.xlu0 %2400
  %v2403 = vmul.f32 %v2401, %v2397
  %v2404 = vmul.f32 %v2401, %v2398
  %v2405 = vadd.f32 %v2395, %v2403
  %v2406 = vadd.f32 %v2396, %v2404
  %v2407 = vrot.slane %v2203, 4
  %v2408 = vrot.slane %v2204, 4
  %2409 = vset.pattern.permute.xlu0 34
  %2410 = vperm.xlu0 %2409, %v1967
  %v2411 = vpop.permute.xlu0 %2410
  %v2413 = vmul.f32 %v2411, %v2407
  %v2414 = vmul.f32 %v2411, %v2408
  %v2415 = vadd.f32 %v2405, %v2413
  %v2416 = vadd.f32 %v2406, %v2414
  %v2417 = vrot.slane %v2203, 6
  %v2418 = vrot.slane %v2204, 6
  %2419 = vset.pattern.permute.xlu0 35
  %2420 = vperm.xlu0 %2419, %v1967
  %v2421 = vpop.permute.xlu0 %2420
  %v2423 = vmul.f32 %v2421, %v2417
  %v2424 = vmul.f32 %v2421, %v2418
  %v2425 = vadd.f32 %v2415, %v2423
  %v2426 = vadd.f32 %v2416, %v2424
  %2427 = vrot.lane.b32.xlu0 %v2203, 127
  %v2428 = vpop.permute.xlu0 %2427
  %2429 = vrot.lane.b32.xlu0 %v2204, 127
  %v2430 = vpop.permute.xlu0 %2429
  %v2431 = vsel %vm304, %v2428, %v2430
  %v2432 = vsel %vm304, %v2430, %v2428
  %v2433 = vmul.f32 %v2431, %v313
  %v2434 = vmul.f32 %v2432, %v317
  %2435 = vset.pattern.permute.xlu0 36
  %2436 = vperm.xlu0 %2435, %v1967
  %v2437 = vpop.permute.xlu0 %2436
  %v2439 = vmul.f32 %v2437, %v2433
  %v2440 = vmul.f32 %v2437, %v2434
  %v2441 = vadd.f32 %v2425, %v2439
  %v2442 = vadd.f32 %v2426, %v2440
  %v2443 = vrot.slane %v2433, 2
  %v2444 = vrot.slane %v2434, 2
  %2445 = vset.pattern.permute.xlu0 37
  %2446 = vperm.xlu0 %2445, %v1967
  %v2447 = vpop.permute.xlu0 %2446
  %v2449 = vmul.f32 %v2447, %v2443
  %v2450 = vmul.f32 %v2447, %v2444
  %v2451 = vadd.f32 %v2441, %v2449
  %v2452 = vadd.f32 %v2442, %v2450
  %v2453 = vrot.slane %v2433, 4
  %v2454 = vrot.slane %v2434, 4
  %2455 = vset.pattern.permute.xlu0 38
  %2456 = vperm.xlu0 %2455, %v1967
  %v2457 = vpop.permute.xlu0 %2456
  %v2459 = vmul.f32 %v2457, %v2453
  %v2460 = vmul.f32 %v2457, %v2454
  %v2461 = vadd.f32 %v2451, %v2459
  %v2462 = vadd.f32 %v2452, %v2460
  %v2463 = vrot.slane %v2433, 6
  %v2464 = vrot.slane %v2434, 6
  %2465 = vset.pattern.permute.xlu0 39
  %2466 = vperm.xlu0 %2465, %v1967
  %v2467 = vpop.permute.xlu0 %2466
  %v2469 = vmul.f32 %v2467, %v2463
  %v2470 = vmul.f32 %v2467, %v2464
  %v2471 = vadd.f32 %v2461, %v2469
  %v2472 = vadd.f32 %v2462, %v2470
  %2473 = vrot.lane.b32.xlu0 %v2203, 113
  %v2474 = vpop.permute.xlu0 %2473
  %2475 = vrot.lane.b32.xlu0 %v2204, 113
  %v2476 = vpop.permute.xlu0 %2475
  %v2477 = vsel %vm364, %v2474, %v2476
  %v2478 = vsel %vm364, %v2476, %v2474
  %v2479 = vmul.f32 %v2477, %v373
  %v2480 = vmul.f32 %v2478, %v377
  %2481 = vset.pattern.permute.xlu0 40
  %2482 = vperm.xlu0 %2481, %v1967
  %v2483 = vpop.permute.xlu0 %2482
  %v2485 = vmul.f32 %v2483, %v2479
  %v2486 = vmul.f32 %v2483, %v2480
  %v2487 = vadd.f32 %v2471, %v2485
  %v2488 = vadd.f32 %v2472, %v2486
  %v2489 = vrot.slane %v2479, 2
  %v2490 = vrot.slane %v2480, 2
  %2491 = vset.pattern.permute.xlu0 41
  %2492 = vperm.xlu0 %2491, %v1967
  %v2493 = vpop.permute.xlu0 %2492
  %v2495 = vmul.f32 %v2493, %v2489
  %v2496 = vmul.f32 %v2493, %v2490
  %v2497 = vadd.f32 %v2487, %v2495
  %v2498 = vadd.f32 %v2488, %v2496
  %v2499 = vrot.slane %v2479, 4
  %v2500 = vrot.slane %v2480, 4
  %2501 = vset.pattern.permute.xlu0 42
  %2502 = vperm.xlu0 %2501, %v1967
  %v2503 = vpop.permute.xlu0 %2502
  %v2505 = vmul.f32 %v2503, %v2499
  %v2506 = vmul.f32 %v2503, %v2500
  %v2507 = vadd.f32 %v2497, %v2505
  %v2508 = vadd.f32 %v2498, %v2506
  %v2509 = vrot.slane %v2479, 6
  %v2510 = vrot.slane %v2480, 6
  %2511 = vset.pattern.permute.xlu0 43
  %2512 = vperm.xlu0 %2511, %v1967
  %v2513 = vpop.permute.xlu0 %2512
  %v2515 = vmul.f32 %v2513, %v2509
  %v2516 = vmul.f32 %v2513, %v2510
  %v2517 = vadd.f32 %v2507, %v2515
  %v2518 = vadd.f32 %v2508, %v2516
  %2519 = vrot.lane.b32.xlu0 %v2203, 112
  %v2520 = vpop.permute.xlu0 %2519
  %2521 = vrot.lane.b32.xlu0 %v2204, 112
  %v2522 = vpop.permute.xlu0 %2521
  %v2523 = vsel %vm424, %v2520, %v2522
  %v2524 = vsel %vm424, %v2522, %v2520
  %v2525 = vmul.f32 %v2523, %v433
  %v2526 = vmul.f32 %v2524, %v437
  %2527 = vset.pattern.permute.xlu0 44
  %2528 = vperm.xlu0 %2527, %v1967
  %v2529 = vpop.permute.xlu0 %2528
  %v2531 = vmul.f32 %v2529, %v2525
  %v2532 = vmul.f32 %v2529, %v2526
  %v2533 = vadd.f32 %v2517, %v2531
  %v2534 = vadd.f32 %v2518, %v2532
  %v2535 = vrot.slane %v2525, 2
  %v2536 = vrot.slane %v2526, 2
  %2537 = vset.pattern.permute.xlu0 45
  %2538 = vperm.xlu0 %2537, %v1967
  %v2539 = vpop.permute.xlu0 %2538
  %v2541 = vmul.f32 %v2539, %v2535
  %v2542 = vmul.f32 %v2539, %v2536
  %v2543 = vadd.f32 %v2533, %v2541
  %v2544 = vadd.f32 %v2534, %v2542
  %v2545 = vrot.slane %v2525, 4
  %v2546 = vrot.slane %v2526, 4
  %2547 = vset.pattern.permute.xlu0 46
  %2548 = vperm.xlu0 %2547, %v1967
  %v2549 = vpop.permute.xlu0 %2548
  %v2551 = vmul.f32 %v2549, %v2545
  %v2552 = vmul.f32 %v2549, %v2546
  %v2553 = vadd.f32 %v2543, %v2551
  %v2554 = vadd.f32 %v2544, %v2552
  %v2555 = vrot.slane %v2525, 6
  %v2556 = vrot.slane %v2526, 6
  %2557 = vset.pattern.permute.xlu0 47
  %2558 = vperm.xlu0 %2557, %v1967
  %v2559 = vpop.permute.xlu0 %2558
  %v2561 = vmul.f32 %v2559, %v2555
  %v2562 = vmul.f32 %v2559, %v2556
  %v2563 = vadd.f32 %v2553, %v2561
  %v2564 = vadd.f32 %v2554, %v2562
  %2565 = vrot.lane.b32.xlu0 %v2203, 111
  %v2566 = vpop.permute.xlu0 %2565
  %2567 = vrot.lane.b32.xlu0 %v2204, 111
  %v2568 = vpop.permute.xlu0 %2567
  %v2569 = vsel %vm484, %v2566, %v2568
  %v2570 = vsel %vm484, %v2568, %v2566
  %v2571 = vmul.f32 %v2569, %v493
  %v2572 = vmul.f32 %v2570, %v497
  %2573 = vset.pattern.permute.xlu0 48
  %2574 = vperm.xlu0 %2573, %v1967
  %v2575 = vpop.permute.xlu0 %2574
  %v2577 = vmul.f32 %v2575, %v2571
  %v2578 = vmul.f32 %v2575, %v2572
  %v2579 = vadd.f32 %v2563, %v2577
  %v2580 = vadd.f32 %v2564, %v2578
  %v2581 = vrot.slane %v2571, 2
  %v2582 = vrot.slane %v2572, 2
  %2583 = vset.pattern.permute.xlu0 49
  %2584 = vperm.xlu0 %2583, %v1967
  %v2585 = vpop.permute.xlu0 %2584
  %v2587 = vmul.f32 %v2585, %v2581
  %v2588 = vmul.f32 %v2585, %v2582
  %v2589 = vadd.f32 %v2579, %v2587
  %v2590 = vadd.f32 %v2580, %v2588
  %v2591 = vrot.slane %v2571, 4
  %v2592 = vrot.slane %v2572, 4
  %2593 = vset.pattern.permute.xlu0 50
  %2594 = vperm.xlu0 %2593, %v1967
  %v2595 = vpop.permute.xlu0 %2594
  %v2597 = vmul.f32 %v2595, %v2591
  %v2598 = vmul.f32 %v2595, %v2592
  %v2599 = vadd.f32 %v2589, %v2597
  %v2600 = vadd.f32 %v2590, %v2598
  %v2601 = vrot.slane %v2571, 6
  %v2602 = vrot.slane %v2572, 6
  %2603 = vset.pattern.permute.xlu0 51
  %2604 = vperm.xlu0 %2603, %v1967
  %v2605 = vpop.permute.xlu0 %2604
  %v2607 = vmul.f32 %v2605, %v2601
  %v2608 = vmul.f32 %v2605, %v2602
  %v2609 = vadd.f32 %v2599, %v2607
  %v2610 = vadd.f32 %v2600, %v2608
  %2611 = vset.pattern.permute.xlu0 4
  %2612 = vperm.xlu0 %2611, %v540
  %v2613 = vpop.permute.xlu0 %2612
  %v2615 = vadd.f32 %v2609, %v2613
  %v2616 = vadd.f32 %v2610, %v2613
  %v2617 = vmul.f32 %v2615, 0.70710677
  %v2618 = vmul.f32 %v2616, 0.70710677
  %v2619 = vand.u32 2147483647, %v2617
  %v2620 = vand.u32 2147483647, %v2618
  %v2621 = vmul.f32 %v2619, 0.3275911
  %v2622 = vmul.f32 %v2620, 0.3275911
  %v2623 = vadd.f32 %v2621, 1.0
  %v2624 = vadd.f32 %v2622, 1.0
  %v2625 = vrcp.pop %v2623
  %v2626 = vmul.f32 1.0, %v2625
  %v2627 = vrcp.pop %v2624
  %v2628 = vmul.f32 1.0, %v2627
  %v2629 = vmul.f32 %v2626, 1.0614054
  %v2630 = vmul.f32 %v2628, 1.0614054
  %v2631 = vadd.f32 %v2629, -1.4531521
  %v2632 = vadd.f32 %v2630, -1.4531521
  %v2633 = vmul.f32 %v2631, %v2626
  %v2634 = vmul.f32 %v2632, %v2628
  %v2635 = vadd.f32 %v2633, 1.4214138
  %v2636 = vadd.f32 %v2634, 1.4214138
  %v2637 = vmul.f32 %v2635, %v2626
  %v2638 = vmul.f32 %v2636, %v2628
  %v2639 = vadd.f32 %v2637, -0.28449672
  %v2640 = vadd.f32 %v2638, -0.28449672
  %v2641 = vmul.f32 %v2639, %v2626
  %v2642 = vmul.f32 %v2640, %v2628
  %v2643 = vadd.f32 %v2641, 0.2548296
  %v2644 = vadd.f32 %v2642, 0.2548296
  %v2645 = vmul.f32 %v2643, %v2626
  %v2646 = vmul.f32 %v2644, %v2628
  %v2647 = vmul.f32 %v2619, %v2619
  %v2648 = vmul.f32 %v2620, %v2620
  %v2649 = vsub.f32 0.0, %v2647
  %v2650 = vsub.f32 0.0, %v2648
  %v2651 = vmul.f32 %v2649, 1.442695
  %v2652 = vpow.pop %v2651
  %v2653 = vmul.f32 %v2650, 1.442695
  %v2654 = vpow.pop %v2653
  %v2655 = vmul.f32 %v2645, %v2652
  %v2656 = vmul.f32 %v2646, %v2654
  %v2657 = vsub.f32 1.0, %v2655
  %v2658 = vsub.f32 1.0, %v2656
  %vm2659 = vcmp.lt.f32.partialorder %v2617, 0.0
  %vm2660 = vcmp.lt.f32.partialorder %v2618, 0.0
  %v2661 = vsub.f32 0.0, %v2657
  %v2662 = vsub.f32 0.0, %v2658
  %v2663 = vsel %vm2659, %v2661, %v2657
  %v2664 = vsel %vm2660, %v2662, %v2658
  %v2665 = vmul.f32 %v2615, 0.5
  %v2666 = vmul.f32 %v2616, 0.5
  %v2667 = vadd.f32 %v2663, 1.0
  %v2668 = vadd.f32 %v2664, 1.0
  %v2669 = vmul.f32 %v2665, %v2667
  %v2670 = vmul.f32 %v2666, %v2668
  %2671 = vst [vmem:[%s4] sm:$0xff] %v2669
  %2672 = vst [vmem:[%s4 + $0x8] sm:$0xff] %v2670
  // Predicated region
  $region18: #{_lambda_.1} parent=0 // pred_check
    _
  $region19: #{_lambda_.1} parent=0 // pred_check_branch
    %2674 = sbr.rel (0) target = $region21
  $region20: #{_lambda_.1} parent=0 // pred_region
    _
  $region21: #{_lambda_.1} parent=0 // pred_fallthru
    _
  // Predicated region
  $region22: #{_lambda_.1} parent=0 // pred_check
    _
  $region23: #{_lambda_.1} parent=0 // pred_check_branch
    %2676 = sbr.rel (0) target = $region25
  $region24: #{_lambda_.1} parent=0 // pred_region
    _
  $region25: #{_lambda_.1} parent=0 // pred_fallthru
    _

</llo_original>
